<compile_context>
chip_gen: v7x
topology: tpu7x:2x2x1
jax: 0.10.0
libtpu: 0.0.40
codegen_flags: <defaults>
</compile_context>

<pallas_src>
import functools

import jax
import jax.numpy as jnp
from jax.experimental import pallas as pl
from jax.experimental.pallas import tpu as pltpu


_TILE_BUDGET = 28 * 1024 * 1024     # VMEM budget used when choosing tiles
_VMEM_LIMIT = 48 * 1024 * 1024      # scoped VMEM limit requested per call


def _compiler_params(sem):
    return pltpu.CompilerParams(dimension_semantics=sem,
                                vmem_limit_bytes=_VMEM_LIMIT)


# ----------------------------------------------------------------------------
# tile selection helpers
# ----------------------------------------------------------------------------
def _div_cands(n):
    """n itself first, then multiple-of-128 divisors of n, descending."""
    cands = [n]
    for t in (2048, 1536, 1024, 768, 512, 384, 256, 128):
        if t < n and n % t == 0:
            cands.append(t)
    return cands


def _choose_tiles(M, N, K, has_res):
    """Pick (tm, tn, tk).  Priority: tk == K (no weight re-streaming across
    row tiles) > large tn (few j passes over x) > large tm."""
    tm_list = [M] if M <= 512 else [512, 256, 128]
    tk_list = _div_cands(K)
    tn_list = _div_cands(N)

    def est(tm, tn, tk):
        b = 2 * tm * tk * 2          # x tile, bf16, double-buffered
        b += 2 * tk * tn * 2         # w panel
        b += 2 * tm * tn * 2         # out tile
        b += 2 * tn * 4              # bias
        if has_res:
            b += 2 * tm * tn * 2     # residual tile
        if tk < K:
            b += tm * tn * 4         # fp32 accumulator scratch
        b += tm * tn * 4             # fp32 epilogue temp headroom
        return b

    for tk in tk_list:
        for tn in tn_list:
            for tm in tm_list:
                if est(tm, tn, tk) <= _TILE_BUDGET:
                    return tm, tn, tk
    return tm_list[-1], tn_list[-1], tk_list[-1]


# ----------------------------------------------------------------------------
# Tiled linear kernel: y = act(x @ w + b) [+ residual]
# Grid order (j, i[, k]): weight panel index depends only on j, so with gk==1
# each weight panel is DMA'd once per j (revisit-skip across i).
# ----------------------------------------------------------------------------
def _linear_kernel_noacc(x_ref, w_ref, b_ref, *rest, activation, has_res):
    if has_res:
        r_ref, o_ref = rest
    else:
        r_ref = None
        (o_ref,) = rest
    y = jnp.dot(x_ref[...], w_ref[...],
                preferred_element_type=jnp.float32) + b_ref[...]
    if activation == "quick_gelu":               # x * sigmoid(1.702 x)
        y = y * jax.nn.sigmoid(1.702 * y)
    if has_res:
        y = y + r_ref[...].astype(jnp.float32)
    o_ref[...] = y.astype(o_ref.dtype)


def _linear_kernel_acc(x_ref, w_ref, b_ref, *rest, activation, has_res):
    if has_res:
        r_ref, o_ref, acc_ref = rest
    else:
        r_ref = None
        o_ref, acc_ref = rest
    k = pl.program_id(2)

    @pl.when(k == 0)
    def _():
        acc_ref[...] = jnp.zeros_like(acc_ref)

    acc_ref[...] += jnp.dot(x_ref[...], w_ref[...],
                            preferred_element_type=jnp.float32)

    @pl.when(k == pl.num_programs(2) - 1)
    def _():
        y = acc_ref[...] + b_ref[...]
        if activation == "quick_gelu":
            y = y * jax.nn.sigmoid(1.702 * y)
        if has_res:
            y = y + r_ref[...].astype(jnp.float32)
        o_ref[...] = y.astype(o_ref.dtype)


def linear(x, w, b, *, activation=None, residual=None, out_dtype=jnp.bfloat16):
    """x:(M,K) bf16, w:(K,N) bf16, b:(1,N) f32 -> (M,N) out_dtype."""
    M, K = x.shape
    N = w.shape[1]
    has_res = residual is not None
    tm, tn, tk = _choose_tiles(M, N, K, has_res)
    gm, gn, gk = pl.cdiv(M, tm), pl.cdiv(N, tn), pl.cdiv(K, tk)

    args = [x, w, b]
    if gk == 1:
        in_specs = [
            pl.BlockSpec((tm, tk), lambda j, i: (i, 0)),
            pl.BlockSpec((tk, tn), lambda j, i: (0, j)),
            pl.BlockSpec((1, tn), lambda j, i: (0, j)),
        ]
        if has_res:
            args.append(residual)
            in_specs.append(pl.BlockSpec((tm, tn), lambda j, i: (i, j)))
        return pl.pallas_call(
            functools.partial(_linear_kernel_noacc, activation=activation,
                              has_res=has_res),
            out_shape=jax.ShapeDtypeStruct((M, N), out_dtype),
            grid=(gn, gm),
            in_specs=in_specs,
            out_specs=pl.BlockSpec((tm, tn), lambda j, i: (i, j)),
            compiler_params=_compiler_params(("parallel", "parallel")),
        )(*args)

    in_specs = [
        pl.BlockSpec((tm, tk), lambda j, i, k: (i, k)),
        pl.BlockSpec((tk, tn), lambda j, i, k: (k, j)),
        pl.BlockSpec((1, tn), lambda j, i, k: (0, j)),
    ]
    if has_res:
        args.append(residual)
        in_specs.append(pl.BlockSpec((tm, tn), lambda j, i, k: (i, j)))
    return pl.pallas_call(
        functools.partial(_linear_kernel_acc, activation=activation,
                          has_res=has_res),
        out_shape=jax.ShapeDtypeStruct((M, N), out_dtype),
        grid=(gn, gm, gk),
        in_specs=in_specs,
        out_specs=pl.BlockSpec((tm, tn), lambda j, i, k: (i, j)),
        scratch_shapes=[pltpu.VMEM((tm, tn), jnp.float32)],
        compiler_params=_compiler_params(("parallel", "parallel", "arbitrary")),
    )(*args)


# ----------------------------------------------------------------------------
# LayerNorm kernel (fp32 statistics)
# ----------------------------------------------------------------------------
def _layernorm_kernel(x_ref, g_ref, b_ref, o_ref, *, eps):
    x = x_ref[...].astype(jnp.float32)
    mean = jnp.mean(x, axis=-1, keepdims=True)
    var = jnp.mean((x - mean) ** 2, axis=-1, keepdims=True)
    xn = (x - mean) * jax.lax.rsqrt(var + eps)
    o_ref[...] = (xn * g_ref[...] + b_ref[...]).astype(o_ref.dtype)


def layernorm(x, g, b, *, eps=1e-5, out_dtype=jnp.bfloat16):
    """x:(M,D), g/b:(1,D) f32."""
    M, D = x.shape
    tm = M if M <= 1024 else 1024
    return pl.pallas_call(
        functools.partial(_layernorm_kernel, eps=eps),
        out_shape=jax.ShapeDtypeStruct((M, D), out_dtype),
        grid=(pl.cdiv(M, tm),),
        in_specs=[
            pl.BlockSpec((tm, D), lambda i: (i, 0)),
            pl.BlockSpec((1, D), lambda i: (0, 0)),
            pl.BlockSpec((1, D), lambda i: (0, 0)),
        ],
        out_specs=pl.BlockSpec((tm, D), lambda i: (i, 0)),
        compiler_params=_compiler_params(("parallel",)),
    )(x, g, b)


# ----------------------------------------------------------------------------
# Fused LinearAdapter kernel: out = [residual +] a + scale*fc2(fc1(a)),
# with a = LayerNorm(x) (optional) or x.  No nonlinearity between fc1/fc2
# (matches the reference LinearAdapter).  Dropout is identity at inference.
# ----------------------------------------------------------------------------
def _adapter_kernel(*refs, scale, eps, has_ln, has_res):
    it = iter(refs)
    x_ref = next(it)
    r_ref = next(it) if has_res else None
    if has_ln:
        g_ref = next(it)
        bln_ref = next(it)
    w1_ref = next(it)
    b1_ref = next(it)
    w2_ref = next(it)
    b2_ref = next(it)
    o_ref = next(it)

    xf = x_ref[...].astype(jnp.float32)
    if has_ln:
        mean = jnp.mean(xf, axis=-1, keepdims=True)
        var = jnp.mean((xf - mean) ** 2, axis=-1, keepdims=True)
        a = (xf - mean) * jax.lax.rsqrt(var + eps) * g_ref[...] + bln_ref[...]
    else:
        a = xf

    h = jnp.dot(a.astype(jnp.bfloat16), w1_ref[...],
                preferred_element_type=jnp.float32) + b1_ref[...]
    h = jnp.dot(h.astype(jnp.bfloat16), w2_ref[...],
                preferred_element_type=jnp.float32) + b2_ref[...]
    y = a + scale * h
    if has_res:
        y = y + r_ref[...].astype(jnp.float32)
    o_ref[...] = y.astype(o_ref.dtype)


def fused_adapter(x, p, scale, *, ln=None, residual=None, eps=1e-5):
    """x:(M,D) bf16.  p: fc1_w (D,Dh) bf16, fc1_b (1,Dh) f32, fc2_w, fc2_b."""
    M, D = x.shape
    Dh = p["fc1_w"].shape[1]
    tm = M if M <= 512 else 512
    has_ln = ln is not None
    has_res = residual is not None

    args = [x]
    in_specs = [pl.BlockSpec((tm, D), lambda i: (i, 0))]
    if has_res:
        args.append(residual)
        in_specs.append(pl.BlockSpec((tm, D), lambda i: (i, 0)))
    if has_ln:
        g, bln = ln
        args += [g, bln]
        in_specs += [pl.BlockSpec((1, D), lambda i: (0, 0))] * 2
    args += [p["fc1_w"], p["fc1_b"], p["fc2_w"], p["fc2_b"]]
    in_specs += [
        pl.BlockSpec((D, Dh), lambda i: (0, 0)),
        pl.BlockSpec((1, Dh), lambda i: (0, 0)),
        pl.BlockSpec((Dh, D), lambda i: (0, 0)),
        pl.BlockSpec((1, D), lambda i: (0, 0)),
    ]

    return pl.pallas_call(
        functools.partial(_adapter_kernel, scale=scale, eps=eps,
                          has_ln=has_ln, has_res=has_res),
        out_shape=jax.ShapeDtypeStruct((M, D), jnp.bfloat16),
        grid=(pl.cdiv(M, tm),),
        in_specs=in_specs,
        out_specs=pl.BlockSpec((tm, D), lambda i: (i, 0)),
        compiler_params=_compiler_params(("parallel",)),
    )(*args)


# ----------------------------------------------------------------------------
# Fused CLIP MLP: out = residual + c_proj(quick_gelu(c_fc(x)))
# Keeps the (tm, 4D) intermediate in VMEM when both weight panels fit the
# budget; otherwise falls back to two tiled linears.
# ----------------------------------------------------------------------------
def _mlp_kernel(x_ref, r_ref, w1_ref, b1_ref, w2_ref, b2_ref, o_ref):
    h = jnp.dot(x_ref[...], w1_ref[...],
                preferred_element_type=jnp.float32) + b1_ref[...]
    h = h * jax.nn.sigmoid(1.702 * h)
    y = jnp.dot(h.astype(jnp.bfloat16), w2_ref[...],
                preferred_element_type=jnp.float32) + b2_ref[...]
    y = y + r_ref[...].astype(jnp.float32)
    o_ref[...] = y.astype(o_ref.dtype)


def _mlp_fits(tm, D, Hd):
    b = 3 * (2 * tm * D * 2)          # x, residual, out (double-buffered bf16)
    b += 2 * 2 * D * Hd * 2           # w1 + w2 (double-buffered bf16)
    b += tm * Hd * 4 + tm * Hd * 2    # fp32 intermediate + bf16 cast
    b += tm * D * 4                   # fp32 epilogue temp
    return b <= _TILE_BUDGET


def fused_mlp(x, w1, b1, w2, b2, residual):
    """x:(M,D) bf16 -> residual + c_proj(gelu(c_fc(x))) as (M,D) bf16."""
    M, D = x.shape
    Hd = w1.shape[1]
    tm = None
    for cand in ([M] if M <= 512 else [512, 256, 128]):
        if _mlp_fits(cand, D, Hd):
            tm = cand
            break
    if tm is None:
        # Weights too large to keep resident (e.g. ViT-L on v7x): fall back to
        # two weight-streaming-friendly tiled linears.
        m = linear(x, w1, b1, activation="quick_gelu")
        return linear(m, w2, b2, residual=residual)

    return pl.pallas_call(
        _mlp_kernel,
        out_shape=jax.ShapeDtypeStruct((M, D), jnp.bfloat16),
        grid=(pl.cdiv(M, tm),),
        in_specs=[
            pl.BlockSpec((tm, D), lambda i: (i, 0)),
            pl.BlockSpec((tm, D), lambda i: (i, 0)),
            pl.BlockSpec((D, Hd), lambda i: (0, 0)),
            pl.BlockSpec((1, Hd), lambda i: (0, 0)),
            pl.BlockSpec((Hd, D), lambda i: (0, 0)),
            pl.BlockSpec((1, D), lambda i: (0, 0)),
        ],
        out_specs=pl.BlockSpec((tm, D), lambda i: (i, 0)),
        compiler_params=_compiler_params(("parallel",)),
    )(x, residual, w1, b1, w2, b2)


# ----------------------------------------------------------------------------
# STDHA-style attention.  One (b, t) grid step processes all heads of one
# frame.  The +/-1 frame temporal shift of the shifted k/v head subsets is
# folded into the BlockSpec index_map (clamped frame index + in-kernel zero
# mask); the shifted streams are pre-sliced to the shifted channels only so
# their DMA moves N*Dh instead of N*D per step.  The fused qkv projection is
# consumed directly (column block 0/1/2) -> no XLA split pass.
# ----------------------------------------------------------------------------
def _attn_kernel(*refs, n_head, s1, s2, scale):
    it = iter(refs)
    q_ref, k_ref, v_ref = next(it), next(it), next(it)
    kp_ref = vp_ref = kn_ref = vn_ref = None
    if s1 > 0:
        kp_ref, vp_ref = next(it), next(it)
    if s2 > 0:
        kn_ref, vn_ref = next(it), next(it)
    o_ref = next(it)

    t = pl.program_id(1)
    nt = pl.num_programs(1)
    prev_ok = t > 0
    next_ok = t < nt - 1

    q = q_ref[0, 0]                                    # (N, D) bf16
    k = k_ref[0, 0]
    v = v_ref[0, 0]
    D = q.shape[-1]
    Dh = D // n_head

    for h in range(n_head):
        lo = h * Dh
        qh = q[:, lo:lo + Dh]
        if h < s1:                                     # k/v from frame t-1
            kh = jnp.where(prev_ok, kp_ref[0, 0, :, lo:lo + Dh], 0.0)
            vh = jnp.where(prev_ok, vp_ref[0, 0, :, lo:lo + Dh], 0.0)
            kh = kh.astype(q.dtype)
            vh = vh.astype(q.dtype)
        elif h < s1 + s2:                              # k/v from frame t+1
            lo2 = (h - s1) * Dh
            kh = jnp.where(next_ok, kn_ref[0, 0, :, lo2:lo2 + Dh], 0.0)
            vh = jnp.where(next_ok, vn_ref[0, 0, :, lo2:lo2 + Dh], 0.0)
            kh = kh.astype(q.dtype)
            vh = vh.astype(q.dtype)
        else:                                          # unshifted heads
            kh = k[:, lo:lo + Dh]
            vh = v[:, lo:lo + Dh]

        # q @ k^T without an explicit transpose (contract last dims).
        s = jax.lax.dot_general(qh, kh, (((1,), (1,)), ((), ())),
                                preferred_element_type=jnp.float32) * scale
        s = s - jnp.max(s, axis=-1, keepdims=True)
        p = jnp.exp(s)
        p = p * pl.reciprocal(jnp.sum(p, axis=-1, keepdims=True))
        oh = jnp.dot(p.astype(vh.dtype), vh,
                     preferred_element_type=jnp.float32)
        # write this head's lane slice directly (no fp32 concat of all heads)
        o_ref[0, 0, :, lo:lo + Dh] = oh.astype(o_ref.dtype)


def stdha_attention_core(qkv, B, T, N, D, *, n_head, shift1_heads,
                         shift2_heads):
    """qkv: (B*T*N, 3D) bf16 fused projection -> (B, T, N, D) bf16."""
    Dh = D // n_head
    c1 = shift1_heads * Dh
    c2 = c1 + shift2_heads * Dh
    scale = Dh ** (-0.5)

    qkv4 = qkv.reshape(B, T, N, 3 * D)
    args = []
    in_specs = []

    if D % 128 == 0:
        # fused path: pick column block 0/1/2 of the (.., 3D) array directly
        args += [qkv4, qkv4, qkv4]
        in_specs += [
            pl.BlockSpec((1, 1, N, D), lambda b, t: (b, t, 0, 0)),
            pl.BlockSpec((1, 1, N, D), lambda b, t: (b, t, 0, 1)),
            pl.BlockSpec((1, 1, N, D), lambda b, t: (b, t, 0, 2)),
        ]
        kp = qkv4[..., D:D + c1]
        vp = qkv4[..., 2 * D:2 * D + c1]
        kn = qkv4[..., D + c1:D + c2]
        vn = qkv4[..., 2 * D + c1:2 * D + c2]
    else:
        # tiny-D fallback (blocks must equal full dims): split q/k/v in XLA
        q4, k4, v4 = (a.reshape(B, T, N, D)
                      for a in jnp.split(qkv, 3, axis=-1))
        cur_spec = pl.BlockSpec((1, 1, N, D), lambda b, t: (b, t, 0, 0))
        args += [q4, k4, v4]
        in_specs += [cur_spec] * 3
        kp, vp = k4[..., :c1], v4[..., :c1]
        kn, vn = k4[..., c1:c2], v4[..., c1:c2]

    if shift1_heads > 0:
        sp = pl.BlockSpec((1, 1, N, c1),
                          lambda b, t: (b, jnp.maximum(t - 1, 0), 0, 0))
        args += [kp, vp]
        in_specs += [sp, sp]
    if shift2_heads > 0:
        sn = pl.BlockSpec((1, 1, N, c2 - c1),
                          lambda b, t: (b, jnp.minimum(t + 1, T - 1), 0, 0))
        args += [kn, vn]
        in_specs += [sn, sn]

    return pl.pallas_call(
        functools.partial(_attn_kernel, n_head=n_head, s1=shift1_heads,
                          s2=shift2_heads, scale=scale),
        out_shape=jax.ShapeDtypeStruct((B, T, N, D), jnp.bfloat16),
        grid=(B, T),
        in_specs=in_specs,
        out_specs=pl.BlockSpec((1, 1, N, D), lambda b, t: (b, t, 0, 0)),
        compiler_params=_compiler_params(("parallel", "parallel")),
    )(*args)


# ----------------------------------------------------------------------------
# Model building blocks
# ----------------------------------------------------------------------------
def block_forward(x, p, B, T, n_head, adapter_scale, shift1_heads,
                  shift2_heads):
    """ResidualAttentionBlock_stdha (num_tadapter=1, adapter_type='rep')."""
    BT, N, D = x.shape
    x2 = x.reshape(BT * N, D)

    # --- attention branch: x + S_Adapter(attn(T_Adapter_in(ln_1(x)))) -------
    h = fused_adapter(x2, p["T_Adapter_in"], adapter_scale,
                      ln=(p["ln1_g"], p["ln1_b"]))
    # gradcam_temporal / gradcam_spatial are nn.Identity -> no-op
    qkv = linear(h, p["attn"]["in_proj_w"], p["attn"]["in_proj_b"])
    a = stdha_attention_core(qkv, B, T, N, D, n_head=n_head,
                             shift1_heads=shift1_heads,
                             shift2_heads=shift2_heads)
    a2 = linear(a.reshape(BT * N, D),
                p["attn"]["out_proj_w"], p["attn"]["out_proj_b"])
    x2 = fused_adapter(a2, p["S_Adapter"], adapter_scale, residual=x2)

    # --- mlp branch: x + mlp(MLP_Adapter(ln_2(x))) ---------------------------
    h2 = fused_adapter(x2, p["MLP_Adapter"], adapter_scale,
                       ln=(p["ln2_g"], p["ln2_b"]))
    x2 = fused_mlp(h2, p["c_fc_w"], p["c_fc_b"],
                   p["c_proj_w"], p["c_proj_b"], residual=x2)
    return x2.reshape(BT, N, D)


def patch_embed(x_frames, w_mat, b_zero, patch_size, width):
    """Conv2d(3->width, kernel=stride=P, bias=False) as patch-extract+matmul."""
    BT, C, H, W = x_frames.shape
    P = patch_size
    nh, nw = H // P, W // P
    patches = x_frames.reshape(BT, C, nh, P, nw, P)
    patches = patches.transpose(0, 2, 4, 1, 3, 5)       # (BT, nh, nw, C, P, P)
    patches = patches.reshape(BT * nh * nw, C * P * P).astype(jnp.bfloat16)
    y = linear(patches, w_mat, b_zero)                  # (BT*np, width) bf16
    return y.reshape(BT, nh * nw, width)


def vit_zero_clip_long_forward(x, params, cfg):
    """x: (B, 3, T, H, W) float32  ->  (B, width, T, 1, 1) float32."""
    B, C, T, H, W = x.shape
    assert T == cfg["num_frames"]
    D = cfg["width"]
    n_head = cfg["heads"]

    # (b c t h w) -> ((b t) c h w)
    xf = x.transpose(0, 2, 1, 3, 4).reshape(B * T, C, H, W)
    h = patch_embed(xf, params["conv1_w_mat"], params["conv1_b"],
                    cfg["patch_size"], D)               # (BT, n_patches, D)
    BT = h.shape[0]

    # class token + positional + temporal embeddings (fp32 math, like torch)
    hf = h.astype(jnp.float32)
    cls_tok = jnp.broadcast_to(params["class_embedding"].reshape(1, 1, D),
                               (BT, 1, D))
    hf = jnp.concatenate([cls_tok, hf], axis=1)         # (BT, n, D)
    hf = hf + params["positional_embedding"][None]
    n = hf.shape[1]
    # temporal embedding: token-independent add of temporal_embedding[0, t]
    hf = hf.reshape(B, T, n, D) + params["temporal_embedding"].reshape(
        1, T, 1, D)
    hf = hf.reshape(BT * n, D)

    h = layernorm(hf, params["ln_pre_g"], params["ln_pre_b"]).reshape(BT, n, D)

    for blk in params["blocks"]:
        h = block_forward(h, blk, B, T, n_head, cfg["adapter_scale"],
                          cfg["shift1_heads"], cfg["shift2_heads"])

    h = h[:, 0]                                         # (BT, D)
    h = layernorm(h, params["ln_post_g"], params["ln_post_b"],
                  out_dtype=jnp.float32)
    h = h.reshape(B, T, D).transpose(0, 2, 1)           # (B, D, T)
    return h[:, :, :, None, None]                       # (B, D, T, 1, 1)


# ----------------------------------------------------------------------------
# Deterministic synthetic parameter construction
# (weights bf16, biases / LN params / embeddings f32)
# ----------------------------------------------------------------------------
def init_params(key, cfg):
    D = cfg["width"]
    P = cfg["patch_size"]
    R = cfg["input_resolution"]
    T = cfg["num_frames"]
    L = cfg["layers"]
    n_patches = (R // P) ** 2
    Dh_ad = max(1, int(D * cfg["mlp_ratio"]))

    keys = iter(jax.random.split(key, 1024))

    def wgt(shape, std=0.02):
        return (std * jax.random.normal(next(keys), shape)).astype(jnp.bfloat16)

    def bias(n):
        return jnp.zeros((1, n), jnp.float32)

    scale = D ** (-0.5)
    params = dict(
        # Conv weight pre-reshaped to a matmul matrix (C*P*P, D), bf16.
        conv1_w_mat=wgt((3 * P * P, D)),
        conv1_b=bias(D),
        class_embedding=scale * jax.random.normal(next(keys), (D,),
                                                  dtype=jnp.float32),
        positional_embedding=scale * jax.random.normal(
            next(keys), (n_patches + 1, D), dtype=jnp.float32),
        temporal_embedding=jnp.zeros((1, T, D), jnp.float32),   # torch.zeros
        ln_pre_g=jnp.ones((1, D), jnp.float32),
        ln_pre_b=jnp.zeros((1, D), jnp.float32),
        ln_post_g=jnp.ones((1, D), jnp.float32),
        ln_post_b=jnp.zeros((1, D), jnp.float32),
        blocks=[],
    )

    def adapter_params():
        return dict(
            fc1_w=wgt((D, Dh_ad)), fc1_b=bias(Dh_ad),
            fc2_w=wgt((Dh_ad, D)), fc2_b=bias(D),
        )

    for _ in range(L):
        params["blocks"].append(dict(
            ln1_g=jnp.ones((1, D), jnp.float32),
            ln1_b=jnp.zeros((1, D), jnp.float32),
            ln2_g=jnp.ones((1, D), jnp.float32),
            ln2_b=jnp.zeros((1, D), jnp.float32),
            T_Adapter_in=adapter_params(),
            S_Adapter=adapter_params(),
            MLP_Adapter=adapter_params(),
            attn=dict(
                in_proj_w=wgt((D, 3 * D)), in_proj_b=bias(3 * D),
                out_proj_w=wgt((D, D)), out_proj_b=bias(D),
            ),
            c_fc_w=wgt((D, 4 * D)), c_fc_b=bias(4 * D),
            c_proj_w=wgt((4 * D, D)), c_proj_b=bias(D),
        ))
    return params


# ----------------------------------------------------------------------------
if __name__ == "__main__":
    cfg = dict(
        input_resolution=16,
        patch_size=8,          # -> (16/8)^2 + 1 = 5 tokens
        width=128,             # multiple of 128 -> exercises fused-qkv path
        layers=2,
        heads=4,
        num_frames=4,
        mlp_ratio=0.25,
        adapter_scale=0.5,
        # stdha_cfg approximation: 1 head k/v shifted -1 frame, 1 head +1 frame
        shift1_heads=1,
        shift2_heads=1,
    )
    B = 2
    key = jax.random.PRNGKey(0)
    k_in, k_par = jax.random.split(key)

    x = jax.random.normal(
        k_in, (B, 3, cfg["num_frames"], cfg["input_resolution"],
               cfg["input_resolution"]), dtype=jnp.float32)
    params = init_params(k_par, cfg)

    fwd = jax.jit(functools.partial(vit_zero_clip_long_forward, cfg=cfg))
    out = fwd(x, params)
    out = jax.block_until_ready(out)

    expected = (B, cfg["width"], cfg["num_frames"], 1, 1)
    assert out.shape == expected, (out.shape, expected)
    assert bool(jnp.all(jnp.isfinite(out)))
    print("KERNEL_OK")
</pallas_src>

<mosaic_0001>
module attributes {stable_mosaic.version = 11 : i64} {
  func.func @_linear_kernel_noacc(%arg0: i32, %arg1: i32, %arg2: memref<32x192xbf16, #tpu.memory_space<vmem>>, %arg3: memref<192x128xbf16, #tpu.memory_space<vmem>>, %arg4: memref<1x128xf32, #tpu.memory_space<vmem>>, %arg5: memref<32x128xbf16, #tpu.memory_space<vmem>>) attributes {dimension_semantics = [#tpu.dimension_semantics<parallel>, #tpu.dimension_semantics<parallel>], iteration_bounds = array<i64: 1, 1>, scalar_prefetch = 0 : i64, scratch_operands = 0 : i64, tpu.core_type = #tpu.core_type<tc>, window_params = [{transform_indices = @transform_0, window_bounds = array<i64: 32, 192>}, {transform_indices = @transform_1, window_bounds = array<i64: 192, 128>}, {transform_indices = @transform_2, window_bounds = array<i64: 1, 128>}, {transform_indices = @transform_3, window_bounds = array<i64: 32, 128>}]} {
    %c0 = arith.constant 0 : index
    %c0_0 = arith.constant 0 : index
    %0 = vector.load %arg2[%c0, %c0_0] : memref<32x192xbf16, #tpu.memory_space<vmem>>, vector<32x192xbf16>
    %c0_1 = arith.constant 0 : index
    %c0_2 = arith.constant 0 : index
    %1 = vector.load %arg3[%c0_1, %c0_2] : memref<192x128xbf16, #tpu.memory_space<vmem>>, vector<192x128xbf16>
    %cst = arith.constant dense<0.000000e+00> : vector<32x128xf32>
    %2 = tpu.matmul %0, %1, %cst {dimension_numbers = #tpu.dot_dimension_numbers<[1], [0], [0], [1], [0, 0, 1, 1], [], []>} : vector<32x192xbf16>, vector<192x128xbf16>, vector<32x128xf32> -> vector<32x128xf32>
    %c0_3 = arith.constant 0 : index
    %c0_4 = arith.constant 0 : index
    %3 = vector.load %arg4[%c0_3, %c0_4] : memref<1x128xf32, #tpu.memory_space<vmem>>, vector<1x128xf32>
    %4 = vector.broadcast %3 : vector<1x128xf32> to vector<32x128xf32>
    %5 = arith.addf %2, %4 : vector<32x128xf32>
    %6 = arith.truncf %5 : vector<32x128xf32> to vector<32x128xbf16>
    %c0_5 = arith.constant 0 : index
    %c0_6 = arith.constant 0 : index
    %7 = vector.load %arg5[%c0_5, %c0_6] : memref<32x128xbf16, #tpu.memory_space<vmem>>, vector<32x128xbf16>
    tpu.vector_store %arg5[%c0_5, %c0_6], %6 {strides = array<i32>} : memref<32x128xbf16, #tpu.memory_space<vmem>>, vector<32x128xbf16>,
    return
  }
  func.func @transform_0(%arg0: i32, %arg1: i32) -> (i32, i32) {
    %c0_i32 = arith.constant 0 : i32
    %c0_i32_0 = arith.constant 0 : i32
    return %arg1, %c0_i32 : i32, i32
  }
  func.func @transform_1(%arg0: i32, %arg1: i32) -> (i32, i32) {
    %c0_i32 = arith.constant 0 : i32
    %c0_i32_0 = arith.constant 0 : i32
    return %c0_i32, %arg0 : i32, i32
  }
  func.func @transform_2(%arg0: i32, %arg1: i32) -> (i32, i32) {
    %c0_i32 = arith.constant 0 : i32
    %c0_i32_0 = arith.constant 0 : i32
    return %c0_i32, %arg0 : i32, i32
  }
  func.func @transform_3(%arg0: i32, %arg1: i32) -> (i32, i32) {
    %c0_i32 = arith.constant 0 : i32
    return %arg1, %arg0 : i32, i32
  }
}

module attributes {stable_mosaic.version = 11 : i64} {
  func.func @_layernorm_kernel(%arg0: i32, %arg1: memref<40x128xf32, #tpu.memory_space<vmem>>, %arg2: memref<1x128xf32, #tpu.memory_space<vmem>>, %arg3: memref<1x128xf32, #tpu.memory_space<vmem>>, %arg4: memref<40x128xbf16, #tpu.memory_space<vmem>>) attributes {dimension_semantics = [#tpu.dimension_semantics<parallel>], iteration_bounds = array<i64: 1>, scalar_prefetch = 0 : i64, scratch_operands = 0 : i64, tpu.core_type = #tpu.core_type<tc>, window_params = [{transform_indices = @transform_0, window_bounds = array<i64: 40, 128>}, {pipeline_mode = #tpu.pipeline_mode<synchronous>, transform_indices = @transform_1, window_bounds = array<i64: 1, 128>}, {pipeline_mode = #tpu.pipeline_mode<synchronous>, transform_indices = @transform_2, window_bounds = array<i64: 1, 128>}, {transform_indices = @transform_3, window_bounds = array<i64: 40, 128>}]} {
    %c0 = arith.constant 0 : index
    %c0_0 = arith.constant 0 : index
    %0 = vector.load %arg1[%c0, %c0_0] : memref<40x128xf32, #tpu.memory_space<vmem>>, vector<40x128xf32>
    %cst = arith.constant dense<0.000000e+00> : vector<40xf32>
    %1 = vector.multi_reduction <add>, %0, %cst [1] : vector<40x128xf32> to vector<40xf32>
    %2 = vector.shape_cast %1 : vector<40xf32> to vector<40x1xf32>
    %cst_1 = arith.constant 1.280000e+02 : f32
    %3 = vector.broadcast %cst_1 : f32 to vector<40x1xf32>
    %4 = arith.divf %2, %3 : vector<40x1xf32>
    %5 = vector.broadcast %4 : vector<40x1xf32> to vector<40x128xf32>
    %6 = arith.subf %0, %5 : vector<40x128xf32>
    %7 = arith.mulf %6, %6 : vector<40x128xf32>
    %cst_2 = arith.constant dense<0.000000e+00> : vector<40xf32>
    %8 = vector.multi_reduction <add>, %7, %cst_2 [1] : vector<40x128xf32> to vector<40xf32>
    %9 = vector.shape_cast %8 : vector<40xf32> to vector<40x1xf32>
    %cst_3 = arith.constant 1.280000e+02 : f32
    %10 = vector.broadcast %cst_3 : f32 to vector<40x1xf32>
    %11 = arith.divf %9, %10 : vector<40x1xf32>
    %12 = vector.broadcast %4 : vector<40x1xf32> to vector<40x128xf32>
    %13 = arith.subf %0, %12 : vector<40x128xf32>
    %cst_4 = arith.constant 9.99999974E-6 : f32
    %14 = vector.broadcast %cst_4 : f32 to vector<40x1xf32>
    %15 = arith.addf %11, %14 : vector<40x1xf32>
    %16 = math.rsqrt %15 : vector<40x1xf32>
    %17 = vector.broadcast %16 : vector<40x1xf32> to vector<40x128xf32>
    %18 = arith.mulf %13, %17 : vector<40x128xf32>
    %c0_5 = arith.constant 0 : index
    %c0_6 = arith.constant 0 : index
    %19 = vector.load %arg2[%c0_5, %c0_6] : memref<1x128xf32, #tpu.memory_space<vmem>>, vector<1x128xf32>
    %20 = vector.broadcast %19 : vector<1x128xf32> to vector<40x128xf32>
    %21 = arith.mulf %18, %20 : vector<40x128xf32>
    %c0_7 = arith.constant 0 : index
    %c0_8 = arith.constant 0 : index
    %22 = vector.load %arg3[%c0_7, %c0_8] : memref<1x128xf32, #tpu.memory_space<vmem>>, vector<1x128xf32>
    %23 = vector.broadcast %22 : vector<1x128xf32> to vector<40x128xf32>
    %24 = arith.addf %21, %23 : vector<40x128xf32>
    %25 = arith.truncf %24 : vector<40x128xf32> to vector<40x128xbf16>
    %c0_9 = arith.constant 0 : index
    %c0_10 = arith.constant 0 : index
    %26 = vector.load %arg4[%c0_9, %c0_10] : memref<40x128xbf16, #tpu.memory_space<vmem>>, vector<40x128xbf16>
    tpu.vector_store %arg4[%c0_9, %c0_10], %25 {strides = array<i32>} : memref<40x128xbf16, #tpu.memory_space<vmem>>, vector<40x128xbf16>,
    return
  }
  func.func @transform_0(%arg0: i32) -> (i32, i32) {
    %c0_i32 = arith.constant 0 : i32
    %c0_i32_0 = arith.constant 0 : i32
    return %arg0, %c0_i32 : i32, i32
  }
  func.func @transform_1(%arg0: i32) -> (i32, i32) {
    %c0_i32 = arith.constant 0 : i32
    %c0_i32_0 = arith.constant 0 : i32
    %c0_i32_1 = arith.constant 0 : i32
    return %c0_i32, %c0_i32_0 : i32, i32
  }
  func.func @transform_2(%arg0: i32) -> (i32, i32) {
    %c0_i32 = arith.constant 0 : i32
    %c0_i32_0 = arith.constant 0 : i32
    %c0_i32_1 = arith.constant 0 : i32
    return %c0_i32, %c0_i32_0 : i32, i32
  }
  func.func @transform_3(%arg0: i32) -> (i32, i32) {
    %c0_i32 = arith.constant 0 : i32
    %c0_i32_0 = arith.constant 0 : i32
    return %arg0, %c0_i32 : i32, i32
  }
}

module attributes {stable_mosaic.version = 11 : i64} {
  func.func @_adapter_kernel(%arg0: i32, %arg1: memref<40x128xbf16, #tpu.memory_space<vmem>>, %arg2: memref<1x128xf32, #tpu.memory_space<vmem>>, %arg3: memref<1x128xf32, #tpu.memory_space<vmem>>, %arg4: memref<128x32xbf16, #tpu.memory_space<vmem>>, %arg5: memref<1x32xf32, #tpu.memory_space<vmem>>, %arg6: memref<32x128xbf16, #tpu.memory_space<vmem>>, %arg7: memref<1x128xf32, #tpu.memory_space<vmem>>, %arg8: memref<40x128xbf16, #tpu.memory_space<vmem>>) attributes {dimension_semantics = [#tpu.dimension_semantics<parallel>], iteration_bounds = array<i64: 1>, scalar_prefetch = 0 : i64, scratch_operands = 0 : i64, tpu.core_type = #tpu.core_type<tc>, window_params = [{transform_indices = @transform_0, window_bounds = array<i64: 40, 128>}, {pipeline_mode = #tpu.pipeline_mode<synchronous>, transform_indices = @transform_1, window_bounds = array<i64: 1, 128>}, {pipeline_mode = #tpu.pipeline_mode<synchronous>, transform_indices = @transform_2, window_bounds = array<i64: 1, 128>}, {pipeline_mode = #tpu.pipeline_mode<synchronous>, transform_indices = @transform_3, window_bounds = array<i64: 128, 32>}, {pipeline_mode = #tpu.pipeline_mode<synchronous>, transform_indices = @transform_4, window_bounds = array<i64: 1, 32>}, {pipeline_mode = #tpu.pipeline_mode<synchronous>, transform_indices = @transform_5, window_bounds = array<i64: 32, 128>}, {pipeline_mode = #tpu.pipeline_mode<synchronous>, transform_indices = @transform_6, window_bounds = array<i64: 1, 128>}, {transform_indices = @transform_7, window_bounds = array<i64: 40, 128>}]} {
    %c0 = arith.constant 0 : index
    %c0_0 = arith.constant 0 : index
    %0 = vector.load %arg1[%c0, %c0_0] : memref<40x128xbf16, #tpu.memory_space<vmem>>, vector<40x128xbf16>
    %1 = arith.extf %0 : vector<40x128xbf16> to vector<40x128xf32>
    %cst = arith.constant dense<0.000000e+00> : vector<40xf32>
    %2 = vector.multi_reduction <add>, %1, %cst [1] : vector<40x128xf32> to vector<40xf32>
    %3 = vector.shape_cast %2 : vector<40xf32> to vector<40x1xf32>
    %cst_1 = arith.constant 1.280000e+02 : f32
    %4 = vector.broadcast %cst_1 : f32 to vector<40x1xf32>
    %5 = arith.divf %3, %4 : vector<40x1xf32>
    %6 = vector.broadcast %5 : vector<40x1xf32> to vector<40x128xf32>
    %7 = arith.subf %1, %6 : vector<40x128xf32>
    %8 = arith.mulf %7, %7 : vector<40x128xf32>
    %cst_2 = arith.constant dense<0.000000e+00> : vector<40xf32>
    %9 = vector.multi_reduction <add>, %8, %cst_2 [1] : vector<40x128xf32> to vector<40xf32>
    %10 = vector.shape_cast %9 : vector<40xf32> to vector<40x1xf32>
    %cst_3 = arith.constant 1.280000e+02 : f32
    %11 = vector.broadcast %cst_3 : f32 to vector<40x1xf32>
    %12 = arith.divf %10, %11 : vector<40x1xf32>
    %13 = vector.broadcast %5 : vector<40x1xf32> to vector<40x128xf32>
    %14 = arith.subf %1, %13 : vector<40x128xf32>
    %cst_4 = arith.constant 9.99999974E-6 : f32
    %15 = vector.broadcast %cst_4 : f32 to vector<40x1xf32>
    %16 = arith.addf %12, %15 : vector<40x1xf32>
    %17 = math.rsqrt %16 : vector<40x1xf32>
    %18 = vector.broadcast %17 : vector<40x1xf32> to vector<40x128xf32>
    %19 = arith.mulf %14, %18 : vector<40x128xf32>
    %c0_5 = arith.constant 0 : index
    %c0_6 = arith.constant 0 : index
    %20 = vector.load %arg2[%c0_5, %c0_6] : memref<1x128xf32, #tpu.memory_space<vmem>>, vector<1x128xf32>
    %21 = vector.broadcast %20 : vector<1x128xf32> to vector<40x128xf32>
    %22 = arith.mulf %19, %21 : vector<40x128xf32>
    %c0_7 = arith.constant 0 : index
    %c0_8 = arith.constant 0 : index
    %23 = vector.load %arg3[%c0_7, %c0_8] : memref<1x128xf32, #tpu.memory_space<vmem>>, vector<1x128xf32>
    %24 = vector.broadcast %23 : vector<1x128xf32> to vector<40x128xf32>
    %25 = arith.addf %22, %24 : vector<40x128xf32>
    %26 = arith.truncf %25 : vector<40x128xf32> to vector<40x128xbf16>
    %c0_9 = arith.constant 0 : index
    %c0_10 = arith.constant 0 : index
    %27 = vector.load %arg4[%c0_9, %c0_10] : memref<128x32xbf16, #tpu.memory_space<vmem>>, vector<128x32xbf16>
    %cst_11 = arith.constant dense<0.000000e+00> : vector<40x32xf32>
    %28 = tpu.matmul %26, %27, %cst_11 {dimension_numbers = #tpu.dot_dimension_numbers<[1], [0], [0], [1], [0, 0, 1, 1], [], []>} : vector<40x128xbf16>, vector<128x32xbf16>, vector<40x32xf32> -> vector<40x32xf32>
    %c0_12 = arith.constant 0 : index
    %c0_13 = arith.constant 0 : index
    %29 = vector.load %arg5[%c0_12, %c0_13] : memref<1x32xf32, #tpu.memory_space<vmem>>, vector<1x32xf32>
    %30 = vector.broadcast %29 : vector<1x32xf32> to vector<40x32xf32>
    %31 = arith.addf %28, %30 : vector<40x32xf32>
    %32 = arith.truncf %31 : vector<40x32xf32> to vector<40x32xbf16>
    %c0_14 = arith.constant 0 : index
    %c0_15 = arith.constant 0 : index
    %33 = vector.load %arg6[%c0_14, %c0_15] : memref<32x128xbf16, #tpu.memory_space<vmem>>, vector<32x128xbf16>
    %cst_16 = arith.constant dense<0.000000e+00> : vector<40x128xf32>
    %34 = tpu.matmul %32, %33, %cst_16 {dimension_numbers = #tpu.dot_dimension_numbers<[1], [0], [0], [1], [0, 0, 1, 1], [], []>} : vector<40x32xbf16>, vector<32x128xbf16>, vector<40x128xf32> -> vector<40x128xf32>
    %c0_17 = arith.constant 0 : index
    %c0_18 = arith.constant 0 : index
    %35 = vector.load %arg7[%c0_17, %c0_18] : memref<1x128xf32, #tpu.memory_space<vmem>>, vector<1x128xf32>
    %36 = vector.broadcast %35 : vector<1x128xf32> to vector<40x128xf32>
    %37 = arith.addf %34, %36 : vector<40x128xf32>
    %cst_19 = arith.constant 5.000000e-01 : f32
    %38 = vector.broadcast %cst_19 : f32 to vector<40x128xf32>
    %39 = arith.mulf %38, %37 : vector<40x128xf32>
    %40 = arith.addf %25, %39 : vector<40x128xf32>
    %41 = arith.truncf %40 : vector<40x128xf32> to vector<40x128xbf16>
    %c0_20 = arith.constant 0 : index
    %c0_21 = arith.constant 0 : index
    %42 = vector.load %arg8[%c0_20, %c0_21] : memref<40x128xbf16, #tpu.memory_space<vmem>>, vector<40x128xbf16>
    tpu.vector_store %arg8[%c0_20, %c0_21], %41 {strides = array<i32>} : memref<40x128xbf16, #tpu.memory_space<vmem>>, vector<40x128xbf16>,
    return
  }
  func.func @transform_0(%arg0: i32) -> (i32, i32) {
    %c0_i32 = arith.constant 0 : i32
    %c0_i32_0 = arith.constant 0 : i32
    return %arg0, %c0_i32 : i32, i32
  }
  func.func @transform_1(%arg0: i32) -> (i32, i32) {
    %c0_i32 = arith.constant 0 : i32
    %c0_i32_0 = arith.constant 0 : i32
    %c0_i32_1 = arith.constant 0 : i32
    return %c0_i32, %c0_i32_0 : i32, i32
  }
  func.func @transform_2(%arg0: i32) -> (i32, i32) {
    %c0_i32 = arith.constant 0 : i32
    %c0_i32_0 = arith.constant 0 : i32
    %c0_i32_1 = arith.constant 0 : i32
    return %c0_i32, %c0_i32_0 : i32, i32
  }
  func.func @transform_3(%arg0: i32) -> (i32, i32) {
    %c0_i32 = arith.constant 0 : i32
    %c0_i32_0 = arith.constant 0 : i32
    %c0_i32_1 = arith.constant 0 : i32
    return %c0_i32, %c0_i32_0 : i32, i32
  }
  func.func @transform_4(%arg0: i32) -> (i32, i32) {
    %c0_i32 = arith.constant 0 : i32
    %c0_i32_0 = arith.constant 0 : i32
    %c0_i32_1 = arith.constant 0 : i32
    return %c0_i32, %c0_i32_0 : i32, i32
  }
  func.func @transform_5(%arg0: i32) -> (i32, i32) {
    %c0_i32 = arith.constant 0 : i32
    %c0_i32_0 = arith.constant 0 : i32
    %c0_i32_1 = arith.constant 0 : i32
    return %c0_i32, %c0_i32_0 : i32, i32
  }
  func.func @transform_6(%arg0: i32) -> (i32, i32) {
    %c0_i32 = arith.constant 0 : i32
    %c0_i32_0 = arith.constant 0 : i32
    %c0_i32_1 = arith.constant 0 : i32
    return %c0_i32, %c0_i32_0 : i32, i32
  }
  func.func @transform_7(%arg0: i32) -> (i32, i32) {
    %c0_i32 = arith.constant 0 : i32
    %c0_i32_0 = arith.constant 0 : i32
    return %arg0, %c0_i32 : i32, i32
  }
}

module attributes {stable_mosaic.version = 11 : i64} {
  func.func @_linear_kernel_noacc(%arg0: i32, %arg1: i32, %arg2: memref<40x128xbf16, #tpu.memory_space<vmem>>, %arg3: memref<128x384xbf16, #tpu.memory_space<vmem>>, %arg4: memref<1x384xf32, #tpu.memory_space<vmem>>, %arg5: memref<40x384xbf16, #tpu.memory_space<vmem>>) attributes {dimension_semantics = [#tpu.dimension_semantics<parallel>, #tpu.dimension_semantics<parallel>], iteration_bounds = array<i64: 1, 1>, scalar_prefetch = 0 : i64, scratch_operands = 0 : i64, tpu.core_type = #tpu.core_type<tc>, window_params = [{transform_indices = @transform_0, window_bounds = array<i64: 40, 128>}, {transform_indices = @transform_1, window_bounds = array<i64: 128, 384>}, {transform_indices = @transform_2, window_bounds = array<i64: 1, 384>}, {transform_indices = @transform_3, window_bounds = array<i64: 40, 384>}]} {
    %c0 = arith.constant 0 : index
    %c0_0 = arith.constant 0 : index
    %0 = vector.load %arg2[%c0, %c0_0] : memref<40x128xbf16, #tpu.memory_space<vmem>>, vector<40x128xbf16>
    %c0_1 = arith.constant 0 : index
    %c0_2 = arith.constant 0 : index
    %1 = vector.load %arg3[%c0_1, %c0_2] : memref<128x384xbf16, #tpu.memory_space<vmem>>, vector<128x384xbf16>
    %cst = arith.constant dense<0.000000e+00> : vector<40x384xf32>
    %2 = tpu.matmul %0, %1, %cst {dimension_numbers = #tpu.dot_dimension_numbers<[1], [0], [0], [1], [0, 0, 1, 1], [], []>} : vector<40x128xbf16>, vector<128x384xbf16>, vector<40x384xf32> -> vector<40x384xf32>
    %c0_3 = arith.constant 0 : index
    %c0_4 = arith.constant 0 : index
    %3 = vector.load %arg4[%c0_3, %c0_4] : memref<1x384xf32, #tpu.memory_space<vmem>>, vector<1x384xf32>
    %4 = vector.broadcast %3 : vector<1x384xf32> to vector<40x384xf32>
    %5 = arith.addf %2, %4 : vector<40x384xf32>
    %6 = arith.truncf %5 : vector<40x384xf32> to vector<40x384xbf16>
    %c0_5 = arith.constant 0 : index
    %c0_6 = arith.constant 0 : index
    %7 = vector.load %arg5[%c0_5, %c0_6] : memref<40x384xbf16, #tpu.memory_space<vmem>>, vector<40x384xbf16>
    tpu.vector_store %arg5[%c0_5, %c0_6], %6 {strides = array<i32>} : memref<40x384xbf16, #tpu.memory_space<vmem>>, vector<40x384xbf16>,
    return
  }
  func.func @transform_0(%arg0: i32, %arg1: i32) -> (i32, i32) {
    %c0_i32 = arith.constant 0 : i32
    %c0_i32_0 = arith.constant 0 : i32
    return %arg1, %c0_i32 : i32, i32
  }
  func.func @transform_1(%arg0: i32, %arg1: i32) -> (i32, i32) {
    %c0_i32 = arith.constant 0 : i32
    %c0_i32_0 = arith.constant 0 : i32
    return %c0_i32, %arg0 : i32, i32
  }
  func.func @transform_2(%arg0: i32, %arg1: i32) -> (i32, i32) {
    %c0_i32 = arith.constant 0 : i32
    %c0_i32_0 = arith.constant 0 : i32
    return %c0_i32, %arg0 : i32, i32
  }
  func.func @transform_3(%arg0: i32, %arg1: i32) -> (i32, i32) {
    %c0_i32 = arith.constant 0 : i32
    return %arg1, %arg0 : i32, i32
  }
}

module attributes {stable_mosaic.version = 11 : i64} {
  func.func @_attn_kernel(%arg0: i32, %arg1: i32, %arg2: memref<1x1x5x128xbf16, #tpu.memory_space<vmem>>, %arg3: memref<1x1x5x128xbf16, #tpu.memory_space<vmem>>, %arg4: memref<1x1x5x128xbf16, #tpu.memory_space<vmem>>, %arg5: memref<1x1x5x32xbf16, #tpu.memory_space<vmem>>, %arg6: memref<1x1x5x32xbf16, #tpu.memory_space<vmem>>, %arg7: memref<1x1x5x32xbf16, #tpu.memory_space<vmem>>, %arg8: memref<1x1x5x32xbf16, #tpu.memory_space<vmem>>, %arg9: memref<1x1x5x128xbf16, #tpu.memory_space<vmem>>) attributes {dimension_semantics = [#tpu.dimension_semantics<parallel>, #tpu.dimension_semantics<parallel>], iteration_bounds = array<i64: 2, 4>, scalar_prefetch = 0 : i64, scratch_operands = 0 : i64, tpu.core_type = #tpu.core_type<tc>, window_params = [{transform_indices = @transform_0, window_bounds = array<i64: 1, 1, 5, 128>}, {transform_indices = @transform_1, window_bounds = array<i64: 1, 1, 5, 128>}, {transform_indices = @transform_2, window_bounds = array<i64: 1, 1, 5, 128>}, {transform_indices = @transform_3, window_bounds = array<i64: 1, 1, 5, 32>}, {transform_indices = @transform_4, window_bounds = array<i64: 1, 1, 5, 32>}, {transform_indices = @transform_5, window_bounds = array<i64: 1, 1, 5, 32>}, {transform_indices = @transform_6, window_bounds = array<i64: 1, 1, 5, 32>}, {transform_indices = @transform_7, window_bounds = array<i64: 1, 1, 5, 128>}]} {
    %c0_i32 = arith.constant 0 : i32
    %0 = arith.cmpi sgt, %arg1, %c0_i32 : i32
    %c3_i32 = arith.constant 3 : i32
    %1 = arith.cmpi slt, %arg1, %c3_i32 : i32
    %c0 = arith.constant 0 : index
    %c0_0 = arith.constant 0 : index
    %c0_1 = arith.constant 0 : index
    %c0_2 = arith.constant 0 : index
    %2 = vector.load %arg2[%c0, %c0_0, %c0_1, %c0_2] : memref<1x1x5x128xbf16, #tpu.memory_space<vmem>>, vector<1x1x5x128xbf16>
    %3 = vector.shape_cast %2 : vector<1x1x5x128xbf16> to vector<5x128xbf16>
    %c0_3 = arith.constant 0 : index
    %c0_4 = arith.constant 0 : index
    %c0_5 = arith.constant 0 : index
    %c0_6 = arith.constant 0 : index
    %4 = vector.load %arg3[%c0_3, %c0_4, %c0_5, %c0_6] : memref<1x1x5x128xbf16, #tpu.memory_space<vmem>>, vector<1x1x5x128xbf16>
    %5 = vector.shape_cast %4 : vector<1x1x5x128xbf16> to vector<5x128xbf16>
    %c0_7 = arith.constant 0 : index
    %c0_8 = arith.constant 0 : index
    %c0_9 = arith.constant 0 : index
    %c0_10 = arith.constant 0 : index
    %6 = vector.load %arg4[%c0_7, %c0_8, %c0_9, %c0_10] : memref<1x1x5x128xbf16, #tpu.memory_space<vmem>>, vector<1x1x5x128xbf16>
    %7 = vector.shape_cast %6 : vector<1x1x5x128xbf16> to vector<5x128xbf16>
    %8 = vector.extract_strided_slice %3 {offsets = [0, 0], sizes = [5, 32], strides = [1, 1]} : vector<5x128xbf16> to vector<5x32xbf16>
    %c0_11 = arith.constant 0 : index
    %c0_12 = arith.constant 0 : index
    %c0_13 = arith.constant 0 : index
    %c0_14 = arith.constant 0 : index
    %9 = vector.load %arg5[%c0_11, %c0_12, %c0_13, %c0_14] : memref<1x1x5x32xbf16, #tpu.memory_space<vmem>>, vector<1x1x5x32xbf16>
    %10 = vector.shape_cast %9 : vector<1x1x5x32xbf16> to vector<5x32xbf16>
    %cst = arith.constant 0.000000e+00 : f32
    %11 = arith.truncf %cst : f32 to bf16
    %12 = vector.broadcast %11 : bf16 to vector<5x32xbf16>
    %13 = arith.select %0, %10, %12 : vector<5x32xbf16>
    %c0_15 = arith.constant 0 : index
    %c0_16 = arith.constant 0 : index
    %c0_17 = arith.constant 0 : index
    %c0_18 = arith.constant 0 : index
    %14 = vector.load %arg6[%c0_15, %c0_16, %c0_17, %c0_18] : memref<1x1x5x32xbf16, #tpu.memory_space<vmem>>, vector<1x1x5x32xbf16>
    %15 = vector.shape_cast %14 : vector<1x1x5x32xbf16> to vector<5x32xbf16>
    %cst_19 = arith.constant 0.000000e+00 : f32
    %16 = arith.truncf %cst_19 : f32 to bf16
    %17 = vector.broadcast %16 : bf16 to vector<5x32xbf16>
    %18 = arith.select %0, %15, %17 : vector<5x32xbf16>
    %cst_20 = arith.constant dense<0.000000e+00> : vector<5x5xf32>
    %19 = tpu.matmul %8, %13, %cst_20 {dimension_numbers = #tpu.dot_dimension_numbers<[1], [1], [0], [0], [0, 0, 1, 0], [], []>} : vector<5x32xbf16>, vector<5x32xbf16>, vector<5x5xf32> -> vector<5x5xf32>
    %cst_21 = arith.constant 0.176776692 : f32
    %20 = vector.broadcast %cst_21 : f32 to vector<5x5xf32>
    %21 = arith.mulf %19, %20 : vector<5x5xf32>
    %cst_22 = arith.constant dense<0xFF800000> : vector<5xf32>
    %22 = vector.multi_reduction <maximumf>, %21, %cst_22 [1] : vector<5x5xf32> to vector<5xf32>
    %23 = vector.shape_cast %22 : vector<5xf32> to vector<5x1xf32>
    %24 = vector.broadcast %23 : vector<5x1xf32> to vector<5x5xf32>
    %25 = arith.subf %21, %24 : vector<5x5xf32>
    %26 = math.exp %25 : vector<5x5xf32>
    %cst_23 = arith.constant dense<0.000000e+00> : vector<5xf32>
    %27 = vector.multi_reduction <add>, %26, %cst_23 [1] : vector<5x5xf32> to vector<5xf32>
    %28 = vector.shape_cast %27 : vector<5xf32> to vector<5x1xf32>
    %29 = tpu.reciprocal %28 : vector<5x1xf32> -> vector<5x1xf32>
    %30 = vector.broadcast %29 : vector<5x1xf32> to vector<5x5xf32>
    %31 = arith.mulf %26, %30 : vector<5x5xf32>
    %32 = arith.truncf %31 : vector<5x5xf32> to vector<5x5xbf16>
    %cst_24 = arith.constant dense<0.000000e+00> : vector<5x32xf32>
    %33 = tpu.matmul %32, %18, %cst_24 {dimension_numbers = #tpu.dot_dimension_numbers<[1], [0], [0], [1], [0, 0, 1, 1], [], []>} : vector<5x5xbf16>, vector<5x32xbf16>, vector<5x32xf32> -> vector<5x32xf32>
    %34 = arith.truncf %33 : vector<5x32xf32> to vector<5x32xbf16>
    %c0_25 = arith.constant 0 : index
    %c0_26 = arith.constant 0 : index
    %c0_27 = arith.constant 0 : index
    %c0_28 = arith.constant 0 : index
    %35 = vector.load %arg9[%c0_25, %c0_26, %c0_27, %c0_28] : memref<1x1x5x128xbf16, #tpu.memory_space<vmem>>, vector<1x1x5x32xbf16>
    %36 = vector.shape_cast %35 : vector<1x1x5x32xbf16> to vector<5x32xbf16>
    %37 = vector.shape_cast %34 : vector<5x32xbf16> to vector<1x1x5x32xbf16>
    tpu.vector_store %arg9[%c0_25, %c0_26, %c0_27, %c0_28], %37 {strides = array<i32>} : memref<1x1x5x128xbf16, #tpu.memory_space<vmem>>, vector<1x1x5x32xbf16>,
    %38 = vector.extract_strided_slice %3 {offsets = [0, 32], sizes = [5, 32], strides = [1, 1]} : vector<5x128xbf16> to vector<5x32xbf16>
    %c0_29 = arith.constant 0 : index
    %c0_30 = arith.constant 0 : index
    %c0_31 = arith.constant 0 : index
    %c0_32 = arith.constant 0 : index
    %39 = vector.load %arg7[%c0_29, %c0_30, %c0_31, %c0_32] : memref<1x1x5x32xbf16, #tpu.memory_space<vmem>>, vector<1x1x5x32xbf16>
    %40 = vector.shape_cast %39 : vector<1x1x5x32xbf16> to vector<5x32xbf16>
    %cst_33 = arith.constant 0.000000e+00 : f32
    %41 = arith.truncf %cst_33 : f32 to bf16
    %42 = vector.broadcast %41 : bf16 to vector<5x32xbf16>
    %43 = arith.select %1, %40, %42 : vector<5x32xbf16>
    %c0_34 = arith.constant 0 : index
    %c0_35 = arith.constant 0 : index
    %c0_36 = arith.constant 0 : index
    %c0_37 = arith.constant 0 : index
    %44 = vector.load %arg8[%c0_34, %c0_35, %c0_36, %c0_37] : memref<1x1x5x32xbf16, #tpu.memory_space<vmem>>, vector<1x1x5x32xbf16>
    %45 = vector.shape_cast %44 : vector<1x1x5x32xbf16> to vector<5x32xbf16>
    %cst_38 = arith.constant 0.000000e+00 : f32
    %46 = arith.truncf %cst_38 : f32 to bf16
    %47 = vector.broadcast %46 : bf16 to vector<5x32xbf16>
    %48 = arith.select %1, %45, %47 : vector<5x32xbf16>
    %cst_39 = arith.constant dense<0.000000e+00> : vector<5x5xf32>
    %49 = tpu.matmul %38, %43, %cst_39 {dimension_numbers = #tpu.dot_dimension_numbers<[1], [1], [0], [0], [0, 0, 1, 0], [], []>} : vector<5x32xbf16>, vector<5x32xbf16>, vector<5x5xf32> -> vector<5x5xf32>
    %cst_40 = arith.constant 0.176776692 : f32
    %50 = vector.broadcast %cst_40 : f32 to vector<5x5xf32>
    %51 = arith.mulf %49, %50 : vector<5x5xf32>
    %cst_41 = arith.constant dense<0xFF800000> : vector<5xf32>
    %52 = vector.multi_reduction <maximumf>, %51, %cst_41 [1] : vector<5x5xf32> to vector<5xf32>
    %53 = vector.shape_cast %52 : vector<5xf32> to vector<5x1xf32>
    %54 = vector.broadcast %53 : vector<5x1xf32> to vector<5x5xf32>
    %55 = arith.subf %51, %54 : vector<5x5xf32>
    %56 = math.exp %55 : vector<5x5xf32>
    %cst_42 = arith.constant dense<0.000000e+00> : vector<5xf32>
    %57 = vector.multi_reduction <add>, %56, %cst_42 [1] : vector<5x5xf32> to vector<5xf32>
    %58 = vector.shape_cast %57 : vector<5xf32> to vector<5x1xf32>
    %59 = tpu.reciprocal %58 : vector<5x1xf32> -> vector<5x1xf32>
    %60 = vector.broadcast %59 : vector<5x1xf32> to vector<5x5xf32>
    %61 = arith.mulf %56, %60 : vector<5x5xf32>
    %62 = arith.truncf %61 : vector<5x5xf32> to vector<5x5xbf16>
    %cst_43 = arith.constant dense<0.000000e+00> : vector<5x32xf32>
    %63 = tpu.matmul %62, %48, %cst_43 {dimension_numbers = #tpu.dot_dimension_numbers<[1], [0], [0], [1], [0, 0, 1, 1], [], []>} : vector<5x5xbf16>, vector<5x32xbf16>, vector<5x32xf32> -> vector<5x32xf32>
    %64 = arith.truncf %63 : vector<5x32xf32> to vector<5x32xbf16>
    %c0_44 = arith.constant 0 : index
    %c0_45 = arith.constant 0 : index
    %c0_46 = arith.constant 0 : index
    %c32 = arith.constant 32 : index
    %65 = vector.load %arg9[%c0_44, %c0_45, %c0_46, %c32] : memref<1x1x5x128xbf16, #tpu.memory_space<vmem>>, vector<1x1x5x32xbf16>
    %66 = vector.shape_cast %65 : vector<1x1x5x32xbf16> to vector<5x32xbf16>
    %67 = vector.shape_cast %64 : vector<5x32xbf16> to vector<1x1x5x32xbf16>
    tpu.vector_store %arg9[%c0_44, %c0_45, %c0_46, %c32], %67 {strides = array<i32>} : memref<1x1x5x128xbf16, #tpu.memory_space<vmem>>, vector<1x1x5x32xbf16>,
    %68 = vector.extract_strided_slice %3 {offsets = [0, 64], sizes = [5, 32], strides = [1, 1]} : vector<5x128xbf16> to vector<5x32xbf16>
    %69 = vector.extract_strided_slice %5 {offsets = [0, 64], sizes = [5, 32], strides = [1, 1]} : vector<5x128xbf16> to vector<5x32xbf16>
    %70 = vector.extract_strided_slice %7 {offsets = [0, 64], sizes = [5, 32], strides = [1, 1]} : vector<5x128xbf16> to vector<5x32xbf16>
    %cst_47 = arith.constant dense<0.000000e+00> : vector<5x5xf32>
    %71 = tpu.matmul %68, %69, %cst_47 {dimension_numbers = #tpu.dot_dimension_numbers<[1], [1], [0], [0], [0, 0, 1, 0], [], []>} : vector<5x32xbf16>, vector<5x32xbf16>, vector<5x5xf32> -> vector<5x5xf32>
    %cst_48 = arith.constant 0.176776692 : f32
    %72 = vector.broadcast %cst_48 : f32 to vector<5x5xf32>
    %73 = arith.mulf %71, %72 : vector<5x5xf32>
    %cst_49 = arith.constant dense<0xFF800000> : vector<5xf32>
    %74 = vector.multi_reduction <maximumf>, %73, %cst_49 [1] : vector<5x5xf32> to vector<5xf32>
    %75 = vector.shape_cast %74 : vector<5xf32> to vector<5x1xf32>
    %76 = vector.broadcast %75 : vector<5x1xf32> to vector<5x5xf32>
    %77 = arith.subf %73, %76 : vector<5x5xf32>
    %78 = math.exp %77 : vector<5x5xf32>
    %cst_50 = arith.constant dense<0.000000e+00> : vector<5xf32>
    %79 = vector.multi_reduction <add>, %78, %cst_50 [1] : vector<5x5xf32> to vector<5xf32>
    %80 = vector.shape_cast %79 : vector<5xf32> to vector<5x1xf32>
    %81 = tpu.reciprocal %80 : vector<5x1xf32> -> vector<5x1xf32>
    %82 = vector.broadcast %81 : vector<5x1xf32> to vector<5x5xf32>
    %83 = arith.mulf %78, %82 : vector<5x5xf32>
    %84 = arith.truncf %83 : vector<5x5xf32> to vector<5x5xbf16>
    %cst_51 = arith.constant dense<0.000000e+00> : vector<5x32xf32>
    %85 = tpu.matmul %84, %70, %cst_51 {dimension_numbers = #tpu.dot_dimension_numbers<[1], [0], [0], [1], [0, 0, 1, 1], [], []>} : vector<5x5xbf16>, vector<5x32xbf16>, vector<5x32xf32> -> vector<5x32xf32>
    %86 = arith.truncf %85 : vector<5x32xf32> to vector<5x32xbf16>
    %c0_52 = arith.constant 0 : index
    %c0_53 = arith.constant 0 : index
    %c0_54 = arith.constant 0 : index
    %c64 = arith.constant 64 : index
    %87 = vector.load %arg9[%c0_52, %c0_53, %c0_54, %c64] : memref<1x1x5x128xbf16, #tpu.memory_space<vmem>>, vector<1x1x5x32xbf16>
    %88 = vector.shape_cast %87 : vector<1x1x5x32xbf16> to vector<5x32xbf16>
    %89 = vector.shape_cast %86 : vector<5x32xbf16> to vector<1x1x5x32xbf16>
    tpu.vector_store %arg9[%c0_52, %c0_53, %c0_54, %c64], %89 {strides = array<i32>} : memref<1x1x5x128xbf16, #tpu.memory_space<vmem>>, vector<1x1x5x32xbf16>,
    %90 = vector.extract_strided_slice %3 {offsets = [0, 96], sizes = [5, 32], strides = [1, 1]} : vector<5x128xbf16> to vector<5x32xbf16>
    %91 = vector.extract_strided_slice %5 {offsets = [0, 96], sizes = [5, 32], strides = [1, 1]} : vector<5x128xbf16> to vector<5x32xbf16>
    %92 = vector.extract_strided_slice %7 {offsets = [0, 96], sizes = [5, 32], strides = [1, 1]} : vector<5x128xbf16> to vector<5x32xbf16>
    %cst_55 = arith.constant dense<0.000000e+00> : vector<5x5xf32>
    %93 = tpu.matmul %90, %91, %cst_55 {dimension_numbers = #tpu.dot_dimension_numbers<[1], [1], [0], [0], [0, 0, 1, 0], [], []>} : vector<5x32xbf16>, vector<5x32xbf16>, vector<5x5xf32> -> vector<5x5xf32>
    %cst_56 = arith.constant 0.176776692 : f32
    %94 = vector.broadcast %cst_56 : f32 to vector<5x5xf32>
    %95 = arith.mulf %93, %94 : vector<5x5xf32>
    %cst_57 = arith.constant dense<0xFF800000> : vector<5xf32>
    %96 = vector.multi_reduction <maximumf>, %95, %cst_57 [1] : vector<5x5xf32> to vector<5xf32>
    %97 = vector.shape_cast %96 : vector<5xf32> to vector<5x1xf32>
    %98 = vector.broadcast %97 : vector<5x1xf32> to vector<5x5xf32>
    %99 = arith.subf %95, %98 : vector<5x5xf32>
    %100 = math.exp %99 : vector<5x5xf32>
    %cst_58 = arith.constant dense<0.000000e+00> : vector<5xf32>
    %101 = vector.multi_reduction <add>, %100, %cst_58 [1] : vector<5x5xf32> to vector<5xf32>
    %102 = vector.shape_cast %101 : vector<5xf32> to vector<5x1xf32>
    %103 = tpu.reciprocal %102 : vector<5x1xf32> -> vector<5x1xf32>
    %104 = vector.broadcast %103 : vector<5x1xf32> to vector<5x5xf32>
    %105 = arith.mulf %100, %104 : vector<5x5xf32>
    %106 = arith.truncf %105 : vector<5x5xf32> to vector<5x5xbf16>
    %cst_59 = arith.constant dense<0.000000e+00> : vector<5x32xf32>
    %107 = tpu.matmul %106, %92, %cst_59 {dimension_numbers = #tpu.dot_dimension_numbers<[1], [0], [0], [1], [0, 0, 1, 1], [], []>} : vector<5x5xbf16>, vector<5x32xbf16>, vector<5x32xf32> -> vector<5x32xf32>
    %108 = arith.truncf %107 : vector<5x32xf32> to vector<5x32xbf16>
    %c0_60 = arith.constant 0 : index
    %c0_61 = arith.constant 0 : index
    %c0_62 = arith.constant 0 : index
    %c96 = arith.constant 96 : index
    %109 = vector.load %arg9[%c0_60, %c0_61, %c0_62, %c96] : memref<1x1x5x128xbf16, #tpu.memory_space<vmem>>, vector<1x1x5x32xbf16>
    %110 = vector.shape_cast %109 : vector<1x1x5x32xbf16> to vector<5x32xbf16>
    %111 = vector.shape_cast %108 : vector<5x32xbf16> to vector<1x1x5x32xbf16>
    tpu.vector_store %arg9[%c0_60, %c0_61, %c0_62, %c96], %111 {strides = array<i32>} : memref<1x1x5x128xbf16, #tpu.memory_space<vmem>>, vector<1x1x5x32xbf16>,
    return
  }
  func.func @transform_0(%arg0: i32, %arg1: i32) -> (i32, i32, i32, i32) {
    %c0_i32 = arith.constant 0 : i32
    %c0_i32_0 = arith.constant 0 : i32
    %c0_i32_1 = arith.constant 0 : i32
    return %arg0, %arg1, %c0_i32, %c0_i32_0 : i32, i32, i32, i32
  }
  func.func @transform_1(%arg0: i32, %arg1: i32) -> (i32, i32, i32, i32) {
    %c0_i32 = arith.constant 0 : i32
    %c1_i32 = arith.constant 1 : i32
    %c0_i32_0 = arith.constant 0 : i32
    return %arg0, %arg1, %c0_i32, %c1_i32 : i32, i32, i32, i32
  }
  func.func @transform_2(%arg0: i32, %arg1: i32) -> (i32, i32, i32, i32) {
    %c0_i32 = arith.constant 0 : i32
    %c2_i32 = arith.constant 2 : i32
    %c0_i32_0 = arith.constant 0 : i32
    return %arg0, %arg1, %c0_i32, %c2_i32 : i32, i32, i32, i32
  }
  func.func @transform_3(%arg0: i32, %arg1: i32) -> (i32, i32, i32, i32) {
    %c1_i32 = arith.constant 1 : i32
    %0 = arith.subi %arg1, %c1_i32 : i32
    %c0_i32 = arith.constant 0 : i32
    %1 = arith.maxsi %0, %c0_i32 : i32
    %c0_i32_0 = arith.constant 0 : i32
    %c0_i32_1 = arith.constant 0 : i32
    %c0_i32_2 = arith.constant 0 : i32
    return %arg0, %1, %c0_i32_0, %c0_i32_1 : i32, i32, i32, i32
  }
  func.func @transform_4(%arg0: i32, %arg1: i32) -> (i32, i32, i32, i32) {
    %c1_i32 = arith.constant 1 : i32
    %0 = arith.subi %arg1, %c1_i32 : i32
    %c0_i32 = arith.constant 0 : i32
    %1 = arith.maxsi %0, %c0_i32 : i32
    %c0_i32_0 = arith.constant 0 : i32
    %c0_i32_1 = arith.constant 0 : i32
    %c0_i32_2 = arith.constant 0 : i32
    return %arg0, %1, %c0_i32_0, %c0_i32_1 : i32, i32, i32, i32
  }
  func.func @transform_5(%arg0: i32, %arg1: i32) -> (i32, i32, i32, i32) {
    %c1_i32 = arith.constant 1 : i32
    %0 = arith.addi %arg1, %c1_i32 : i32
    %c3_i32 = arith.constant 3 : i32
    %1 = arith.minsi %0, %c3_i32 : i32
    %c0_i32 = arith.constant 0 : i32
    %c0_i32_0 = arith.constant 0 : i32
    %c0_i32_1 = arith.constant 0 : i32
    return %arg0, %1, %c0_i32, %c0_i32_0 : i32, i32, i32, i32
  }
  func.func @transform_6(%arg0: i32, %arg1: i32) -> (i32, i32, i32, i32) {
    %c1_i32 = arith.constant 1 : i32
    %0 = arith.addi %arg1, %c1_i32 : i32
    %c3_i32 = arith.constant 3 : i32
    %1 = arith.minsi %0, %c3_i32 : i32
    %c0_i32 = arith.constant 0 : i32
    %c0_i32_0 = arith.constant 0 : i32
    %c0_i32_1 = arith.constant 0 : i32
    return %arg0, %1, %c0_i32, %c0_i32_0 : i32, i32, i32, i32
  }
  func.func @transform_7(%arg0: i32, %arg1: i32) -> (i32, i32, i32, i32) {
    %c0_i32 = arith.constant 0 : i32
    %c0_i32_0 = arith.constant 0 : i32
    %c0_i32_1 = arith.constant 0 : i32
    return %arg0, %arg1, %c0_i32, %c0_i32_0 : i32, i32, i32, i32
  }
}

module attributes {stable_mosaic.version = 11 : i64} {
  func.func @_linear_kernel_noacc(%arg0: i32, %arg1: i32, %arg2: memref<40x128xbf16, #tpu.memory_space<vmem>>, %arg3: memref<128x128xbf16, #tpu.memory_space<vmem>>, %arg4: memref<1x128xf32, #tpu.memory_space<vmem>>, %arg5: memref<40x128xbf16, #tpu.memory_space<vmem>>) attributes {dimension_semantics = [#tpu.dimension_semantics<parallel>, #tpu.dimension_semantics<parallel>], iteration_bounds = array<i64: 1, 1>, scalar_prefetch = 0 : i64, scratch_operands = 0 : i64, tpu.core_type = #tpu.core_type<tc>, window_params = [{transform_indices = @transform_0, window_bounds = array<i64: 40, 128>}, {transform_indices = @transform_1, window_bounds = array<i64: 128, 128>}, {transform_indices = @transform_2, window_bounds = array<i64: 1, 128>}, {transform_indices = @transform_3, window_bounds = array<i64: 40, 128>}]} {
    %c0 = arith.constant 0 : index
    %c0_0 = arith.constant 0 : index
    %0 = vector.load %arg2[%c0, %c0_0] : memref<40x128xbf16, #tpu.memory_space<vmem>>, vector<40x128xbf16>
    %c0_1 = arith.constant 0 : index
    %c0_2 = arith.constant 0 : index
    %1 = vector.load %arg3[%c0_1, %c0_2] : memref<128x128xbf16, #tpu.memory_space<vmem>>, vector<128x128xbf16>
    %cst = arith.constant dense<0.000000e+00> : vector<40x128xf32>
    %2 = tpu.matmul %0, %1, %cst {dimension_numbers = #tpu.dot_dimension_numbers<[1], [0], [0], [1], [0, 0, 1, 1], [], []>} : vector<40x128xbf16>, vector<128x128xbf16>, vector<40x128xf32> -> vector<40x128xf32>
    %c0_3 = arith.constant 0 : index
    %c0_4 = arith.constant 0 : index
    %3 = vector.load %arg4[%c0_3, %c0_4] : memref<1x128xf32, #tpu.memory_space<vmem>>, vector<1x128xf32>
    %4 = vector.broadcast %3 : vector<1x128xf32> to vector<40x128xf32>
    %5 = arith.addf %2, %4 : vector<40x128xf32>
    %6 = arith.truncf %5 : vector<40x128xf32> to vector<40x128xbf16>
    %c0_5 = arith.constant 0 : index
    %c0_6 = arith.constant 0 : index
    %7 = vector.load %arg5[%c0_5, %c0_6] : memref<40x128xbf16, #tpu.memory_space<vmem>>, vector<40x128xbf16>
    tpu.vector_store %arg5[%c0_5, %c0_6], %6 {strides = array<i32>} : memref<40x128xbf16, #tpu.memory_space<vmem>>, vector<40x128xbf16>,
    return
  }
  func.func @transform_0(%arg0: i32, %arg1: i32) -> (i32, i32) {
    %c0_i32 = arith.constant 0 : i32
    %c0_i32_0 = arith.constant 0 : i32
    return %arg1, %c0_i32 : i32, i32
  }
  func.func @transform_1(%arg0: i32, %arg1: i32) -> (i32, i32) {
    %c0_i32 = arith.constant 0 : i32
    %c0_i32_0 = arith.constant 0 : i32
    return %c0_i32, %arg0 : i32, i32
  }
  func.func @transform_2(%arg0: i32, %arg1: i32) -> (i32, i32) {
    %c0_i32 = arith.constant 0 : i32
    %c0_i32_0 = arith.constant 0 : i32
    return %c0_i32, %arg0 : i32, i32
  }
  func.func @transform_3(%arg0: i32, %arg1: i32) -> (i32, i32) {
    %c0_i32 = arith.constant 0 : i32
    return %arg1, %arg0 : i32, i32
  }
}

module attributes {stable_mosaic.version = 11 : i64} {
  func.func @_adapter_kernel(%arg0: i32, %arg1: memref<40x128xbf16, #tpu.memory_space<vmem>>, %arg2: memref<40x128xbf16, #tpu.memory_space<vmem>>, %arg3: memref<128x32xbf16, #tpu.memory_space<vmem>>, %arg4: memref<1x32xf32, #tpu.memory_space<vmem>>, %arg5: memref<32x128xbf16, #tpu.memory_space<vmem>>, %arg6: memref<1x128xf32, #tpu.memory_space<vmem>>, %arg7: memref<40x128xbf16, #tpu.memory_space<vmem>>) attributes {dimension_semantics = [#tpu.dimension_semantics<parallel>], iteration_bounds = array<i64: 1>, scalar_prefetch = 0 : i64, scratch_operands = 0 : i64, tpu.core_type = #tpu.core_type<tc>, window_params = [{transform_indices = @transform_0, window_bounds = array<i64: 40, 128>}, {transform_indices = @transform_1, window_bounds = array<i64: 40, 128>}, {pipeline_mode = #tpu.pipeline_mode<synchronous>, transform_indices = @transform_2, window_bounds = array<i64: 128, 32>}, {pipeline_mode = #tpu.pipeline_mode<synchronous>, transform_indices = @transform_3, window_bounds = array<i64: 1, 32>}, {pipeline_mode = #tpu.pipeline_mode<synchronous>, transform_indices = @transform_4, window_bounds = array<i64: 32, 128>}, {pipeline_mode = #tpu.pipeline_mode<synchronous>, transform_indices = @transform_5, window_bounds = array<i64: 1, 128>}, {transform_indices = @transform_6, window_bounds = array<i64: 40, 128>}]} {
    %c0 = arith.constant 0 : index
    %c0_0 = arith.constant 0 : index
    %0 = vector.load %arg1[%c0, %c0_0] : memref<40x128xbf16, #tpu.memory_space<vmem>>, vector<40x128xbf16>
    %1 = arith.extf %0 : vector<40x128xbf16> to vector<40x128xf32>
    %2 = arith.truncf %1 : vector<40x128xf32> to vector<40x128xbf16>
    %c0_1 = arith.constant 0 : index
    %c0_2 = arith.constant 0 : index
    %3 = vector.load %arg3[%c0_1, %c0_2] : memref<128x32xbf16, #tpu.memory_space<vmem>>, vector<128x32xbf16>
    %cst = arith.constant dense<0.000000e+00> : vector<40x32xf32>
    %4 = tpu.matmul %2, %3, %cst {dimension_numbers = #tpu.dot_dimension_numbers<[1], [0], [0], [1], [0, 0, 1, 1], [], []>} : vector<40x128xbf16>, vector<128x32xbf16>, vector<40x32xf32> -> vector<40x32xf32>
    %c0_3 = arith.constant 0 : index
    %c0_4 = arith.constant 0 : index
    %5 = vector.load %arg4[%c0_3, %c0_4] : memref<1x32xf32, #tpu.memory_space<vmem>>, vector<1x32xf32>
    %6 = vector.broadcast %5 : vector<1x32xf32> to vector<40x32xf32>
    %7 = arith.addf %4, %6 : vector<40x32xf32>
    %8 = arith.truncf %7 : vector<40x32xf32> to vector<40x32xbf16>
    %c0_5 = arith.constant 0 : index
    %c0_6 = arith.constant 0 : index
    %9 = vector.load %arg5[%c0_5, %c0_6] : memref<32x128xbf16, #tpu.memory_space<vmem>>, vector<32x128xbf16>
    %cst_7 = arith.constant dense<0.000000e+00> : vector<40x128xf32>
    %10 = tpu.matmul %8, %9, %cst_7 {dimension_numbers = #tpu.dot_dimension_numbers<[1], [0], [0], [1], [0, 0, 1, 1], [], []>} : vector<40x32xbf16>, vector<32x128xbf16>, vector<40x128xf32> -> vector<40x128xf32>
    %c0_8 = arith.constant 0 : index
    %c0_9 = arith.constant 0 : index
    %11 = vector.load %arg6[%c0_8, %c0_9] : memref<1x128xf32, #tpu.memory_space<vmem>>, vector<1x128xf32>
    %12 = vector.broadcast %11 : vector<1x128xf32> to vector<40x128xf32>
    %13 = arith.addf %10, %12 : vector<40x128xf32>
    %cst_10 = arith.constant 5.000000e-01 : f32
    %14 = vector.broadcast %cst_10 : f32 to vector<40x128xf32>
    %15 = arith.mulf %14, %13 : vector<40x128xf32>
    %16 = arith.addf %1, %15 : vector<40x128xf32>
    %c0_11 = arith.constant 0 : index
    %c0_12 = arith.constant 0 : index
    %17 = vector.load %arg2[%c0_11, %c0_12] : memref<40x128xbf16, #tpu.memory_space<vmem>>, vector<40x128xbf16>
    %18 = arith.extf %17 : vector<40x128xbf16> to vector<40x128xf32>
    %19 = arith.addf %16, %18 : vector<40x128xf32>
    %20 = arith.truncf %19 : vector<40x128xf32> to vector<40x128xbf16>
    %c0_13 = arith.constant 0 : index
    %c0_14 = arith.constant 0 : index
    %21 = vector.load %arg7[%c0_13, %c0_14] : memref<40x128xbf16, #tpu.memory_space<vmem>>, vector<40x128xbf16>
    tpu.vector_store %arg7[%c0_13, %c0_14], %20 {strides = array<i32>} : memref<40x128xbf16, #tpu.memory_space<vmem>>, vector<40x128xbf16>,
    return
  }
  func.func @transform_0(%arg0: i32) -> (i32, i32) {
    %c0_i32 = arith.constant 0 : i32
    %c0_i32_0 = arith.constant 0 : i32
    return %arg0, %c0_i32 : i32, i32
  }
  func.func @transform_1(%arg0: i32) -> (i32, i32) {
    %c0_i32 = arith.constant 0 : i32
    %c0_i32_0 = arith.constant 0 : i32
    return %arg0, %c0_i32 : i32, i32
  }
  func.func @transform_2(%arg0: i32) -> (i32, i32) {
    %c0_i32 = arith.constant 0 : i32
    %c0_i32_0 = arith.constant 0 : i32
    %c0_i32_1 = arith.constant 0 : i32
    return %c0_i32, %c0_i32_0 : i32, i32
  }
  func.func @transform_3(%arg0: i32) -> (i32, i32) {
    %c0_i32 = arith.constant 0 : i32
    %c0_i32_0 = arith.constant 0 : i32
    %c0_i32_1 = arith.constant 0 : i32
    return %c0_i32, %c0_i32_0 : i32, i32
  }
  func.func @transform_4(%arg0: i32) -> (i32, i32) {
    %c0_i32 = arith.constant 0 : i32
    %c0_i32_0 = arith.constant 0 : i32
    %c0_i32_1 = arith.constant 0 : i32
    return %c0_i32, %c0_i32_0 : i32, i32
  }
  func.func @transform_5(%arg0: i32) -> (i32, i32) {
    %c0_i32 = arith.constant 0 : i32
    %c0_i32_0 = arith.constant 0 : i32
    %c0_i32_1 = arith.constant 0 : i32
    return %c0_i32, %c0_i32_0 : i32, i32
  }
  func.func @transform_6(%arg0: i32) -> (i32, i32) {
    %c0_i32 = arith.constant 0 : i32
    %c0_i32_0 = arith.constant 0 : i32
    return %arg0, %c0_i32 : i32, i32
  }
}

module attributes {stable_mosaic.version = 11 : i64} {
  func.func @_mlp_kernel(%arg0: i32, %arg1: memref<40x128xbf16, #tpu.memory_space<vmem>>, %arg2: memref<40x128xbf16, #tpu.memory_space<vmem>>, %arg3: memref<128x512xbf16, #tpu.memory_space<vmem>>, %arg4: memref<1x512xf32, #tpu.memory_space<vmem>>, %arg5: memref<512x128xbf16, #tpu.memory_space<vmem>>, %arg6: memref<1x128xf32, #tpu.memory_space<vmem>>, %arg7: memref<40x128xbf16, #tpu.memory_space<vmem>>) attributes {dimension_semantics = [#tpu.dimension_semantics<parallel>], iteration_bounds = array<i64: 1>, scalar_prefetch = 0 : i64, scratch_operands = 0 : i64, tpu.core_type = #tpu.core_type<tc>, window_params = [{transform_indices = @transform_0, window_bounds = array<i64: 40, 128>}, {transform_indices = @transform_1, window_bounds = array<i64: 40, 128>}, {pipeline_mode = #tpu.pipeline_mode<synchronous>, transform_indices = @transform_2, window_bounds = array<i64: 128, 512>}, {pipeline_mode = #tpu.pipeline_mode<synchronous>, transform_indices = @transform_3, window_bounds = array<i64: 1, 512>}, {pipeline_mode = #tpu.pipeline_mode<synchronous>, transform_indices = @transform_4, window_bounds = array<i64: 512, 128>}, {pipeline_mode = #tpu.pipeline_mode<synchronous>, transform_indices = @transform_5, window_bounds = array<i64: 1, 128>}, {transform_indices = @transform_6, window_bounds = array<i64: 40, 128>}]} {
    %c0 = arith.constant 0 : index
    %c0_0 = arith.constant 0 : index
    %0 = vector.load %arg1[%c0, %c0_0] : memref<40x128xbf16, #tpu.memory_space<vmem>>, vector<40x128xbf16>
    %c0_1 = arith.constant 0 : index
    %c0_2 = arith.constant 0 : index
    %1 = vector.load %arg3[%c0_1, %c0_2] : memref<128x512xbf16, #tpu.memory_space<vmem>>, vector<128x512xbf16>
    %cst = arith.constant dense<0.000000e+00> : vector<40x512xf32>
    %2 = tpu.matmul %0, %1, %cst {dimension_numbers = #tpu.dot_dimension_numbers<[1], [0], [0], [1], [0, 0, 1, 1], [], []>} : vector<40x128xbf16>, vector<128x512xbf16>, vector<40x512xf32> -> vector<40x512xf32>
    %c0_3 = arith.constant 0 : index
    %c0_4 = arith.constant 0 : index
    %3 = vector.load %arg4[%c0_3, %c0_4] : memref<1x512xf32, #tpu.memory_space<vmem>>, vector<1x512xf32>
    %4 = vector.broadcast %3 : vector<1x512xf32> to vector<40x512xf32>
    %5 = arith.addf %2, %4 : vector<40x512xf32>
    %cst_5 = arith.constant 1.702000e+00 : f32
    %6 = vector.broadcast %cst_5 : f32 to vector<40x512xf32>
    %7 = arith.mulf %6, %5 : vector<40x512xf32>
    %8 = arith.negf %7 : vector<40x512xf32>
    %9 = math.exp %8 : vector<40x512xf32>
    %cst_6 = arith.constant 1.000000e+00 : f32
    %10 = vector.broadcast %cst_6 : f32 to vector<40x512xf32>
    %11 = arith.addf %10, %9 : vector<40x512xf32>
    %12 = arith.divf %10, %11 : vector<40x512xf32>
    %13 = arith.mulf %5, %12 : vector<40x512xf32>
    %14 = arith.truncf %13 : vector<40x512xf32> to vector<40x512xbf16>
    %c0_7 = arith.constant 0 : index
    %c0_8 = arith.constant 0 : index
    %15 = vector.load %arg5[%c0_7, %c0_8] : memref<512x128xbf16, #tpu.memory_space<vmem>>, vector<512x128xbf16>
    %cst_9 = arith.constant dense<0.000000e+00> : vector<40x128xf32>
    %16 = tpu.matmul %14, %15, %cst_9 {dimension_numbers = #tpu.dot_dimension_numbers<[1], [0], [0], [1], [0, 0, 1, 1], [], []>} : vector<40x512xbf16>, vector<512x128xbf16>, vector<40x128xf32> -> vector<40x128xf32>
    %c0_10 = arith.constant 0 : index
    %c0_11 = arith.constant 0 : index
    %17 = vector.load %arg6[%c0_10, %c0_11] : memref<1x128xf32, #tpu.memory_space<vmem>>, vector<1x128xf32>
    %18 = vector.broadcast %17 : vector<1x128xf32> to vector<40x128xf32>
    %19 = arith.addf %16, %18 : vector<40x128xf32>
    %c0_12 = arith.constant 0 : index
    %c0_13 = arith.constant 0 : index
    %20 = vector.load %arg2[%c0_12, %c0_13] : memref<40x128xbf16, #tpu.memory_space<vmem>>, vector<40x128xbf16>
    %21 = arith.extf %20 : vector<40x128xbf16> to vector<40x128xf32>
    %22 = arith.addf %19, %21 : vector<40x128xf32>
    %23 = arith.truncf %22 : vector<40x128xf32> to vector<40x128xbf16>
    %c0_14 = arith.constant 0 : index
    %c0_15 = arith.constant 0 : index
    %24 = vector.load %arg7[%c0_14, %c0_15] : memref<40x128xbf16, #tpu.memory_space<vmem>>, vector<40x128xbf16>
    tpu.vector_store %arg7[%c0_14, %c0_15], %23 {strides = array<i32>} : memref<40x128xbf16, #tpu.memory_space<vmem>>, vector<40x128xbf16>,
    return
  }
  func.func @transform_0(%arg0: i32) -> (i32, i32) {
    %c0_i32 = arith.constant 0 : i32
    %c0_i32_0 = arith.constant 0 : i32
    return %arg0, %c0_i32 : i32, i32
  }
  func.func @transform_1(%arg0: i32) -> (i32, i32) {
    %c0_i32 = arith.constant 0 : i32
    %c0_i32_0 = arith.constant 0 : i32
    return %arg0, %c0_i32 : i32, i32
  }
  func.func @transform_2(%arg0: i32) -> (i32, i32) {
    %c0_i32 = arith.constant 0 : i32
    %c0_i32_0 = arith.constant 0 : i32
    %c0_i32_1 = arith.constant 0 : i32
    return %c0_i32, %c0_i32_0 : i32, i32
  }
  func.func @transform_3(%arg0: i32) -> (i32, i32) {
    %c0_i32 = arith.constant 0 : i32
    %c0_i32_0 = arith.constant 0 : i32
    %c0_i32_1 = arith.constant 0 : i32
    return %c0_i32, %c0_i32_0 : i32, i32
  }
  func.func @transform_4(%arg0: i32) -> (i32, i32) {
    %c0_i32 = arith.constant 0 : i32
    %c0_i32_0 = arith.constant 0 : i32
    %c0_i32_1 = arith.constant 0 : i32
    return %c0_i32, %c0_i32_0 : i32, i32
  }
  func.func @transform_5(%arg0: i32) -> (i32, i32) {
    %c0_i32 = arith.constant 0 : i32
    %c0_i32_0 = arith.constant 0 : i32
    %c0_i32_1 = arith.constant 0 : i32
    return %c0_i32, %c0_i32_0 : i32, i32
  }
  func.func @transform_6(%arg0: i32) -> (i32, i32) {
    %c0_i32 = arith.constant 0 : i32
    %c0_i32_0 = arith.constant 0 : i32
    return %arg0, %c0_i32 : i32, i32
  }
}

module attributes {stable_mosaic.version = 11 : i64} {
  func.func @_layernorm_kernel(%arg0: i32, %arg1: memref<8x128xbf16, #tpu.memory_space<vmem>>, %arg2: memref<1x128xf32, #tpu.memory_space<vmem>>, %arg3: memref<1x128xf32, #tpu.memory_space<vmem>>, %arg4: memref<8x128xf32, #tpu.memory_space<vmem>>) attributes {dimension_semantics = [#tpu.dimension_semantics<parallel>], iteration_bounds = array<i64: 1>, scalar_prefetch = 0 : i64, scratch_operands = 0 : i64, tpu.core_type = #tpu.core_type<tc>, window_params = [{transform_indices = @transform_0, window_bounds = array<i64: 8, 128>}, {pipeline_mode = #tpu.pipeline_mode<synchronous>, transform_indices = @transform_1, window_bounds = array<i64: 1, 128>}, {pipeline_mode = #tpu.pipeline_mode<synchronous>, transform_indices = @transform_2, window_bounds = array<i64: 1, 128>}, {transform_indices = @transform_3, window_bounds = array<i64: 8, 128>}]} {
    %c0 = arith.constant 0 : index
    %c0_0 = arith.constant 0 : index
    %0 = vector.load %arg1[%c0, %c0_0] : memref<8x128xbf16, #tpu.memory_space<vmem>>, vector<8x128xbf16>
    %1 = arith.extf %0 : vector<8x128xbf16> to vector<8x128xf32>
    %cst = arith.constant dense<0.000000e+00> : vector<8xf32>
    %2 = vector.multi_reduction <add>, %1, %cst [1] : vector<8x128xf32> to vector<8xf32>
    %3 = vector.shape_cast %2 : vector<8xf32> to vector<8x1xf32>
    %cst_1 = arith.constant 1.280000e+02 : f32
    %4 = vector.broadcast %cst_1 : f32 to vector<8x1xf32>
    %5 = arith.divf %3, %4 : vector<8x1xf32>
    %6 = vector.broadcast %5 : vector<8x1xf32> to vector<8x128xf32>
    %7 = arith.subf %1, %6 : vector<8x128xf32>
    %8 = arith.mulf %7, %7 : vector<8x128xf32>
    %cst_2 = arith.constant dense<0.000000e+00> : vector<8xf32>
    %9 = vector.multi_reduction <add>, %8, %cst_2 [1] : vector<8x128xf32> to vector<8xf32>
    %10 = vector.shape_cast %9 : vector<8xf32> to vector<8x1xf32>
    %cst_3 = arith.constant 1.280000e+02 : f32
    %11 = vector.broadcast %cst_3 : f32 to vector<8x1xf32>
    %12 = arith.divf %10, %11 : vector<8x1xf32>
    %13 = vector.broadcast %5 : vector<8x1xf32> to vector<8x128xf32>
    %14 = arith.subf %1, %13 : vector<8x128xf32>
    %cst_4 = arith.constant 9.99999974E-6 : f32
    %15 = vector.broadcast %cst_4 : f32 to vector<8x1xf32>
    %16 = arith.addf %12, %15 : vector<8x1xf32>
    %17 = math.rsqrt %16 : vector<8x1xf32>
    %18 = vector.broadcast %17 : vector<8x1xf32> to vector<8x128xf32>
    %19 = arith.mulf %14, %18 : vector<8x128xf32>
    %c0_5 = arith.constant 0 : index
    %c0_6 = arith.constant 0 : index
    %20 = vector.load %arg2[%c0_5, %c0_6] : memref<1x128xf32, #tpu.memory_space<vmem>>, vector<1x128xf32>
    %21 = vector.broadcast %20 : vector<1x128xf32> to vector<8x128xf32>
    %22 = arith.mulf %19, %21 : vector<8x128xf32>
    %c0_7 = arith.constant 0 : index
    %c0_8 = arith.constant 0 : index
    %23 = vector.load %arg3[%c0_7, %c0_8] : memref<1x128xf32, #tpu.memory_space<vmem>>, vector<1x128xf32>
    %24 = vector.broadcast %23 : vector<1x128xf32> to vector<8x128xf32>
    %25 = arith.addf %22, %24 : vector<8x128xf32>
    %c0_9 = arith.constant 0 : index
    %c0_10 = arith.constant 0 : index
    %26 = vector.load %arg4[%c0_9, %c0_10] : memref<8x128xf32, #tpu.memory_space<vmem>>, vector<8x128xf32>
    tpu.vector_store %arg4[%c0_9, %c0_10], %25 {strides = array<i32>} : memref<8x128xf32, #tpu.memory_space<vmem>>, vector<8x128xf32>,
    return
  }
  func.func @transform_0(%arg0: i32) -> (i32, i32) {
    %c0_i32 = arith.constant 0 : i32
    %c0_i32_0 = arith.constant 0 : i32
    return %arg0, %c0_i32 : i32, i32
  }
  func.func @transform_1(%arg0: i32) -> (i32, i32) {
    %c0_i32 = arith.constant 0 : i32
    %c0_i32_0 = arith.constant 0 : i32
    %c0_i32_1 = arith.constant 0 : i32
    return %c0_i32, %c0_i32_0 : i32, i32
  }
  func.func @transform_2(%arg0: i32) -> (i32, i32) {
    %c0_i32 = arith.constant 0 : i32
    %c0_i32_0 = arith.constant 0 : i32
    %c0_i32_1 = arith.constant 0 : i32
    return %c0_i32, %c0_i32_0 : i32, i32
  }
  func.func @transform_3(%arg0: i32) -> (i32, i32) {
    %c0_i32 = arith.constant 0 : i32
    %c0_i32_0 = arith.constant 0 : i32
    return %arg0, %c0_i32 : i32, i32
  }
}

</mosaic_0001>

<llo_original>
// kernel: vit_zero_clip_long_forward.17
$region0: #{vit_zero_clip_long_forward.17}
  #allocation0 [shape = 'u32[]', space=smem, size = 0x4, offset = 0x4, fixed_abs, tag = 'smem constant byte address 0x4 - core index']
  #allocation1 [shape = 'u32[144,128]{1,0:T(1,128)}', space=vmem, size = 0x12000, scoped, tag = 'internal scratch']
  %s0 = inlined_call_operand.vmem [shape: bf16[32,192], index: 0, kind: input, shape index: {}]
  %s1 = inlined_call_operand.vmem [shape: bf16[192,128], index: 1, kind: input, shape index: {}]
  %s2 = inlined_call_operand.vmem [shape: f32[1,128], index: 2, kind: input, shape index: {}]
  %s3 = inlined_call_operand.vmem [shape: bf16[32,128], index: 3, kind: output, shape index: {}]
  %s4 = sld [smem:[#allocation0]]
  $region22: #{vit_zero_clip_long_forward.17} parent=0
    _
  %s6 = ssub.s32 1, %s4
  %s7 = scalar_select 0, %s6, %s4
  // Predicated region
  $region2: #{vit_zero_clip_long_forward.17} parent=0 // pred_check
    _
  $region3: #{vit_zero_clip_long_forward.17} parent=0 // pred_check_branch
    %9 = sbr.rel (0) target = $region5
  $region4: #{vit_zero_clip_long_forward.17} parent=0 // pred_region
    _
  $region5: #{vit_zero_clip_long_forward.17} parent=0 // pred_fallthru
    _
  // Predicated region
  $region6: #{vit_zero_clip_long_forward.17} parent=0 // pred_check
    _
  $region7: #{vit_zero_clip_long_forward.17} parent=0 // pred_check_branch
    %11 = sbr.rel (0) target = $region9
  $region8: #{vit_zero_clip_long_forward.17} parent=0 // pred_region
    _
  $region9: #{vit_zero_clip_long_forward.17} parent=0 // pred_fallthru
    _
  // Predicated region
  $region10: #{vit_zero_clip_long_forward.17} parent=0 // pred_check
    _
  $region11: #{vit_zero_clip_long_forward.17} parent=0 // pred_check_branch
    %13 = sbr.rel (0) target = $region13
  $region12: #{vit_zero_clip_long_forward.17} parent=0 // pred_region
    _
  $region13: #{vit_zero_clip_long_forward.17} parent=0 // pred_fallthru
    _
  %v15 = vld [vmem:[%s0] sm:$0xff]
  %v16 = vld [vmem:[%s0 + $0x8] sm:$0xff]
  %v17 = vld [vmem:[%s0 + $0x10] sm:$0xff]
  %v18 = vld [vmem:[%s0 + $0x18] sm:$0xff]
  %v19 = vld [vmem:[%s1] sm:$0xf]
  %v20 = vld [vmem:[%s1 + $0x4] sm:$0xf]
  %v21 = vld [vmem:[%s1 + $0x8] sm:$0xf]
  %v22 = vld [vmem:[%s1 + $0xc] sm:$0xf]
  %v23 = vld [vmem:[%s1 + $0x10] sm:$0xf]
  %v24 = vld [vmem:[%s1 + $0x14] sm:$0xf]
  %v25 = vld [vmem:[%s1 + $0x18] sm:$0xf]
  %v26 = vld [vmem:[%s1 + $0x1c] sm:$0xf]
  %v27 = vld [vmem:[%s1 + $0x20] sm:$0xf]
  %v28 = vld [vmem:[%s1 + $0x24] sm:$0xf]
  %v29 = vld [vmem:[%s1 + $0x28] sm:$0xf]
  %v30 = vld [vmem:[%s1 + $0x2c] sm:$0xf]
  %v31 = vld [vmem:[%s1 + $0x30] sm:$0xf]
  %v32 = vld [vmem:[%s1 + $0x34] sm:$0xf]
  %v33 = vld [vmem:[%s1 + $0x38] sm:$0xf]
  %v34 = vld [vmem:[%s1 + $0x3c] sm:$0xf]
  %v35 = vld [vmem:[%s1 + $0x40] sm:$0xf]
  %v36 = vld [vmem:[%s1 + $0x44] sm:$0xf]
  %v37 = vld [vmem:[%s1 + $0x48] sm:$0xf]
  %v38 = vld [vmem:[%s1 + $0x4c] sm:$0xf]
  %v39 = vld [vmem:[%s1 + $0x50] sm:$0xf]
  %v40 = vld [vmem:[%s1 + $0x54] sm:$0xf]
  %v41 = vld [vmem:[%s1 + $0x58] sm:$0xf]
  %v42 = vld [vmem:[%s1 + $0x5c] sm:$0xf]
  %v43 = vld [vmem:[%s2] sm:$0x1]
  %v45 = vlaneseq
  %v46 = vshrl.u32 %v45, 7
  %v47 = vsub.s32 0, %v46
  %v48 = vrot.slane %v43, %v47
  %v54 = vunpack.c.l.b16 %v15
  %v55 = vunpack.c.h.b16 %v15
  %v56 = vunpack.c.l.b16 %v16
  %v57 = vunpack.c.h.b16 %v16
  %v58 = vunpack.c.l.b16 %v17
  %v59 = vunpack.c.h.b16 %v17
  %v60 = vunpack.c.l.b16 %v18
  %v61 = vunpack.c.h.b16 %v18
  %v62 = vpack.c.b16 %v56, %v54
  %v63 = vpack.c.b16 %v57, %v55
  %v64 = vpack.c.b16 %v60, %v58
  %v65 = vpack.c.b16 %v61, %v59
  %v92 = vunpack.c.l.b16 %v19
  %v93 = vunpack.c.l.b16 %v20
  %v94 = vunpack.c.l.b16 %v21
  %v95 = vunpack.c.l.b16 %v22
  %v96 = vunpack.c.l.b16 %v23
  %v97 = vunpack.c.l.b16 %v24
  %v98 = vunpack.c.l.b16 %v25
  %v99 = vunpack.c.l.b16 %v26
  %v100 = vunpack.c.l.b16 %v27
  %v101 = vunpack.c.l.b16 %v28
  %v102 = vunpack.c.l.b16 %v29
  %v103 = vunpack.c.l.b16 %v30
  %v104 = vunpack.c.l.b16 %v31
  %v105 = vunpack.c.l.b16 %v32
  %v106 = vunpack.c.l.b16 %v33
  %v107 = vunpack.c.l.b16 %v34
  %v108 = vunpack.c.l.b16 %v35
  %v109 = vunpack.c.l.b16 %v36
  %v110 = vunpack.c.l.b16 %v37
  %v111 = vunpack.c.l.b16 %v38
  %v112 = vunpack.c.l.b16 %v39
  %v113 = vunpack.c.l.b16 %v40
  %v114 = vunpack.c.l.b16 %v41
  %v115 = vunpack.c.l.b16 %v42
  %v116 = vpack.c.b16 %v93, %v92
  %v117 = vpack.c.b16 %v95, %v94
  %v118 = vpack.c.b16 %v97, %v96
  %v119 = vpack.c.b16 %v99, %v98
  %v120 = vpack.c.b16 %v101, %v100
  %v121 = vpack.c.b16 %v103, %v102
  %v122 = vpack.c.b16 %v105, %v104
  %v123 = vpack.c.b16 %v107, %v106
  %v124 = vpack.c.b16 %v109, %v108
  %v125 = vpack.c.b16 %v111, %v110
  %v126 = vpack.c.b16 %v113, %v112
  %v127 = vpack.c.b16 %v115, %v114
  %vm140 = vcmask 523264
  %v142 = vsel %vm140, %v63, 0
  %v145 = vsel %vm140, %v65, 0
  %147 = vmatprep.subr.bf16.mxu0 0
  %148 = vmatpush1.bf16.msra.mxu0 %v116
  %149 = vmatprep.subr.bf16.mxu0 0
  %150 = vmatpush1.bf16.msra.mxu0 %v117
  %151 = vmatprep.subr.bf16.mxu0 0
  %152 = vmatpush1.bf16.msra.mxu0 %v118
  %153 = vmatprep.subr.bf16.mxu0 0
  %154 = vmatpush1.bf16.msra.mxu0 %v119
  %155 = vmatprep.subr.bf16.mxu0 0
  %156 = vmatpush1.bf16.msra.mxu0 %v120
  %157 = vmatprep.subr.bf16.mxu0 0
  %158 = vmatpush1.bf16.msra.mxu0 %v121
  %159 = vmatprep.subr.bf16.mxu0 0
  %160 = vmatpush1.bf16.msra.mxu0 %v122
  %161 = vmatprep.subr.bf16.mxu0 0
  %162 = vmatpush1.bf16.msra.mxu0 %v123
  %163 = vmatprep.subr.bf16.mxu0 0
  %164 = vmatpush1.bf16.msra.mxu0 %v124
  %165 = vmatprep.subr.bf16.mxu0 0
  %166 = vmatpush1.bf16.msra.mxu0 %v125
  %167 = vmatprep.subr.bf16.mxu0 0
  %168 = vmatpush1.bf16.msra.mxu0 %v126
  %169 = vmatprep.subr.bf16.mxu0 0
  %170 = vmatpush1.bf16.msra.mxu0 %v127
  %171 = vmatprep.subr.bf16.mxu0 0
  %172 = vmatpush1.bf16.msra.mxu0 0
  %173 = vmatprep.subr.bf16.mxu0 0
  %174 = vmatpush1.bf16.msra.mxu0 0
  %175 = vmatprep.subr.bf16.mxu0 0
  %176 = vmatpush1.bf16.msra.mxu0 0
  %177 = vmatprep.subr.bf16.mxu0 0
  %178 = vmatpush1.bf16.msra.mxu0 0
  %179 = vmatprep.mubr.bf16.mxu0 %v142
  %180 = vmatmul.mubr.bf16.gmra.mrb[0].mxu0 %v62
  %v181 = vpop.f32.mrb[0].mxu0
  %v182 = vadd.f32 %v48, %v181
  %v183 = vpop.f32.mrb[0].mxu0
  %v184 = vpop.f32.mrb[0].mxu0
  %v185 = vadd.f32 %v48, %v184
  %v186 = vpop.f32.mrb[0].mxu0
  %187 = vmatprep.mubr.bf16.mxu0 %v145
  %188 = vmatmul.mubr.bf16.gmra.mrb[0].mxu0 %v64
  %v189 = vpop.f32.mrb[0].mxu0
  %v190 = vadd.f32 %v48, %v189
  %v191 = vpop.f32.mrb[0].mxu0
  %v192 = vpop.f32.mrb[0].mxu0
  %v193 = vadd.f32 %v48, %v192
  %v194 = vpop.f32.mrb[0].mxu0
  %195 = vdwg.mxu0
  %v196 = vpack.c.bf16 %v185, %v182
  %v197 = vpack.c.bf16 %v193, %v190
  %v200 = vunpack.c.l.b16 %v196
  %v201 = vunpack.c.h.b16 %v196
  %v202 = vunpack.c.l.b16 %v197
  %v203 = vunpack.c.h.b16 %v197
  %v204 = vpack.c.b16 %v200, %v200
  %v205 = vpack.c.b16 %v201, %v201
  %v206 = vpack.c.b16 %v202, %v202
  %v207 = vpack.c.b16 %v203, %v203
  %212 = vst [vmem:[%s3] sm:$0xf] %v204
  %213 = vst [vmem:[%s3 + $0x4] sm:$0xf] %v205
  %214 = vst [vmem:[%s3 + $0x8] sm:$0xf] %v206
  %215 = vst [vmem:[%s3 + $0xc] sm:$0xf] %v207
  // Predicated region
  $region14: #{vit_zero_clip_long_forward.17} parent=0 // pred_check
    _
  $region15: #{vit_zero_clip_long_forward.17} parent=0 // pred_check_branch
    %217 = sbr.rel (0) target = $region17
  $region16: #{vit_zero_clip_long_forward.17} parent=0 // pred_region
    _
  $region17: #{vit_zero_clip_long_forward.17} parent=0 // pred_fallthru
    _
  // Predicated region
  $region18: #{vit_zero_clip_long_forward.17} parent=0 // pred_check
    _
  $region19: #{vit_zero_clip_long_forward.17} parent=0 // pred_check_branch
    %219 = sbr.rel (0) target = $region21
  $region20: #{vit_zero_clip_long_forward.17} parent=0 // pred_region
    _
  $region21: #{vit_zero_clip_long_forward.17} parent=0 // pred_fallthru
    _

// kernel: vit_zero_clip_long_forward.18
$region0: #{vit_zero_clip_long_forward.18}
  #allocation0 [shape = 'u32[]', space=smem, size = 0x4, offset = 0x4, fixed_abs, tag = 'smem constant byte address 0x4 - core index']
  #allocation1 [shape = 'u32[144,128]{1,0:T(1,128)}', space=vmem, size = 0x12000, scoped, tag = 'internal scratch']
  %s0 = inlined_call_operand.vmem [shape: f32[40,128], index: 0, kind: input, shape index: {}]
  %s1 = inlined_call_operand.vmem [shape: f32[1,128], index: 1, kind: input, shape index: {}]
  %s2 = inlined_call_operand.vmem [shape: f32[1,128], index: 2, kind: input, shape index: {}]
  %s3 = inlined_call_operand.vmem [shape: bf16[40,128], index: 3, kind: output, shape index: {}]
  %s4 = sld [smem:[#allocation0]]
  $region22: #{vit_zero_clip_long_forward.18} parent=0
    _
  %s6 = ssub.s32 1, %s4
  %s7 = scalar_select 0, %s6, %s4
  // Predicated region
  $region2: #{vit_zero_clip_long_forward.18} parent=0 // pred_check
    _
  $region3: #{vit_zero_clip_long_forward.18} parent=0 // pred_check_branch
    %9 = sbr.rel (0) target = $region5
  $region4: #{vit_zero_clip_long_forward.18} parent=0 // pred_region
    _
  $region5: #{vit_zero_clip_long_forward.18} parent=0 // pred_fallthru
    _
  // Predicated region
  $region6: #{vit_zero_clip_long_forward.18} parent=0 // pred_check
    _
  $region7: #{vit_zero_clip_long_forward.18} parent=0 // pred_check_branch
    %11 = sbr.rel (0) target = $region9
  $region8: #{vit_zero_clip_long_forward.18} parent=0 // pred_region
    _
  $region9: #{vit_zero_clip_long_forward.18} parent=0 // pred_fallthru
    _
  // Predicated region
  $region10: #{vit_zero_clip_long_forward.18} parent=0 // pred_check
    _
  $region11: #{vit_zero_clip_long_forward.18} parent=0 // pred_check_branch
    %13 = sbr.rel (0) target = $region13
  $region12: #{vit_zero_clip_long_forward.18} parent=0 // pred_region
    _
  $region13: #{vit_zero_clip_long_forward.18} parent=0 // pred_fallthru
    _
  %v14 = vld [vmem:[%s0] sm:$0xff]
  %v15 = vld [vmem:[%s0 + $0x8] sm:$0xff]
  %v16 = vld [vmem:[%s0 + $0x10] sm:$0xff]
  %v17 = vld [vmem:[%s0 + $0x18] sm:$0xff]
  %v18 = vld [vmem:[%s0 + $0x20] sm:$0xff]
  %19 = vadd.xlane.f32.xlu0 %v14
  %v20 = vpop.xlane.xlu0 %19
  %21 = vadd.xlane.f32.xlu0 %v15
  %v22 = vpop.xlane.xlu0 %21
  %23 = vadd.xlane.f32.xlu0 %v16
  %v24 = vpop.xlane.xlu0 %23
  %25 = vadd.xlane.f32.xlu0 %v17
  %v26 = vpop.xlane.xlu0 %25
  %27 = vadd.xlane.f32.xlu0 %v18
  %v28 = vpop.xlane.xlu0 %27
  %v29 = vrcp.pop 128.0
  %v30 = vmul.f32 %v20, %v29
  %v31 = vmul.f32 %v22, %v29
  %v32 = vmul.f32 %v24, %v29
  %v33 = vmul.f32 %v26, %v29
  %v34 = vmul.f32 %v28, %v29
  %v35 = vsub.f32 %v14, %v30
  %v36 = vsub.f32 %v15, %v31
  %v37 = vsub.f32 %v16, %v32
  %v38 = vsub.f32 %v17, %v33
  %v39 = vsub.f32 %v18, %v34
  %v40 = vmul.f32 %v35, %v35
  %v41 = vmul.f32 %v36, %v36
  %v42 = vmul.f32 %v37, %v37
  %v43 = vmul.f32 %v38, %v38
  %v44 = vmul.f32 %v39, %v39
  %45 = vadd.xlane.f32.xlu0 %v40
  %v46 = vpop.xlane.xlu0 %45
  %47 = vadd.xlane.f32.xlu0 %v41
  %v48 = vpop.xlane.xlu0 %47
  %49 = vadd.xlane.f32.xlu0 %v42
  %v50 = vpop.xlane.xlu0 %49
  %51 = vadd.xlane.f32.xlu0 %v43
  %v52 = vpop.xlane.xlu0 %51
  %53 = vadd.xlane.f32.xlu0 %v44
  %v54 = vpop.xlane.xlu0 %53
  %v55 = vmul.f32 %v46, %v29
  %v56 = vmul.f32 %v48, %v29
  %v57 = vmul.f32 %v50, %v29
  %v58 = vmul.f32 %v52, %v29
  %v59 = vmul.f32 %v54, %v29
  %v60 = vadd.f32 %v55, 1e-05
  %v61 = vadd.f32 %v56, 1e-05
  %v62 = vadd.f32 %v57, 1e-05
  %v63 = vadd.f32 %v58, 1e-05
  %v64 = vadd.f32 %v59, 1e-05
  %v65 = vrsqrt.pop %v60
  %v66 = vrsqrt.pop %v61
  %v67 = vrsqrt.pop %v62
  %v68 = vrsqrt.pop %v63
  %v69 = vrsqrt.pop %v64
  %v70 = vmul.f32 %v35, %v65
  %v71 = vmul.f32 %v36, %v66
  %v72 = vmul.f32 %v37, %v67
  %v73 = vmul.f32 %v38, %v68
  %v74 = vmul.f32 %v39, %v69
  %v75 = vld [vmem:[%s1] sm:$0x1]
  %v77 = vlaneseq
  %v78 = vshrl.u32 %v77, 7
  %v79 = vsub.s32 0, %v78
  %v80 = vrot.slane %v75, %v79
  %v82 = vmul.f32 %v70, %v80
  %v83 = vmul.f32 %v71, %v80
  %v84 = vmul.f32 %v72, %v80
  %v85 = vmul.f32 %v73, %v80
  %v86 = vmul.f32 %v74, %v80
  %v87 = vld [vmem:[%s2] sm:$0x1]
  %v89 = vlaneseq
  %v90 = vshrl.u32 %v89, 7
  %v91 = vsub.s32 0, %v90
  %v92 = vrot.slane %v87, %v91
  %v94 = vadd.f32 %v82, %v92
  %v95 = vadd.f32 %v83, %v92
  %v96 = vadd.f32 %v84, %v92
  %v97 = vadd.f32 %v85, %v92
  %v98 = vadd.f32 %v86, %v92
  %v99 = vpack.c.bf16 %v95, %v94
  %v100 = vpack.c.bf16 %v97, %v96
  %v101 = vpack.c.bf16 %v98, %v98
  %v105 = vunpack.c.l.b16 %v99
  %v106 = vunpack.c.h.b16 %v99
  %v107 = vunpack.c.l.b16 %v100
  %v108 = vunpack.c.h.b16 %v100
  %v109 = vunpack.c.l.b16 %v101
  %v110 = vpack.c.b16 %v105, %v105
  %v111 = vpack.c.b16 %v106, %v106
  %v112 = vpack.c.b16 %v107, %v107
  %v113 = vpack.c.b16 %v108, %v108
  %v114 = vpack.c.b16 %v109, %v109
  %120 = vst [vmem:[%s3] sm:$0xf] %v110
  %121 = vst [vmem:[%s3 + $0x4] sm:$0xf] %v111
  %122 = vst [vmem:[%s3 + $0x8] sm:$0xf] %v112
  %123 = vst [vmem:[%s3 + $0xc] sm:$0xf] %v113
  %124 = vst [vmem:[%s3 + $0x10] sm:$0xf] %v114
  // Predicated region
  $region14: #{vit_zero_clip_long_forward.18} parent=0 // pred_check
    _
  $region15: #{vit_zero_clip_long_forward.18} parent=0 // pred_check_branch
    %126 = sbr.rel (0) target = $region17
  $region16: #{vit_zero_clip_long_forward.18} parent=0 // pred_region
    _
  $region17: #{vit_zero_clip_long_forward.18} parent=0 // pred_fallthru
    _
  // Predicated region
  $region18: #{vit_zero_clip_long_forward.18} parent=0 // pred_check
    _
  $region19: #{vit_zero_clip_long_forward.18} parent=0 // pred_check_branch
    %128 = sbr.rel (0) target = $region21
  $region20: #{vit_zero_clip_long_forward.18} parent=0 // pred_region
    _
  $region21: #{vit_zero_clip_long_forward.18} parent=0 // pred_fallthru
    _

// kernel: vit_zero_clip_long_forward.20
$region0: #{vit_zero_clip_long_forward.20}
  #allocation0 [shape = 'u32[]', space=smem, size = 0x4, offset = 0x4, fixed_abs, tag = 'smem constant byte address 0x4 - core index']
  #allocation1 [shape = 'u32[144,128]{1,0:T(1,128)}', space=vmem, size = 0x12000, scoped, tag = 'internal scratch']
  %s0 = inlined_call_operand.vmem [shape: bf16[40,128], index: 0, kind: input, shape index: {}]
  %s1 = inlined_call_operand.vmem [shape: bf16[128,384], index: 1, kind: input, shape index: {}]
  %s2 = inlined_call_operand.vmem [shape: f32[1,384], index: 2, kind: input, shape index: {}]
  %s3 = inlined_call_operand.vmem [shape: bf16[40,384], index: 3, kind: output, shape index: {}]
  %s4 = sld [smem:[#allocation0]]
  $region22: #{vit_zero_clip_long_forward.20} parent=0
    _
  %s6 = ssub.s32 1, %s4
  %s7 = scalar_select 0, %s6, %s4
  // Predicated region
  $region2: #{vit_zero_clip_long_forward.20} parent=0 // pred_check
    _
  $region3: #{vit_zero_clip_long_forward.20} parent=0 // pred_check_branch
    %9 = sbr.rel (0) target = $region5
  $region4: #{vit_zero_clip_long_forward.20} parent=0 // pred_region
    _
  $region5: #{vit_zero_clip_long_forward.20} parent=0 // pred_fallthru
    _
  // Predicated region
  $region6: #{vit_zero_clip_long_forward.20} parent=0 // pred_check
    _
  $region7: #{vit_zero_clip_long_forward.20} parent=0 // pred_check_branch
    %11 = sbr.rel (0) target = $region9
  $region8: #{vit_zero_clip_long_forward.20} parent=0 // pred_region
    _
  $region9: #{vit_zero_clip_long_forward.20} parent=0 // pred_fallthru
    _
  // Predicated region
  $region10: #{vit_zero_clip_long_forward.20} parent=0 // pred_check
    _
  $region11: #{vit_zero_clip_long_forward.20} parent=0 // pred_check_branch
    %13 = sbr.rel (0) target = $region13
  $region12: #{vit_zero_clip_long_forward.20} parent=0 // pred_region
    _
  $region13: #{vit_zero_clip_long_forward.20} parent=0 // pred_fallthru
    _
  %v15 = vld [vmem:[%s0] sm:$0xf]
  %v16 = vld [vmem:[%s0 + $0x4] sm:$0xf]
  %v17 = vld [vmem:[%s0 + $0x8] sm:$0xf]
  %v18 = vld [vmem:[%s0 + $0xc] sm:$0xf]
  %v19 = vld [vmem:[%s0 + $0x10] sm:$0xf]
  %v20 = vld [vmem:[%s1] sm:$0xff]
  %v21 = vld [vmem:[%s1 + $0x8] sm:$0xf]
  %v22 = vld [vmem:[%s1 + $0xc] sm:$0xff]
  %v23 = vld [vmem:[%s1 + $0x14] sm:$0xf]
  %v24 = vld [vmem:[%s1 + $0x18] sm:$0xff]
  %v25 = vld [vmem:[%s1 + $0x20] sm:$0xf]
  %v26 = vld [vmem:[%s1 + $0x24] sm:$0xff]
  %v27 = vld [vmem:[%s1 + $0x2c] sm:$0xf]
  %v28 = vld [vmem:[%s1 + $0x30] sm:$0xff]
  %v29 = vld [vmem:[%s1 + $0x38] sm:$0xf]
  %v30 = vld [vmem:[%s1 + $0x3c] sm:$0xff]
  %v31 = vld [vmem:[%s1 + $0x44] sm:$0xf]
  %v32 = vld [vmem:[%s1 + $0x48] sm:$0xff]
  %v33 = vld [vmem:[%s1 + $0x50] sm:$0xf]
  %v34 = vld [vmem:[%s1 + $0x54] sm:$0xff]
  %v35 = vld [vmem:[%s1 + $0x5c] sm:$0xf]
  %v36 = vld [vmem:[%s1 + $0x60] sm:$0xff]
  %v37 = vld [vmem:[%s1 + $0x68] sm:$0xf]
  %v38 = vld [vmem:[%s1 + $0x6c] sm:$0xff]
  %v39 = vld [vmem:[%s1 + $0x74] sm:$0xf]
  %v40 = vld [vmem:[%s1 + $0x78] sm:$0xff]
  %v41 = vld [vmem:[%s1 + $0x80] sm:$0xf]
  %v42 = vld [vmem:[%s1 + $0x84] sm:$0xff]
  %v43 = vld [vmem:[%s1 + $0x8c] sm:$0xf]
  %v44 = vld [vmem:[%s1 + $0x90] sm:$0xff]
  %v45 = vld [vmem:[%s1 + $0x98] sm:$0xf]
  %v46 = vld [vmem:[%s1 + $0x9c] sm:$0xff]
  %v47 = vld [vmem:[%s1 + $0xa4] sm:$0xf]
  %v48 = vld [vmem:[%s1 + $0xa8] sm:$0xff]
  %v49 = vld [vmem:[%s1 + $0xb0] sm:$0xf]
  %v50 = vld [vmem:[%s1 + $0xb4] sm:$0xff]
  %v51 = vld [vmem:[%s1 + $0xbc] sm:$0xf]
  %v52 = vld [vmem:[%s2] sm:$0x7]
  %v54 = vlaneseq
  %v55 = vshrl.u32 %v54, 7
  %v56 = vsub.s32 0, %v55
  %v57 = vrot.slane %v52, %v56
  %v58 = vlaneseq
  %v59 = vshrl.u32 %v58, 7
  %v60 = vsub.s32 1, %v59
  %v61 = vrot.slane %v52, %v60
  %v62 = vlaneseq
  %v63 = vshrl.u32 %v62, 7
  %v64 = vsub.s32 2, %v63
  %v65 = vrot.slane %v52, %v64
  %v74 = vunpack.c.l.b16 %v15
  %v75 = vunpack.c.l.b16 %v16
  %v76 = vunpack.c.l.b16 %v17
  %v77 = vunpack.c.l.b16 %v18
  %v78 = vunpack.c.l.b16 %v19
  %v79 = vpack.c.b16 %v75, %v74
  %v80 = vpack.c.b16 %v77, %v76
  %v81 = vpack.c.b16 %v78, %v78
  %v117 = vunpack.c.l.b16 %v20
  %v118 = vunpack.c.h.b16 %v20
  %v119 = vunpack.c.l.b16 %v21
  %v120 = vunpack.c.l.b16 %v22
  %v121 = vunpack.c.h.b16 %v22
  %v122 = vunpack.c.l.b16 %v23
  %v123 = vunpack.c.l.b16 %v24
  %v124 = vunpack.c.h.b16 %v24
  %v125 = vunpack.c.l.b16 %v25
  %v126 = vunpack.c.l.b16 %v26
  %v127 = vunpack.c.h.b16 %v26
  %v128 = vunpack.c.l.b16 %v27
  %v129 = vunpack.c.l.b16 %v28
  %v130 = vunpack.c.h.b16 %v28
  %v131 = vunpack.c.l.b16 %v29
  %v132 = vunpack.c.l.b16 %v30
  %v133 = vunpack.c.h.b16 %v30
  %v134 = vunpack.c.l.b16 %v31
  %v135 = vunpack.c.l.b16 %v32
  %v136 = vunpack.c.h.b16 %v32
  %v137 = vunpack.c.l.b16 %v33
  %v138 = vunpack.c.l.b16 %v34
  %v139 = vunpack.c.h.b16 %v34
  %v140 = vunpack.c.l.b16 %v35
  %v141 = vunpack.c.l.b16 %v36
  %v142 = vunpack.c.h.b16 %v36
  %v143 = vunpack.c.l.b16 %v37
  %v144 = vunpack.c.l.b16 %v38
  %v145 = vunpack.c.h.b16 %v38
  %v146 = vunpack.c.l.b16 %v39
  %v147 = vunpack.c.l.b16 %v40
  %v148 = vunpack.c.h.b16 %v40
  %v149 = vunpack.c.l.b16 %v41
  %v150 = vunpack.c.l.b16 %v42
  %v151 = vunpack.c.h.b16 %v42
  %v152 = vunpack.c.l.b16 %v43
  %v153 = vunpack.c.l.b16 %v44
  %v154 = vunpack.c.h.b16 %v44
  %v155 = vunpack.c.l.b16 %v45
  %v156 = vunpack.c.l.b16 %v46
  %v157 = vunpack.c.h.b16 %v46
  %v158 = vunpack.c.l.b16 %v47
  %v159 = vunpack.c.l.b16 %v48
  %v160 = vunpack.c.h.b16 %v48
  %v161 = vunpack.c.l.b16 %v49
  %v162 = vunpack.c.l.b16 %v50
  %v163 = vunpack.c.h.b16 %v50
  %v164 = vunpack.c.l.b16 %v51
  %v165 = vpack.c.b16 %v120, %v117
  %v166 = vpack.c.b16 %v121, %v118
  %v167 = vpack.c.b16 %v122, %v119
  %v168 = vpack.c.b16 %v126, %v123
  %v169 = vpack.c.b16 %v127, %v124
  %v170 = vpack.c.b16 %v128, %v125
  %v171 = vpack.c.b16 %v132, %v129
  %v172 = vpack.c.b16 %v133, %v130
  %v173 = vpack.c.b16 %v134, %v131
  %v174 = vpack.c.b16 %v138, %v135
  %v175 = vpack.c.b16 %v139, %v136
  %v176 = vpack.c.b16 %v140, %v137
  %v177 = vpack.c.b16 %v144, %v141
  %v178 = vpack.c.b16 %v145, %v142
  %v179 = vpack.c.b16 %v146, %v143
  %v180 = vpack.c.b16 %v150, %v147
  %v181 = vpack.c.b16 %v151, %v148
  %v182 = vpack.c.b16 %v152, %v149
  %v183 = vpack.c.b16 %v156, %v153
  %v184 = vpack.c.b16 %v157, %v154
  %v185 = vpack.c.b16 %v158, %v155
  %v186 = vpack.c.b16 %v162, %v159
  %v187 = vpack.c.b16 %v163, %v160
  %v188 = vpack.c.b16 %v164, %v161
  %213 = vmatprep.subr.bf16.mxu0 %v166
  %214 = vmatpush1.bf16.msra.mxu0 %v165
  %215 = vmatprep.subr.bf16.mxu0 %v169
  %216 = vmatpush1.bf16.msra.mxu0 %v168
  %217 = vmatprep.subr.bf16.mxu0 %v172
  %218 = vmatpush1.bf16.msra.mxu0 %v171
  %219 = vmatprep.subr.bf16.mxu0 %v175
  %220 = vmatpush1.bf16.msra.mxu0 %v174
  %221 = vmatprep.subr.bf16.mxu0 %v178
  %222 = vmatpush1.bf16.msra.mxu0 %v177
  %223 = vmatprep.subr.bf16.mxu0 %v181
  %224 = vmatpush1.bf16.msra.mxu0 %v180
  %225 = vmatprep.subr.bf16.mxu0 %v184
  %226 = vmatpush1.bf16.msra.mxu0 %v183
  %227 = vmatprep.subr.bf16.mxu0 %v187
  %228 = vmatpush1.bf16.msra.mxu0 %v186
  %229 = vmatprep.subr.bf16.mxu0 0
  %230 = vmatpush1.bf16.msra.mxu0 0
  %231 = vmatprep.subr.bf16.mxu0 0
  %232 = vmatpush1.bf16.msra.mxu0 0
  %233 = vmatprep.subr.bf16.mxu0 0
  %234 = vmatpush1.bf16.msra.mxu0 0
  %235 = vmatprep.subr.bf16.mxu0 0
  %236 = vmatpush1.bf16.msra.mxu0 0
  %237 = vmatprep.subr.bf16.mxu0 0
  %238 = vmatpush1.bf16.msra.mxu0 0
  %239 = vmatprep.subr.bf16.mxu0 0
  %240 = vmatpush1.bf16.msra.mxu0 0
  %241 = vmatprep.subr.bf16.mxu0 0
  %242 = vmatpush1.bf16.msra.mxu0 0
  %243 = vmatprep.subr.bf16.mxu0 0
  %244 = vmatpush1.bf16.msra.mxu0 0
  %245 = vmatprep.mubr.bf16.mxu0 0
  %246 = vmatmul.mubr.bf16.gmra.mrb[0].mxu0 %v79
  %v247 = vpop.f32.mrb[0].mxu0
  %v248 = vadd.f32 %v57, %v247
  %v249 = vpop.f32.mrb[0].mxu0
  %v250 = vadd.f32 %v61, %v249
  %v251 = vpop.f32.mrb[0].mxu0
  %v252 = vadd.f32 %v57, %v251
  %v253 = vpop.f32.mrb[0].mxu0
  %v254 = vadd.f32 %v61, %v253
  %255 = vmatprep.mubr.bf16.mxu0 0
  %256 = vmatmul.mubr.bf16.gmra.mrb[0].mxu0 %v80
  %v257 = vpop.f32.mrb[0].mxu0
  %v258 = vadd.f32 %v57, %v257
  %v259 = vpop.f32.mrb[0].mxu0
  %v260 = vadd.f32 %v61, %v259
  %v261 = vpop.f32.mrb[0].mxu0
  %v262 = vadd.f32 %v57, %v261
  %v263 = vpop.f32.mrb[0].mxu0
  %v264 = vadd.f32 %v61, %v263
  %265 = vmatprep.mubr.bf16.mxu0 0
  %266 = vmatmul.mubr.bf16.gmra.mrb[0].mxu0 %v81
  %v267 = vpop.f32.mrb[0].mxu0
  %v268 = vadd.f32 %v57, %v267
  %v269 = vpop.f32.mrb[0].mxu0
  %v270 = vadd.f32 %v61, %v269
  %v271 = vpop.f32.mrb[0].mxu0
  %v272 = vpop.f32.mrb[0].mxu0
  %273 = vdwg.mxu0
  %274 = vmatprep.subr.bf16.mxu0 0
  %275 = vmatpush1.bf16.msra.mxu0 %v167
  %276 = vmatprep.subr.bf16.mxu0 0
  %277 = vmatpush1.bf16.msra.mxu0 %v170
  %278 = vmatprep.subr.bf16.mxu0 0
  %279 = vmatpush1.bf16.msra.mxu0 %v173
  %280 = vmatprep.subr.bf16.mxu0 0
  %281 = vmatpush1.bf16.msra.mxu0 %v176
  %282 = vmatprep.subr.bf16.mxu0 0
  %283 = vmatpush1.bf16.msra.mxu0 %v179
  %284 = vmatprep.subr.bf16.mxu0 0
  %285 = vmatpush1.bf16.msra.mxu0 %v182
  %286 = vmatprep.subr.bf16.mxu0 0
  %287 = vmatpush1.bf16.msra.mxu0 %v185
  %288 = vmatprep.subr.bf16.mxu0 0
  %289 = vmatpush1.bf16.msra.mxu0 %v188
  %290 = vmatprep.subr.bf16.mxu0 0
  %291 = vmatpush1.bf16.msra.mxu0 0
  %292 = vmatprep.subr.bf16.mxu0 0
  %293 = vmatpush1.bf16.msra.mxu0 0
  %294 = vmatprep.subr.bf16.mxu0 0
  %295 = vmatpush1.bf16.msra.mxu0 0
  %296 = vmatprep.subr.bf16.mxu0 0
  %297 = vmatpush1.bf16.msra.mxu0 0
  %298 = vmatprep.subr.bf16.mxu0 0
  %299 = vmatpush1.bf16.msra.mxu0 0
  %300 = vmatprep.subr.bf16.mxu0 0
  %301 = vmatpush1.bf16.msra.mxu0 0
  %302 = vmatprep.subr.bf16.mxu0 0
  %303 = vmatpush1.bf16.msra.mxu0 0
  %304 = vmatprep.subr.bf16.mxu0 0
  %305 = vmatpush1.bf16.msra.mxu0 0
  %306 = vmatprep.mubr.bf16.mxu0 0
  %307 = vmatmul.mubr.bf16.gmra.mrb[0].mxu0 %v79
  %v308 = vpop.f32.mrb[0].mxu0
  %v309 = vadd.f32 %v65, %v308
  %v310 = vpop.f32.mrb[0].mxu0
  %v311 = vpop.f32.mrb[0].mxu0
  %v312 = vadd.f32 %v65, %v311
  %v313 = vpop.f32.mrb[0].mxu0
  %314 = vmatprep.mubr.bf16.mxu0 0
  %315 = vmatmul.mubr.bf16.gmra.mrb[0].mxu0 %v80
  %v316 = vpop.f32.mrb[0].mxu0
  %v317 = vadd.f32 %v65, %v316
  %v318 = vpop.f32.mrb[0].mxu0
  %v319 = vpop.f32.mrb[0].mxu0
  %v320 = vadd.f32 %v65, %v319
  %v321 = vpop.f32.mrb[0].mxu0
  %322 = vmatprep.mubr.bf16.mxu0 0
  %323 = vmatmul.mubr.bf16.gmra.mrb[0].mxu0 %v81
  %v324 = vpop.f32.mrb[0].mxu0
  %v325 = vadd.f32 %v65, %v324
  %v326 = vpop.f32.mrb[0].mxu0
  %v327 = vpop.f32.mrb[0].mxu0
  %v328 = vpop.f32.mrb[0].mxu0
  %329 = vdwg.mxu0
  %v330 = vpack.c.bf16 %v252, %v248
  %v331 = vpack.c.bf16 %v254, %v250
  %v332 = vpack.c.bf16 %v312, %v309
  %v333 = vpack.c.bf16 %v262, %v258
  %v334 = vpack.c.bf16 %v264, %v260
  %v335 = vpack.c.bf16 %v320, %v317
  %v336 = vpack.c.bf16 %v268, %v268
  %v337 = vpack.c.bf16 %v270, %v270
  %v338 = vpack.c.bf16 %v325, %v325
  %v348 = vunpack.c.l.b16 %v330
  %v349 = vunpack.c.l.b16 %v331
  %v350 = vunpack.c.l.b16 %v332
  %v351 = vunpack.c.h.b16 %v330
  %v352 = vunpack.c.h.b16 %v331
  %v353 = vunpack.c.h.b16 %v332
  %v354 = vunpack.c.l.b16 %v333
  %v355 = vunpack.c.l.b16 %v334
  %v356 = vunpack.c.l.b16 %v335
  %v357 = vunpack.c.h.b16 %v333
  %v358 = vunpack.c.h.b16 %v334
  %v359 = vunpack.c.h.b16 %v335
  %v360 = vunpack.c.l.b16 %v336
  %v361 = vunpack.c.l.b16 %v337
  %v362 = vunpack.c.l.b16 %v338
  %v363 = vpack.c.b16 %v349, %v348
  %v364 = vpack.c.b16 %v350, %v350
  %v365 = vpack.c.b16 %v352, %v351
  %v366 = vpack.c.b16 %v353, %v353
  %v367 = vpack.c.b16 %v355, %v354
  %v368 = vpack.c.b16 %v356, %v356
  %v369 = vpack.c.b16 %v358, %v357
  %v370 = vpack.c.b16 %v359, %v359
  %v371 = vpack.c.b16 %v361, %v360
  %v372 = vpack.c.b16 %v362, %v362
  %383 = vst [vmem:[%s3] sm:$0xff] %v363
  %384 = vst [vmem:[%s3 + $0x8] sm:$0xf] %v364
  %385 = vst [vmem:[%s3 + $0xc] sm:$0xff] %v365
  %386 = vst [vmem:[%s3 + $0x14] sm:$0xf] %v366
  %387 = vst [vmem:[%s3 + $0x18] sm:$0xff] %v367
  %388 = vst [vmem:[%s3 + $0x20] sm:$0xf] %v368
  %389 = vst [vmem:[%s3 + $0x24] sm:$0xff] %v369
  %390 = vst [vmem:[%s3 + $0x2c] sm:$0xf] %v370
  %391 = vst [vmem:[%s3 + $0x30] sm:$0xff] %v371
  %392 = vst [vmem:[%s3 + $0x38] sm:$0xf] %v372
  // Predicated region
  $region14: #{vit_zero_clip_long_forward.20} parent=0 // pred_check
    _
  $region15: #{vit_zero_clip_long_forward.20} parent=0 // pred_check_branch
    %394 = sbr.rel (0) target = $region17
  $region16: #{vit_zero_clip_long_forward.20} parent=0 // pred_region
    _
  $region17: #{vit_zero_clip_long_forward.20} parent=0 // pred_fallthru
    _
  // Predicated region
  $region18: #{vit_zero_clip_long_forward.20} parent=0 // pred_check
    _
  $region19: #{vit_zero_clip_long_forward.20} parent=0 // pred_check_branch
    %396 = sbr.rel (0) target = $region21
  $region20: #{vit_zero_clip_long_forward.20} parent=0 // pred_region
    _
  $region21: #{vit_zero_clip_long_forward.20} parent=0 // pred_fallthru
    _

// kernel: vit_zero_clip_long_forward.19
$region0: #{vit_zero_clip_long_forward.19}
  #allocation0 [shape = 'u32[]', space=smem, size = 0x4, offset = 0x4, fixed_abs, tag = 'smem constant byte address 0x4 - core index']
  #allocation1 [shape = 'u32[144,128]{1,0:T(1,128)}', space=vmem, size = 0x12000, scoped, tag = 'internal scratch']
  %s0 = inlined_call_operand.vmem [shape: bf16[40,128], index: 0, kind: input, shape index: {}]
  %s1 = inlined_call_operand.vmem [shape: f32[1,128], index: 1, kind: input, shape index: {}]
  %s2 = inlined_call_operand.vmem [shape: f32[1,128], index: 2, kind: input, shape index: {}]
  %s3 = inlined_call_operand.vmem [shape: bf16[128,32], index: 3, kind: input, shape index: {}]
  %s4 = inlined_call_operand.vmem [shape: f32[1,32], index: 4, kind: input, shape index: {}]
  %s5 = inlined_call_operand.vmem [shape: bf16[32,128], index: 5, kind: input, shape index: {}]
  %s6 = inlined_call_operand.vmem [shape: f32[1,128], index: 6, kind: input, shape index: {}]
  %s7 = inlined_call_operand.vmem [shape: bf16[40,128], index: 7, kind: output, shape index: {}]
  %s8 = sld [smem:[#allocation0]]
  $region38: #{vit_zero_clip_long_forward.19} parent=0
    _
  %s10 = ssub.s32 1, %s8
  %s11 = scalar_select 0, %s10, %s8
  // Predicated region
  $region2: #{vit_zero_clip_long_forward.19} parent=0 // pred_check
    _
  $region3: #{vit_zero_clip_long_forward.19} parent=0 // pred_check_branch
    %13 = sbr.rel (0) target = $region5
  $region4: #{vit_zero_clip_long_forward.19} parent=0 // pred_region
    _
  $region5: #{vit_zero_clip_long_forward.19} parent=0 // pred_fallthru
    _
  // Predicated region
  $region6: #{vit_zero_clip_long_forward.19} parent=0 // pred_check
    _
  $region7: #{vit_zero_clip_long_forward.19} parent=0 // pred_check_branch
    %15 = sbr.rel (0) target = $region9
  $region8: #{vit_zero_clip_long_forward.19} parent=0 // pred_region
    _
  $region9: #{vit_zero_clip_long_forward.19} parent=0 // pred_fallthru
    _
  // Predicated region
  $region10: #{vit_zero_clip_long_forward.19} parent=0 // pred_check
    _
  $region11: #{vit_zero_clip_long_forward.19} parent=0 // pred_check_branch
    %17 = sbr.rel (0) target = $region13
  $region12: #{vit_zero_clip_long_forward.19} parent=0 // pred_region
    _
  $region13: #{vit_zero_clip_long_forward.19} parent=0 // pred_fallthru
    _
  // Predicated region
  $region14: #{vit_zero_clip_long_forward.19} parent=0 // pred_check
    _
  $region15: #{vit_zero_clip_long_forward.19} parent=0 // pred_check_branch
    %19 = sbr.rel (0) target = $region17
  $region16: #{vit_zero_clip_long_forward.19} parent=0 // pred_region
    _
  $region17: #{vit_zero_clip_long_forward.19} parent=0 // pred_fallthru
    _
  // Predicated region
  $region18: #{vit_zero_clip_long_forward.19} parent=0 // pred_check
    _
  $region19: #{vit_zero_clip_long_forward.19} parent=0 // pred_check_branch
    %21 = sbr.rel (0) target = $region21
  $region20: #{vit_zero_clip_long_forward.19} parent=0 // pred_region
    _
  $region21: #{vit_zero_clip_long_forward.19} parent=0 // pred_fallthru
    _
  // Predicated region
  $region22: #{vit_zero_clip_long_forward.19} parent=0 // pred_check
    _
  $region23: #{vit_zero_clip_long_forward.19} parent=0 // pred_check_branch
    %23 = sbr.rel (0) target = $region25
  $region24: #{vit_zero_clip_long_forward.19} parent=0 // pred_region
    _
  $region25: #{vit_zero_clip_long_forward.19} parent=0 // pred_fallthru
    _
  // Predicated region
  $region26: #{vit_zero_clip_long_forward.19} parent=0 // pred_check
    _
  $region27: #{vit_zero_clip_long_forward.19} parent=0 // pred_check_branch
    %25 = sbr.rel (0) target = $region29
  $region28: #{vit_zero_clip_long_forward.19} parent=0 // pred_region
    _
  $region29: #{vit_zero_clip_long_forward.19} parent=0 // pred_fallthru
    _
  %v27 = vld [vmem:[%s0] sm:$0xf]
  %v28 = vld [vmem:[%s0 + $0x4] sm:$0xf]
  %v29 = vld [vmem:[%s0 + $0x8] sm:$0xf]
  %v30 = vld [vmem:[%s0 + $0xc] sm:$0xf]
  %v31 = vld [vmem:[%s0 + $0x10] sm:$0xf]
  %v32 = vunpack.c.l.bf16 %v27
  %v33 = vunpack.c.l.bf16 %v28
  %v34 = vunpack.c.l.bf16 %v29
  %v35 = vunpack.c.l.bf16 %v30
  %v36 = vunpack.c.l.bf16 %v31
  %37 = vadd.xlane.f32.xlu0 %v32
  %v38 = vpop.xlane.xlu0 %37
  %39 = vadd.xlane.f32.xlu0 %v33
  %v40 = vpop.xlane.xlu0 %39
  %41 = vadd.xlane.f32.xlu0 %v34
  %v42 = vpop.xlane.xlu0 %41
  %43 = vadd.xlane.f32.xlu0 %v35
  %v44 = vpop.xlane.xlu0 %43
  %45 = vadd.xlane.f32.xlu0 %v36
  %v46 = vpop.xlane.xlu0 %45
  %v47 = vrcp.pop 128.0
  %v48 = vmul.f32 %v38, %v47
  %v49 = vmul.f32 %v40, %v47
  %v50 = vmul.f32 %v42, %v47
  %v51 = vmul.f32 %v44, %v47
  %v52 = vmul.f32 %v46, %v47
  %v53 = vsub.f32 %v32, %v48
  %v54 = vsub.f32 %v33, %v49
  %v55 = vsub.f32 %v34, %v50
  %v56 = vsub.f32 %v35, %v51
  %v57 = vsub.f32 %v36, %v52
  %v58 = vmul.f32 %v53, %v53
  %v59 = vmul.f32 %v54, %v54
  %v60 = vmul.f32 %v55, %v55
  %v61 = vmul.f32 %v56, %v56
  %v62 = vmul.f32 %v57, %v57
  %63 = vadd.xlane.f32.xlu0 %v58
  %v64 = vpop.xlane.xlu0 %63
  %65 = vadd.xlane.f32.xlu0 %v59
  %v66 = vpop.xlane.xlu0 %65
  %67 = vadd.xlane.f32.xlu0 %v60
  %v68 = vpop.xlane.xlu0 %67
  %69 = vadd.xlane.f32.xlu0 %v61
  %v70 = vpop.xlane.xlu0 %69
  %71 = vadd.xlane.f32.xlu0 %v62
  %v72 = vpop.xlane.xlu0 %71
  %v73 = vmul.f32 %v64, %v47
  %v74 = vmul.f32 %v66, %v47
  %v75 = vmul.f32 %v68, %v47
  %v76 = vmul.f32 %v70, %v47
  %v77 = vmul.f32 %v72, %v47
  %v78 = vadd.f32 %v73, 1e-05
  %v79 = vadd.f32 %v74, 1e-05
  %v80 = vadd.f32 %v75, 1e-05
  %v81 = vadd.f32 %v76, 1e-05
  %v82 = vadd.f32 %v77, 1e-05
  %v83 = vrsqrt.pop %v78
  %v84 = vrsqrt.pop %v79
  %v85 = vrsqrt.pop %v80
  %v86 = vrsqrt.pop %v81
  %v87 = vrsqrt.pop %v82
  %v88 = vmul.f32 %v53, %v83
  %v89 = vmul.f32 %v54, %v84
  %v90 = vmul.f32 %v55, %v85
  %v91 = vmul.f32 %v56, %v86
  %v92 = vmul.f32 %v57, %v87
  %v93 = vld [vmem:[%s1] sm:$0x1]
  %v95 = vlaneseq
  %v96 = vshrl.u32 %v95, 7
  %v97 = vsub.s32 0, %v96
  %v98 = vrot.slane %v93, %v97
  %v100 = vmul.f32 %v88, %v98
  %v101 = vmul.f32 %v89, %v98
  %v102 = vmul.f32 %v90, %v98
  %v103 = vmul.f32 %v91, %v98
  %v104 = vmul.f32 %v92, %v98
  %v105 = vld [vmem:[%s2] sm:$0x1]
  %v107 = vlaneseq
  %v108 = vshrl.u32 %v107, 7
  %v109 = vsub.s32 0, %v108
  %v110 = vrot.slane %v105, %v109
  %v112 = vadd.f32 %v100, %v110
  %v113 = vadd.f32 %v101, %v110
  %v114 = vadd.f32 %v102, %v110
  %v115 = vadd.f32 %v103, %v110
  %v116 = vadd.f32 %v104, %v110
  %v117 = vpack.c.bf16 %v113, %v112
  %v118 = vpack.c.bf16 %v115, %v114
  %v119 = vpack.c.bf16 %v116, %v116
  %v120 = vld [vmem:[%s3] sm:$0xf]
  %v121 = vld [vmem:[%s3 + $0x4] sm:$0xf]
  %v122 = vld [vmem:[%s3 + $0x8] sm:$0xf]
  %v123 = vld [vmem:[%s3 + $0xc] sm:$0xf]
  %v124 = vld [vmem:[%s3 + $0x10] sm:$0xf]
  %v125 = vld [vmem:[%s3 + $0x14] sm:$0xf]
  %v126 = vld [vmem:[%s3 + $0x18] sm:$0xf]
  %v127 = vld [vmem:[%s3 + $0x1c] sm:$0xf]
  %v128 = vld [vmem:[%s3 + $0x20] sm:$0xf]
  %v129 = vld [vmem:[%s3 + $0x24] sm:$0xf]
  %v130 = vld [vmem:[%s3 + $0x28] sm:$0xf]
  %v131 = vld [vmem:[%s3 + $0x2c] sm:$0xf]
  %v132 = vld [vmem:[%s3 + $0x30] sm:$0xf]
  %v133 = vld [vmem:[%s3 + $0x34] sm:$0xf]
  %v134 = vld [vmem:[%s3 + $0x38] sm:$0xf]
  %v135 = vld [vmem:[%s3 + $0x3c] sm:$0xf]
  %v136 = vld [vmem:[%s4] sm:$0x1]
  %v138 = vlaneseq
  %v139 = vshrl.u32 %v138, 7
  %v140 = vsub.s32 0, %v139
  %v141 = vrot.slane %v136, %v140
  %v159 = vunpack.c.l.b16 %v120
  %v160 = vunpack.c.l.b16 %v121
  %v161 = vunpack.c.l.b16 %v122
  %v162 = vunpack.c.l.b16 %v123
  %v163 = vunpack.c.l.b16 %v124
  %v164 = vunpack.c.l.b16 %v125
  %v165 = vunpack.c.l.b16 %v126
  %v166 = vunpack.c.l.b16 %v127
  %v167 = vunpack.c.l.b16 %v128
  %v168 = vunpack.c.l.b16 %v129
  %v169 = vunpack.c.l.b16 %v130
  %v170 = vunpack.c.l.b16 %v131
  %v171 = vunpack.c.l.b16 %v132
  %v172 = vunpack.c.l.b16 %v133
  %v173 = vunpack.c.l.b16 %v134
  %v174 = vunpack.c.l.b16 %v135
  %v175 = vpack.c.b16 %v160, %v159
  %v176 = vpack.c.b16 %v162, %v161
  %v177 = vpack.c.b16 %v164, %v163
  %v178 = vpack.c.b16 %v166, %v165
  %v179 = vpack.c.b16 %v168, %v167
  %v180 = vpack.c.b16 %v170, %v169
  %v181 = vpack.c.b16 %v172, %v171
  %v182 = vpack.c.b16 %v174, %v173
  %191 = vmatprep.subr.bf16.mxu0 0
  %192 = vmatpush1.bf16.msra.mxu0 %v175
  %193 = vmatprep.subr.bf16.mxu0 0
  %194 = vmatpush1.bf16.msra.mxu0 %v176
  %195 = vmatprep.subr.bf16.mxu0 0
  %196 = vmatpush1.bf16.msra.mxu0 %v177
  %197 = vmatprep.subr.bf16.mxu0 0
  %198 = vmatpush1.bf16.msra.mxu0 %v178
  %199 = vmatprep.subr.bf16.mxu0 0
  %200 = vmatpush1.bf16.msra.mxu0 %v179
  %201 = vmatprep.subr.bf16.mxu0 0
  %202 = vmatpush1.bf16.msra.mxu0 %v180
  %203 = vmatprep.subr.bf16.mxu0 0
  %204 = vmatpush1.bf16.msra.mxu0 %v181
  %205 = vmatprep.subr.bf16.mxu0 0
  %206 = vmatpush1.bf16.msra.mxu0 %v182
  %207 = vmatprep.subr.bf16.mxu0 0
  %208 = vmatpush1.bf16.msra.mxu0 0
  %209 = vmatprep.subr.bf16.mxu0 0
  %210 = vmatpush1.bf16.msra.mxu0 0
  %211 = vmatprep.subr.bf16.mxu0 0
  %212 = vmatpush1.bf16.msra.mxu0 0
  %213 = vmatprep.subr.bf16.mxu0 0
  %214 = vmatpush1.bf16.msra.mxu0 0
  %215 = vmatprep.subr.bf16.mxu0 0
  %216 = vmatpush1.bf16.msra.mxu0 0
  %217 = vmatprep.subr.bf16.mxu0 0
  %218 = vmatpush1.bf16.msra.mxu0 0
  %219 = vmatprep.subr.bf16.mxu0 0
  %220 = vmatpush1.bf16.msra.mxu0 0
  %221 = vmatprep.subr.bf16.mxu0 0
  %222 = vmatpush1.bf16.msra.mxu0 0
  %223 = vmatprep.mubr.bf16.mxu0 0
  %224 = vmatmul.mubr.bf16.gmra.mrb[0].mxu0 %v117
  %v225 = vpop.f32.mrb[0].mxu0
  %v226 = vadd.f32 %v141, %v225
  %v227 = vpop.f32.mrb[0].mxu0
  %v228 = vpop.f32.mrb[0].mxu0
  %v229 = vadd.f32 %v141, %v228
  %v230 = vpop.f32.mrb[0].mxu0
  %231 = vmatprep.mubr.bf16.mxu0 0
  %232 = vmatmul.mubr.bf16.gmra.mrb[0].mxu0 %v118
  %v233 = vpop.f32.mrb[0].mxu0
  %v234 = vadd.f32 %v141, %v233
  %v235 = vpop.f32.mrb[0].mxu0
  %v236 = vpop.f32.mrb[0].mxu0
  %v237 = vadd.f32 %v141, %v236
  %v238 = vpop.f32.mrb[0].mxu0
  %239 = vmatprep.mubr.bf16.mxu0 0
  %240 = vmatmul.mubr.bf16.gmra.mrb[0].mxu0 %v119
  %v241 = vpop.f32.mrb[0].mxu0
  %v242 = vadd.f32 %v141, %v241
  %v243 = vpop.f32.mrb[0].mxu0
  %v244 = vpop.f32.mrb[0].mxu0
  %v245 = vpop.f32.mrb[0].mxu0
  %246 = vdwg.mxu0
  %v247 = vpack.c.bf16 %v229, %v226
  %v248 = vpack.c.bf16 %v237, %v234
  %v249 = vpack.c.bf16 %v242, %v242
  %v250 = vld [vmem:[%s5] sm:$0xf]
  %v251 = vld [vmem:[%s5 + $0x4] sm:$0xf]
  %v252 = vld [vmem:[%s5 + $0x8] sm:$0xf]
  %v253 = vld [vmem:[%s5 + $0xc] sm:$0xf]
  %v254 = vld [vmem:[%s6] sm:$0x1]
  %v256 = vlaneseq
  %v257 = vshrl.u32 %v256, 7
  %v258 = vsub.s32 0, %v257
  %v259 = vrot.slane %v254, %v258
  %v265 = vunpack.c.l.b16 %v250
  %v266 = vunpack.c.l.b16 %v251
  %v267 = vunpack.c.l.b16 %v252
  %v268 = vunpack.c.l.b16 %v253
  %v269 = vpack.c.b16 %v266, %v265
  %v270 = vpack.c.b16 %v268, %v267
  %vm273 = vcmask 261120
  %v275 = vsel %vm273, %v247, 0
  %v278 = vsel %vm273, %v248, 0
  %v281 = vsel %vm273, %v249, 0
  %283 = vmatprep.subr.bf16.mxu0 0
  %284 = vmatpush1.bf16.msra.mxu0 %v269
  %285 = vmatprep.subr.bf16.mxu0 0
  %286 = vmatpush1.bf16.msra.mxu0 %v270
  %287 = vmatprep.subr.bf16.mxu0 0
  %288 = vmatpush1.bf16.msra.mxu0 0
  %289 = vmatprep.subr.bf16.mxu0 0
  %290 = vmatpush1.bf16.msra.mxu0 0
  %291 = vmatprep.subr.bf16.mxu0 0
  %292 = vmatpush1.bf16.msra.mxu0 0
  %293 = vmatprep.subr.bf16.mxu0 0
  %294 = vmatpush1.bf16.msra.mxu0 0
  %295 = vmatprep.subr.bf16.mxu0 0
  %296 = vmatpush1.bf16.msra.mxu0 0
  %297 = vmatprep.subr.bf16.mxu0 0
  %298 = vmatpush1.bf16.msra.mxu0 0
  %299 = vmatprep.subr.bf16.mxu0 0
  %300 = vmatpush1.bf16.msra.mxu0 0
  %301 = vmatprep.subr.bf16.mxu0 0
  %302 = vmatpush1.bf16.msra.mxu0 0
  %303 = vmatprep.subr.bf16.mxu0 0
  %304 = vmatpush1.bf16.msra.mxu0 0
  %305 = vmatprep.subr.bf16.mxu0 0
  %306 = vmatpush1.bf16.msra.mxu0 0
  %307 = vmatprep.subr.bf16.mxu0 0
  %308 = vmatpush1.bf16.msra.mxu0 0
  %309 = vmatprep.subr.bf16.mxu0 0
  %310 = vmatpush1.bf16.msra.mxu0 0
  %311 = vmatprep.subr.bf16.mxu0 0
  %312 = vmatpush1.bf16.msra.mxu0 0
  %313 = vmatprep.subr.bf16.mxu0 0
  %314 = vmatpush1.bf16.msra.mxu0 0
  %315 = vmatprep.mubr.bf16.mxu0 0
  %316 = vmatmul.mubr.bf16.gmra.mrb[0].mxu0 %v275
  %v317 = vpop.f32.mrb[0].mxu0
  %v318 = vadd.f32 %v259, %v317
  %v319 = vpop.f32.mrb[0].mxu0
  %v320 = vpop.f32.mrb[0].mxu0
  %v321 = vadd.f32 %v259, %v320
  %v322 = vpop.f32.mrb[0].mxu0
  %323 = vmatprep.mubr.bf16.mxu0 0
  %324 = vmatmul.mubr.bf16.gmra.mrb[0].mxu0 %v278
  %v325 = vpop.f32.mrb[0].mxu0
  %v326 = vadd.f32 %v259, %v325
  %v327 = vpop.f32.mrb[0].mxu0
  %v328 = vpop.f32.mrb[0].mxu0
  %v329 = vadd.f32 %v259, %v328
  %v330 = vpop.f32.mrb[0].mxu0
  %331 = vmatprep.mubr.bf16.mxu0 0
  %332 = vmatmul.mubr.bf16.gmra.mrb[0].mxu0 %v281
  %v333 = vpop.f32.mrb[0].mxu0
  %v334 = vadd.f32 %v259, %v333
  %v335 = vpop.f32.mrb[0].mxu0
  %v336 = vpop.f32.mrb[0].mxu0
  %v337 = vpop.f32.mrb[0].mxu0
  %338 = vdwg.mxu0
  %v339 = vmul.f32 %v318, 0.5
  %v340 = vmul.f32 %v321, 0.5
  %v341 = vmul.f32 %v326, 0.5
  %v342 = vmul.f32 %v329, 0.5
  %v343 = vmul.f32 %v334, 0.5
  %v344 = vadd.f32 %v112, %v339
  %v345 = vadd.f32 %v113, %v340
  %v346 = vadd.f32 %v114, %v341
  %v347 = vadd.f32 %v115, %v342
  %v348 = vadd.f32 %v116, %v343
  %v349 = vpack.c.bf16 %v345, %v344
  %v350 = vpack.c.bf16 %v347, %v346
  %v351 = vpack.c.bf16 %v348, %v348
  %v355 = vunpack.c.l.b16 %v349
  %v356 = vunpack.c.h.b16 %v349
  %v357 = vunpack.c.l.b16 %v350
  %v358 = vunpack.c.h.b16 %v350
  %v359 = vunpack.c.l.b16 %v351
  %v360 = vpack.c.b16 %v355, %v355
  %v361 = vpack.c.b16 %v356, %v356
  %v362 = vpack.c.b16 %v357, %v357
  %v363 = vpack.c.b16 %v358, %v358
  %v364 = vpack.c.b16 %v359, %v359
  %370 = vst [vmem:[%s7] sm:$0xf] %v360
  %371 = vst [vmem:[%s7 + $0x4] sm:$0xf] %v361
  %372 = vst [vmem:[%s7 + $0x8] sm:$0xf] %v362
  %373 = vst [vmem:[%s7 + $0xc] sm:$0xf] %v363
  %374 = vst [vmem:[%s7 + $0x10] sm:$0xf] %v364
  // Predicated region
  $region30: #{vit_zero_clip_long_forward.19} parent=0 // pred_check
    _
  $region31: #{vit_zero_clip_long_forward.19} parent=0 // pred_check_branch
    %376 = sbr.rel (0) target = $region33
  $region32: #{vit_zero_clip_long_forward.19} parent=0 // pred_region
    _
  $region33: #{vit_zero_clip_long_forward.19} parent=0 // pred_fallthru
    _
  // Predicated region
  $region34: #{vit_zero_clip_long_forward.19} parent=0 // pred_check
    _
  $region35: #{vit_zero_clip_long_forward.19} parent=0 // pred_check_branch
    %378 = sbr.rel (0) target = $region37
  $region36: #{vit_zero_clip_long_forward.19} parent=0 // pred_region
    _
  $region37: #{vit_zero_clip_long_forward.19} parent=0 // pred_fallthru
    _

// kernel: vit_zero_clip_long_forward.22
$region0: #{vit_zero_clip_long_forward.22}
  #allocation0 [shape = 'u32[]', space=smem, size = 0x4, offset = 0x4, fixed_abs, tag = 'smem constant byte address 0x4 - core index']
  #allocation1 [shape = 'u32[144,128]{1,0:T(1,128)}', space=vmem, size = 0x12000, scoped, tag = 'internal scratch']
  %s0 = inlined_call_operand.vmem [shape: bf16[40,128], index: 0, kind: input, shape index: {}]
  %s1 = inlined_call_operand.vmem [shape: bf16[128,128], index: 1, kind: input, shape index: {}]
  %s2 = inlined_call_operand.vmem [shape: f32[1,128], index: 2, kind: input, shape index: {}]
  %s3 = inlined_call_operand.vmem [shape: bf16[40,128], index: 3, kind: output, shape index: {}]
  %s4 = sld [smem:[#allocation0]]
  $region22: #{vit_zero_clip_long_forward.22} parent=0
    _
  %s6 = ssub.s32 1, %s4
  %s7 = scalar_select 0, %s6, %s4
  // Predicated region
  $region2: #{vit_zero_clip_long_forward.22} parent=0 // pred_check
    _
  $region3: #{vit_zero_clip_long_forward.22} parent=0 // pred_check_branch
    %9 = sbr.rel (0) target = $region5
  $region4: #{vit_zero_clip_long_forward.22} parent=0 // pred_region
    _
  $region5: #{vit_zero_clip_long_forward.22} parent=0 // pred_fallthru
    _
  // Predicated region
  $region6: #{vit_zero_clip_long_forward.22} parent=0 // pred_check
    _
  $region7: #{vit_zero_clip_long_forward.22} parent=0 // pred_check_branch
    %11 = sbr.rel (0) target = $region9
  $region8: #{vit_zero_clip_long_forward.22} parent=0 // pred_region
    _
  $region9: #{vit_zero_clip_long_forward.22} parent=0 // pred_fallthru
    _
  // Predicated region
  $region10: #{vit_zero_clip_long_forward.22} parent=0 // pred_check
    _
  $region11: #{vit_zero_clip_long_forward.22} parent=0 // pred_check_branch
    %13 = sbr.rel (0) target = $region13
  $region12: #{vit_zero_clip_long_forward.22} parent=0 // pred_region
    _
  $region13: #{vit_zero_clip_long_forward.22} parent=0 // pred_fallthru
    _
  %v15 = vld [vmem:[%s0] sm:$0xf]
  %v16 = vld [vmem:[%s0 + $0x4] sm:$0xf]
  %v17 = vld [vmem:[%s0 + $0x8] sm:$0xf]
  %v18 = vld [vmem:[%s0 + $0xc] sm:$0xf]
  %v19 = vld [vmem:[%s0 + $0x10] sm:$0xf]
  %v20 = vld [vmem:[%s1] sm:$0xf]
  %v21 = vld [vmem:[%s1 + $0x4] sm:$0xf]
  %v22 = vld [vmem:[%s1 + $0x8] sm:$0xf]
  %v23 = vld [vmem:[%s1 + $0xc] sm:$0xf]
  %v24 = vld [vmem:[%s1 + $0x10] sm:$0xf]
  %v25 = vld [vmem:[%s1 + $0x14] sm:$0xf]
  %v26 = vld [vmem:[%s1 + $0x18] sm:$0xf]
  %v27 = vld [vmem:[%s1 + $0x1c] sm:$0xf]
  %v28 = vld [vmem:[%s1 + $0x20] sm:$0xf]
  %v29 = vld [vmem:[%s1 + $0x24] sm:$0xf]
  %v30 = vld [vmem:[%s1 + $0x28] sm:$0xf]
  %v31 = vld [vmem:[%s1 + $0x2c] sm:$0xf]
  %v32 = vld [vmem:[%s1 + $0x30] sm:$0xf]
  %v33 = vld [vmem:[%s1 + $0x34] sm:$0xf]
  %v34 = vld [vmem:[%s1 + $0x38] sm:$0xf]
  %v35 = vld [vmem:[%s1 + $0x3c] sm:$0xf]
  %v36 = vld [vmem:[%s2] sm:$0x1]
  %v38 = vlaneseq
  %v39 = vshrl.u32 %v38, 7
  %v40 = vsub.s32 0, %v39
  %v41 = vrot.slane %v36, %v40
  %v48 = vunpack.c.l.b16 %v15
  %v49 = vunpack.c.l.b16 %v16
  %v50 = vunpack.c.l.b16 %v17
  %v51 = vunpack.c.l.b16 %v18
  %v52 = vunpack.c.l.b16 %v19
  %v53 = vpack.c.b16 %v49, %v48
  %v54 = vpack.c.b16 %v51, %v50
  %v55 = vpack.c.b16 %v52, %v52
  %v75 = vunpack.c.l.b16 %v20
  %v76 = vunpack.c.l.b16 %v21
  %v77 = vunpack.c.l.b16 %v22
  %v78 = vunpack.c.l.b16 %v23
  %v79 = vunpack.c.l.b16 %v24
  %v80 = vunpack.c.l.b16 %v25
  %v81 = vunpack.c.l.b16 %v26
  %v82 = vunpack.c.l.b16 %v27
  %v83 = vunpack.c.l.b16 %v28
  %v84 = vunpack.c.l.b16 %v29
  %v85 = vunpack.c.l.b16 %v30
  %v86 = vunpack.c.l.b16 %v31
  %v87 = vunpack.c.l.b16 %v32
  %v88 = vunpack.c.l.b16 %v33
  %v89 = vunpack.c.l.b16 %v34
  %v90 = vunpack.c.l.b16 %v35
  %v91 = vpack.c.b16 %v76, %v75
  %v92 = vpack.c.b16 %v78, %v77
  %v93 = vpack.c.b16 %v80, %v79
  %v94 = vpack.c.b16 %v82, %v81
  %v95 = vpack.c.b16 %v84, %v83
  %v96 = vpack.c.b16 %v86, %v85
  %v97 = vpack.c.b16 %v88, %v87
  %v98 = vpack.c.b16 %v90, %v89
  %107 = vmatprep.subr.bf16.mxu0 0
  %108 = vmatpush1.bf16.msra.mxu0 %v91
  %109 = vmatprep.subr.bf16.mxu0 0
  %110 = vmatpush1.bf16.msra.mxu0 %v92
  %111 = vmatprep.subr.bf16.mxu0 0
  %112 = vmatpush1.bf16.msra.mxu0 %v93
  %113 = vmatprep.subr.bf16.mxu0 0
  %114 = vmatpush1.bf16.msra.mxu0 %v94
  %115 = vmatprep.subr.bf16.mxu0 0
  %116 = vmatpush1.bf16.msra.mxu0 %v95
  %117 = vmatprep.subr.bf16.mxu0 0
  %118 = vmatpush1.bf16.msra.mxu0 %v96
  %119 = vmatprep.subr.bf16.mxu0 0
  %120 = vmatpush1.bf16.msra.mxu0 %v97
  %121 = vmatprep.subr.bf16.mxu0 0
  %122 = vmatpush1.bf16.msra.mxu0 %v98
  %123 = vmatprep.subr.bf16.mxu0 0
  %124 = vmatpush1.bf16.msra.mxu0 0
  %125 = vmatprep.subr.bf16.mxu0 0
  %126 = vmatpush1.bf16.msra.mxu0 0
  %127 = vmatprep.subr.bf16.mxu0 0
  %128 = vmatpush1.bf16.msra.mxu0 0
  %129 = vmatprep.subr.bf16.mxu0 0
  %130 = vmatpush1.bf16.msra.mxu0 0
  %131 = vmatprep.subr.bf16.mxu0 0
  %132 = vmatpush1.bf16.msra.mxu0 0
  %133 = vmatprep.subr.bf16.mxu0 0
  %134 = vmatpush1.bf16.msra.mxu0 0
  %135 = vmatprep.subr.bf16.mxu0 0
  %136 = vmatpush1.bf16.msra.mxu0 0
  %137 = vmatprep.subr.bf16.mxu0 0
  %138 = vmatpush1.bf16.msra.mxu0 0
  %139 = vmatprep.mubr.bf16.mxu0 0
  %140 = vmatmul.mubr.bf16.gmra.mrb[0].mxu0 %v53
  %v141 = vpop.f32.mrb[0].mxu0
  %v142 = vadd.f32 %v41, %v141
  %v143 = vpop.f32.mrb[0].mxu0
  %v144 = vpop.f32.mrb[0].mxu0
  %v145 = vadd.f32 %v41, %v144
  %v146 = vpop.f32.mrb[0].mxu0
  %147 = vmatprep.mubr.bf16.mxu0 0
  %148 = vmatmul.mubr.bf16.gmra.mrb[0].mxu0 %v54
  %v149 = vpop.f32.mrb[0].mxu0
  %v150 = vadd.f32 %v41, %v149
  %v151 = vpop.f32.mrb[0].mxu0
  %v152 = vpop.f32.mrb[0].mxu0
  %v153 = vadd.f32 %v41, %v152
  %v154 = vpop.f32.mrb[0].mxu0
  %155 = vmatprep.mubr.bf16.mxu0 0
  %156 = vmatmul.mubr.bf16.gmra.mrb[0].mxu0 %v55
  %v157 = vpop.f32.mrb[0].mxu0
  %v158 = vadd.f32 %v41, %v157
  %v159 = vpop.f32.mrb[0].mxu0
  %v160 = vpop.f32.mrb[0].mxu0
  %v161 = vpop.f32.mrb[0].mxu0
  %162 = vdwg.mxu0
  %v163 = vpack.c.bf16 %v145, %v142
  %v164 = vpack.c.bf16 %v153, %v150
  %v165 = vpack.c.bf16 %v158, %v158
  %v169 = vunpack.c.l.b16 %v163
  %v170 = vunpack.c.h.b16 %v163
  %v171 = vunpack.c.l.b16 %v164
  %v172 = vunpack.c.h.b16 %v164
  %v173 = vunpack.c.l.b16 %v165
  %v174 = vpack.c.b16 %v169, %v169
  %v175 = vpack.c.b16 %v170, %v170
  %v176 = vpack.c.b16 %v171, %v171
  %v177 = vpack.c.b16 %v172, %v172
  %v178 = vpack.c.b16 %v173, %v173
  %184 = vst [vmem:[%s3] sm:$0xf] %v174
  %185 = vst [vmem:[%s3 + $0x4] sm:$0xf] %v175
  %186 = vst [vmem:[%s3 + $0x8] sm:$0xf] %v176
  %187 = vst [vmem:[%s3 + $0xc] sm:$0xf] %v177
  %188 = vst [vmem:[%s3 + $0x10] sm:$0xf] %v178
  // Predicated region
  $region14: #{vit_zero_clip_long_forward.22} parent=0 // pred_check
    _
  $region15: #{vit_zero_clip_long_forward.22} parent=0 // pred_check_branch
    %190 = sbr.rel (0) target = $region17
  $region16: #{vit_zero_clip_long_forward.22} parent=0 // pred_region
    _
  $region17: #{vit_zero_clip_long_forward.22} parent=0 // pred_fallthru
    _
  // Predicated region
  $region18: #{vit_zero_clip_long_forward.22} parent=0 // pred_check
    _
  $region19: #{vit_zero_clip_long_forward.22} parent=0 // pred_check_branch
    %192 = sbr.rel (0) target = $region21
  $region20: #{vit_zero_clip_long_forward.22} parent=0 // pred_region
    _
  $region21: #{vit_zero_clip_long_forward.22} parent=0 // pred_fallthru
    _

// kernel: vit_zero_clip_long_forward.21
$region0: #{vit_zero_clip_long_forward.21}
  #allocation0 [shape = 'u32[]', space=smem, size = 0x4, offset = 0x4, fixed_abs, tag = 'smem constant byte address 0x4 - core index']
  #allocation1 [shape = 'u32[144,128]{1,0:T(1,128)}', space=vmem, size = 0x12000, scoped, tag = 'internal scratch']
  %s0 = inlined_call_operand.vmem [shape: bf16[2,4,5,384], index: 0, kind: input, shape index: {}, may-alias: {0,1,2}]
  %s1 = inlined_call_operand.vmem [shape: bf16[2,4,5,384], index: 1, kind: input, shape index: {}, may-alias: {0,1,2}]
  %s2 = inlined_call_operand.vmem [shape: bf16[2,4,5,384], index: 2, kind: input, shape index: {}, may-alias: {0,1,2}]
  %s3 = inlined_call_operand.vmem [shape: bf16[2,4,5,32], index: 3, kind: input, shape index: {}]
  %s4 = inlined_call_operand.vmem [shape: bf16[2,4,5,32], index: 4, kind: input, shape index: {}]
  %s5 = inlined_call_operand.vmem [shape: bf16[2,4,5,32], index: 5, kind: input, shape index: {}]
  %s6 = inlined_call_operand.vmem [shape: bf16[2,4,5,32], index: 6, kind: input, shape index: {}]
  %s7 = inlined_call_operand.vmem [shape: bf16[2,4,5,128], index: 7, kind: output, shape index: {}]
  %s8 = sld [smem:[#allocation0]]
  $region61: #{vit_zero_clip_long_forward.21} parent=0
    _
  %s10 = ssub.s32 1, %s8
  %s11 = scalar_select 0, %s10, %s8
  loop: start=0, step=1, limit=10
  $region2: #{vit_zero_clip_long_forward.21} parent=0 // loop_pre_header
    _
  $region3: #{vit_zero_clip_long_forward.21} parent=0 // loop_header
    %s13 = sphi 0, %s17
    %p14 = scmp.ge.s32.totalorder %s13, 10
    %s20 = sphi 0, %s32
    %s21 = sphi 0, %s28
    %s22 = sphi 0, %s20
    %s23 = sphi 0, %s21
    %s24 = sphi 0, %s22
    %s25 = sphi 0, %s23
    %s37 = sphi 0, %s39
    %s40 = sphi 0, %s37
    %s41 = sphi 0, %s40
    %s57 = sphi 0, %s41
    %s65 = sphi 0, %s67
    %s68 = sphi 0, %s65
    %s69 = sphi 0, %s68
    %s85 = sphi 0, %s69
    %s93 = sphi 0, %s95
    %s96 = sphi 0, %s93
    %s97 = sphi 0, %s96
    %s113 = sphi 0, %s97
    %s127 = sphi 0, %s129
    %s130 = sphi 0, %s127
    %s131 = sphi 0, %s130
    %s147 = sphi 0, %s131
    %s161 = sphi 0, %s163
    %s164 = sphi 0, %s161
    %s165 = sphi 0, %s164
    %s181 = sphi 0, %s165
    %s195 = sphi 0, %s197
    %s198 = sphi 0, %s195
    %s199 = sphi 0, %s198
    %s215 = sphi 0, %s199
    %s229 = sphi 0, %s231
    %s232 = sphi 0, %s229
    %s233 = sphi 0, %s232
    %s249 = sphi 0, %s233
    %s257 = sphi 0, %s259
    %s260 = sphi 0, %s257
    %s261 = sphi 0, %s260
    %s277 = sphi 0, %s261
  $region4: #{vit_zero_clip_long_forward.21} parent=0 // loop_header_branch
    %16 = sbr.rel (%p14) target = $region8
  $region5: #{vit_zero_clip_long_forward.21} parent=0 // loop_body
    %s18 = ssub.s32 %s13, 1
    %s19 = ssub.s32 %s13, 2
    %s26 = sadd.s32 1, %s21
    %p27 = scmp.ge.s32.totalorder %s26, 4
    %s28 = scalar_select %p27, 0, %s26
    %s29 = sadd.s32 1, %s20
    %s30 = scalar_select %p27, %s29, %s20
    %p31 = scmp.ge.s32.totalorder %s30, 2
    %s32 = scalar_select %p31, 0, %s30
    %s33 = ssub.s32 %s20, %s32
    %s34 = ssub.s32 %s21, %s28
    %s35 = sor.u32 %s33, %s34
    %p36 = scmp.eq.s32.totalorder %s35, 0
    %s38 = sadd.s32 %s37, 1
    %s39 = scalar_select %p36, %s37, %s38
    %p42 = pneg %p36
    %p43 = scmp.eq.s32.totalorder %s13, 7
    %p44 = por %p42, %p43
    %p45 = scmp.ne.s32.totalorder %s37, %s40
    %p46 = scmp.eq.s32.totalorder %s13, 0
    %p47 = por %p45, %p46
    %p48 = scmp.ne.s32.totalorder %s37, %s40
    %p49 = scmp.eq.s32.totalorder %s18, 7
    %p50 = por %p48, %p49
    %p51 = scmp.ne.s32.totalorder %s40, %s41
    %p52 = scmp.eq.s32.totalorder %s18, 0
    %p53 = por %p51, %p52
    %p54 = scmp.ne.s32.totalorder %s40, %s41
    %p55 = scmp.eq.s32.totalorder %s19, 7
    %p56 = por %p54, %p55
    %p58 = scmp.ne.s32.totalorder %s41, %s57
    %p59 = scmp.eq.s32.totalorder %s19, 0
    %p60 = por %p58, %p59
    %s61 = ssub.s32 %s20, %s32
    %s62 = ssub.s32 %s21, %s28
    %s63 = sor.u32 %s61, %s62
    %p64 = scmp.eq.s32.totalorder %s63, 0
    %s66 = sadd.s32 %s65, 1
    %s67 = scalar_select %p64, %s65, %s66
    %p70 = pneg %p64
    %p71 = scmp.eq.s32.totalorder %s13, 7
    %p72 = por %p70, %p71
    %p73 = scmp.ne.s32.totalorder %s65, %s68
    %p74 = scmp.eq.s32.totalorder %s13, 0
    %p75 = por %p73, %p74
    %p76 = scmp.ne.s32.totalorder %s65, %s68
    %p77 = scmp.eq.s32.totalorder %s18, 7
    %p78 = por %p76, %p77
    %p79 = scmp.ne.s32.totalorder %s68, %s69
    %p80 = scmp.eq.s32.totalorder %s18, 0
    %p81 = por %p79, %p80
    %p82 = scmp.ne.s32.totalorder %s68, %s69
    %p83 = scmp.eq.s32.totalorder %s19, 7
    %p84 = por %p82, %p83
    %p86 = scmp.ne.s32.totalorder %s69, %s85
    %p87 = scmp.eq.s32.totalorder %s19, 0
    %p88 = por %p86, %p87
    %s89 = ssub.s32 %s20, %s32
    %s90 = ssub.s32 %s21, %s28
    %s91 = sor.u32 %s89, %s90
    %p92 = scmp.eq.s32.totalorder %s91, 0
    %s94 = sadd.s32 %s93, 1
    %s95 = scalar_select %p92, %s93, %s94
    %p98 = pneg %p92
    %p99 = scmp.eq.s32.totalorder %s13, 7
    %p100 = por %p98, %p99
    %p101 = scmp.ne.s32.totalorder %s93, %s96
    %p102 = scmp.eq.s32.totalorder %s13, 0
    %p103 = por %p101, %p102
    %p104 = scmp.ne.s32.totalorder %s93, %s96
    %p105 = scmp.eq.s32.totalorder %s18, 7
    %p106 = por %p104, %p105
    %p107 = scmp.ne.s32.totalorder %s96, %s97
    %p108 = scmp.eq.s32.totalorder %s18, 0
    %p109 = por %p107, %p108
    %p110 = scmp.ne.s32.totalorder %s96, %s97
    %p111 = scmp.eq.s32.totalorder %s19, 7
    %p112 = por %p110, %p111
    %p114 = scmp.ne.s32.totalorder %s97, %s113
    %p115 = scmp.eq.s32.totalorder %s19, 0
    %p116 = por %p114, %p115
    %s117 = ssub.s32 %s21, 1
    %p118 = scmp.gt.s32.totalorder %s117, 0
    %s119 = scalar_select %p118, %s117, 0
    %s120 = ssub.s32 %s28, 1
    %p121 = scmp.gt.s32.totalorder %s120, 0
    %s122 = scalar_select %p121, %s120, 0
    %s123 = ssub.s32 %s20, %s32
    %s124 = ssub.s32 %s119, %s122
    %s125 = sor.u32 %s123, %s124
    %p126 = scmp.eq.s32.totalorder %s125, 0
    %s128 = sadd.s32 %s127, 1
    %s129 = scalar_select %p126, %s127, %s128
    %p132 = pneg %p126
    %p133 = scmp.eq.s32.totalorder %s13, 7
    %p134 = por %p132, %p133
    %p135 = scmp.ne.s32.totalorder %s127, %s130
    %p136 = scmp.eq.s32.totalorder %s13, 0
    %p137 = por %p135, %p136
    %p138 = scmp.ne.s32.totalorder %s127, %s130
    %p139 = scmp.eq.s32.totalorder %s18, 7
    %p140 = por %p138, %p139
    %p141 = scmp.ne.s32.totalorder %s130, %s131
    %p142 = scmp.eq.s32.totalorder %s18, 0
    %p143 = por %p141, %p142
    %p144 = scmp.ne.s32.totalorder %s130, %s131
    %p145 = scmp.eq.s32.totalorder %s19, 7
    %p146 = por %p144, %p145
    %p148 = scmp.ne.s32.totalorder %s131, %s147
    %p149 = scmp.eq.s32.totalorder %s19, 0
    %p150 = por %p148, %p149
    %s151 = ssub.s32 %s21, 1
    %p152 = scmp.gt.s32.totalorder %s151, 0
    %s153 = scalar_select %p152, %s151, 0
    %s154 = ssub.s32 %s28, 1
    %p155 = scmp.gt.s32.totalorder %s154, 0
    %s156 = scalar_select %p155, %s154, 0
    %s157 = ssub.s32 %s20, %s32
    %s158 = ssub.s32 %s153, %s156
    %s159 = sor.u32 %s157, %s158
    %p160 = scmp.eq.s32.totalorder %s159, 0
    %s162 = sadd.s32 %s161, 1
    %s163 = scalar_select %p160, %s161, %s162
    %p166 = pneg %p160
    %p167 = scmp.eq.s32.totalorder %s13, 7
    %p168 = por %p166, %p167
    %p169 = scmp.ne.s32.totalorder %s161, %s164
    %p170 = scmp.eq.s32.totalorder %s13, 0
    %p171 = por %p169, %p170
    %p172 = scmp.ne.s32.totalorder %s161, %s164
    %p173 = scmp.eq.s32.totalorder %s18, 7
    %p174 = por %p172, %p173
    %p175 = scmp.ne.s32.totalorder %s164, %s165
    %p176 = scmp.eq.s32.totalorder %s18, 0
    %p177 = por %p175, %p176
    %p178 = scmp.ne.s32.totalorder %s164, %s165
    %p179 = scmp.eq.s32.totalorder %s19, 7
    %p180 = por %p178, %p179
    %p182 = scmp.ne.s32.totalorder %s165, %s181
    %p183 = scmp.eq.s32.totalorder %s19, 0
    %p184 = por %p182, %p183
    %s185 = sadd.s32 %s21, 1
    %p186 = scmp.lt.s32.totalorder %s185, 3
    %s187 = scalar_select %p186, %s185, 3
    %s188 = sadd.s32 %s28, 1
    %p189 = scmp.lt.s32.totalorder %s188, 3
    %s190 = scalar_select %p189, %s188, 3
    %s191 = ssub.s32 %s20, %s32
    %s192 = ssub.s32 %s187, %s190
    %s193 = sor.u32 %s191, %s192
    %p194 = scmp.eq.s32.totalorder %s193, 0
    %s196 = sadd.s32 %s195, 1
    %s197 = scalar_select %p194, %s195, %s196
    %p200 = pneg %p194
    %p201 = scmp.eq.s32.totalorder %s13, 7
    %p202 = por %p200, %p201
    %p203 = scmp.ne.s32.totalorder %s195, %s198
    %p204 = scmp.eq.s32.totalorder %s13, 0
    %p205 = por %p203, %p204
    %p206 = scmp.ne.s32.totalorder %s195, %s198
    %p207 = scmp.eq.s32.totalorder %s18, 7
    %p208 = por %p206, %p207
    %p209 = scmp.ne.s32.totalorder %s198, %s199
    %p210 = scmp.eq.s32.totalorder %s18, 0
    %p211 = por %p209, %p210
    %p212 = scmp.ne.s32.totalorder %s198, %s199
    %p213 = scmp.eq.s32.totalorder %s19, 7
    %p214 = por %p212, %p213
    %p216 = scmp.ne.s32.totalorder %s199, %s215
    %p217 = scmp.eq.s32.totalorder %s19, 0
    %p218 = por %p216, %p217
    %s219 = sadd.s32 %s21, 1
    %p220 = scmp.lt.s32.totalorder %s219, 3
    %s221 = scalar_select %p220, %s219, 3
    %s222 = sadd.s32 %s28, 1
    %p223 = scmp.lt.s32.totalorder %s222, 3
    %s224 = scalar_select %p223, %s222, 3
    %s225 = ssub.s32 %s20, %s32
    %s226 = ssub.s32 %s221, %s224
    %s227 = sor.u32 %s225, %s226
    %p228 = scmp.eq.s32.totalorder %s227, 0
    %s230 = sadd.s32 %s229, 1
    %s231 = scalar_select %p228, %s229, %s230
    %p234 = pneg %p228
    %p235 = scmp.eq.s32.totalorder %s13, 7
    %p236 = por %p234, %p235
    %p237 = scmp.ne.s32.totalorder %s229, %s232
    %p238 = scmp.eq.s32.totalorder %s13, 0
    %p239 = por %p237, %p238
    %p240 = scmp.ne.s32.totalorder %s229, %s232
    %p241 = scmp.eq.s32.totalorder %s18, 7
    %p242 = por %p240, %p241
    %p243 = scmp.ne.s32.totalorder %s232, %s233
    %p244 = scmp.eq.s32.totalorder %s18, 0
    %p245 = por %p243, %p244
    %p246 = scmp.ne.s32.totalorder %s232, %s233
    %p247 = scmp.eq.s32.totalorder %s19, 7
    %p248 = por %p246, %p247
    %p250 = scmp.ne.s32.totalorder %s233, %s249
    %p251 = scmp.eq.s32.totalorder %s19, 0
    %p252 = por %p250, %p251
    %s253 = ssub.s32 %s20, %s32
    %s254 = ssub.s32 %s21, %s28
    %s255 = sor.u32 %s253, %s254
    %p256 = scmp.eq.s32.totalorder %s255, 0
    %s258 = sadd.s32 %s257, 1
    %s259 = scalar_select %p256, %s257, %s258
    %p262 = pneg %p256
    %p263 = scmp.eq.s32.totalorder %s13, 7
    %p264 = por %p262, %p263
    %p265 = scmp.ne.s32.totalorder %s257, %s260
    %p266 = scmp.eq.s32.totalorder %s13, 0
    %p267 = por %p265, %p266
    %p268 = scmp.ne.s32.totalorder %s257, %s260
    %p269 = scmp.eq.s32.totalorder %s18, 7
    %p270 = por %p268, %p269
    %p271 = scmp.ne.s32.totalorder %s260, %s261
    %p272 = scmp.eq.s32.totalorder %s18, 0
    %p273 = por %p271, %p272
    %p274 = scmp.ne.s32.totalorder %s260, %s261
    %p275 = scmp.eq.s32.totalorder %s19, 7
    %p276 = por %p274, %p275
    %p278 = scmp.ne.s32.totalorder %s261, %s277
    %p279 = scmp.eq.s32.totalorder %s19, 0
    %p280 = por %p278, %p279
    %p281 = scmp.le.s32.totalorder 1, %s13
    %p282 = scmp.lt.s32.totalorder %s13, 9
    %p283 = pnand %p281, %p282
    %p284 = pneg %p283
    // Predicated region
    $region9: #{vit_zero_clip_long_forward.21} parent=5 // pred_check
      _
    $region10: #{vit_zero_clip_long_forward.21} parent=5 // pred_check_branch
      %286 = sbr.rel (%p283) target = $region12
    $region11: #{vit_zero_clip_long_forward.21} parent=5 // pred_region
      %s287 = ssub.s32 %s13, 1
    $region12: #{vit_zero_clip_long_forward.21} parent=5 // pred_fallthru
      _
    %p288 = scmp.lt.s32.totalorder %s13, 8
    // Predicated region
    $region13: #{vit_zero_clip_long_forward.21} parent=5 // pred_check
      %p289 = pneg %p288
    $region14: #{vit_zero_clip_long_forward.21} parent=5 // pred_check_branch
      %291 = sbr.rel (%p289) target = $region16
    $region15: #{vit_zero_clip_long_forward.21} parent=5 // pred_region
      // Predicated region
      $region17: #{vit_zero_clip_long_forward.21} parent=15 // pred_check
        %p292 = pneg %p47
      $region18: #{vit_zero_clip_long_forward.21} parent=15 // pred_check_branch
        %294 = sbr.rel (%p292) target = $region20
      $region19: #{vit_zero_clip_long_forward.21} parent=15 // pred_region
        %p295 = scmp.lt.s32.totalorder %s20, 1
        %s296 = scalar_select %p295, %s20, 1
        %p297 = scmp.lt.s32.totalorder %s21, 3
        %s298 = scalar_select %p297, %s21, 3
        %s299 = smul.addr %s298, 3
        %s300 = smul.addr %s296, 12
        %s301 = sadd.s32 %s299, %s300
        %s302 = smul.addr %s301, 4
        %s303 = scalar_lea.vmem %s0, %s302
      $region20: #{vit_zero_clip_long_forward.21} parent=15 // pred_fallthru
        _
      // Predicated region
      $region21: #{vit_zero_clip_long_forward.21} parent=15 // pred_check
        %p304 = pneg %p75
      $region22: #{vit_zero_clip_long_forward.21} parent=15 // pred_check_branch
        %306 = sbr.rel (%p304) target = $region24
      $region23: #{vit_zero_clip_long_forward.21} parent=15 // pred_region
        %p307 = scmp.lt.s32.totalorder %s20, 1
        %s308 = scalar_select %p307, %s20, 1
        %p309 = scmp.lt.s32.totalorder %s21, 3
        %s310 = scalar_select %p309, %s21, 3
        %s311 = smul.addr %s310, 3
        %s312 = sadd.s32 1, %s311
        %s313 = smul.addr %s308, 12
        %s314 = sadd.s32 %s312, %s313
        %s315 = smul.addr %s314, 4
        %s316 = scalar_lea.vmem %s1, %s315
      $region24: #{vit_zero_clip_long_forward.21} parent=15 // pred_fallthru
        _
      // Predicated region
      $region25: #{vit_zero_clip_long_forward.21} parent=15 // pred_check
        %p317 = pneg %p103
      $region26: #{vit_zero_clip_long_forward.21} parent=15 // pred_check_branch
        %319 = sbr.rel (%p317) target = $region28
      $region27: #{vit_zero_clip_long_forward.21} parent=15 // pred_region
        %p320 = scmp.lt.s32.totalorder %s20, 1
        %s321 = scalar_select %p320, %s20, 1
        %p322 = scmp.lt.s32.totalorder %s21, 3
        %s323 = scalar_select %p322, %s21, 3
        %s324 = smul.addr %s323, 3
        %s325 = sadd.s32 2, %s324
        %s326 = smul.addr %s321, 12
        %s327 = sadd.s32 %s325, %s326
        %s328 = smul.addr %s327, 4
        %s329 = scalar_lea.vmem %s2, %s328
      $region28: #{vit_zero_clip_long_forward.21} parent=15 // pred_fallthru
        _
      // Predicated region
      $region29: #{vit_zero_clip_long_forward.21} parent=15 // pred_check
        %p330 = pneg %p137
      $region30: #{vit_zero_clip_long_forward.21} parent=15 // pred_check_branch
        %332 = sbr.rel (%p330) target = $region32
      $region31: #{vit_zero_clip_long_forward.21} parent=15 // pred_region
        %s333 = ssub.s32 %s21, 1
        %p334 = scmp.gt.s32.totalorder %s333, 0
        %s335 = scalar_select %p334, %s333, 0
        %p336 = scmp.lt.s32.totalorder %s20, 1
        %s337 = scalar_select %p336, %s20, 1
        %p338 = scmp.lt.s32.totalorder %s335, 3
        %s339 = scalar_select %p338, %s335, 3
        %s340 = smul.addr %s337, 4
        %s341 = sadd.s32 %s339, %s340
        %s342 = smul.addr %s341, 4
        %s343 = scalar_lea.vmem %s3, %s342
        %s344 = ssub.s32 %s21, 1
        %p345 = scmp.gt.s32.totalorder %s344, 0
        %s346 = scalar_select %p345, %s344, 0
      $region32: #{vit_zero_clip_long_forward.21} parent=15 // pred_fallthru
        _
      // Predicated region
      $region33: #{vit_zero_clip_long_forward.21} parent=15 // pred_check
        %p347 = pneg %p171
      $region34: #{vit_zero_clip_long_forward.21} parent=15 // pred_check_branch
        %349 = sbr.rel (%p347) target = $region36
      $region35: #{vit_zero_clip_long_forward.21} parent=15 // pred_region
        %s350 = ssub.s32 %s21, 1
        %p351 = scmp.gt.s32.totalorder %s350, 0
        %s352 = scalar_select %p351, %s350, 0
        %p353 = scmp.lt.s32.totalorder %s20, 1
        %s354 = scalar_select %p353, %s20, 1
        %p355 = scmp.lt.s32.totalorder %s352, 3
        %s356 = scalar_select %p355, %s352, 3
        %s357 = smul.addr %s354, 4
        %s358 = sadd.s32 %s356, %s357
        %s359 = smul.addr %s358, 4
        %s360 = scalar_lea.vmem %s4, %s359
        %s361 = ssub.s32 %s21, 1
        %p362 = scmp.gt.s32.totalorder %s361, 0
        %s363 = scalar_select %p362, %s361, 0
      $region36: #{vit_zero_clip_long_forward.21} parent=15 // pred_fallthru
        _
      // Predicated region
      $region37: #{vit_zero_clip_long_forward.21} parent=15 // pred_check
        %p364 = pneg %p205
      $region38: #{vit_zero_clip_long_forward.21} parent=15 // pred_check_branch
        %366 = sbr.rel (%p364) target = $region40
      $region39: #{vit_zero_clip_long_forward.21} parent=15 // pred_region
        %s367 = sadd.s32 %s21, 1
        %p368 = scmp.lt.s32.totalorder %s367, 3
        %s369 = scalar_select %p368, %s367, 3
        %p370 = scmp.lt.s32.totalorder %s20, 1
        %s371 = scalar_select %p370, %s20, 1
        %p372 = scmp.lt.s32.totalorder %s369, 3
        %s373 = scalar_select %p372, %s369, 3
        %s374 = smul.addr %s371, 4
        %s375 = sadd.s32 %s373, %s374
        %s376 = smul.addr %s375, 4
        %s377 = scalar_lea.vmem %s5, %s376
        %s378 = sadd.s32 %s21, 1
        %p379 = scmp.lt.s32.totalorder %s378, 3
        %s380 = scalar_select %p379, %s378, 3
      $region40: #{vit_zero_clip_long_forward.21} parent=15 // pred_fallthru
        _
      // Predicated region
      $region41: #{vit_zero_clip_long_forward.21} parent=15 // pred_check
        %p381 = pneg %p239
      $region42: #{vit_zero_clip_long_forward.21} parent=15 // pred_check_branch
        %383 = sbr.rel (%p381) target = $region44
      $region43: #{vit_zero_clip_long_forward.21} parent=15 // pred_region
        %s384 = sadd.s32 %s21, 1
        %p385 = scmp.lt.s32.totalorder %s384, 3
        %s386 = scalar_select %p385, %s384, 3
        %p387 = scmp.lt.s32.totalorder %s20, 1
        %s388 = scalar_select %p387, %s20, 1
        %p389 = scmp.lt.s32.totalorder %s386, 3
        %s390 = scalar_select %p389, %s386, 3
        %s391 = smul.addr %s388, 4
        %s392 = sadd.s32 %s390, %s391
        %s393 = smul.addr %s392, 4
        %s394 = scalar_lea.vmem %s6, %s393
        %s395 = sadd.s32 %s21, 1
        %p396 = scmp.lt.s32.totalorder %s395, 3
        %s397 = scalar_select %p396, %s395, 3
      $region44: #{vit_zero_clip_long_forward.21} parent=15 // pred_fallthru
        _
    $region16: #{vit_zero_clip_long_forward.21} parent=5 // pred_fallthru
      _
    %p398 = scmp.le.s32.totalorder 1, %s13
    %p399 = scmp.lt.s32.totalorder %s13, 9
    %p400 = pnand %p398, %p399
    %p401 = pneg %p400
    // Predicated region
    $region45: #{vit_zero_clip_long_forward.21} parent=5 // pred_check
      _
    $region46: #{vit_zero_clip_long_forward.21} parent=5 // pred_check_branch
      %403 = sbr.rel (%p400) target = $region48
    $region47: #{vit_zero_clip_long_forward.21} parent=5 // pred_region
      %s404 = ssub.s32 %s13, 1
      %p405 = scmp.lt.s32.totalorder %s22, 1
      %s406 = scalar_select %p405, %s22, 1
      %p407 = scmp.lt.s32.totalorder %s23, 3
      %s408 = scalar_select %p407, %s23, 3
      %s409 = smul.addr %s408, 3
      %s410 = smul.addr %s406, 12
      %s411 = sadd.s32 %s409, %s410
      %s412 = smul.addr %s411, 4
      %s413 = scalar_lea.vmem %s0, %s412
      %p414 = pneg %p53
      %p415 = pneg %p50
      %p416 = scmp.lt.s32.totalorder %s22, 1
      %s417 = scalar_select %p416, %s22, 1
      %p418 = scmp.lt.s32.totalorder %s23, 3
      %s419 = scalar_select %p418, %s23, 3
      %s420 = smul.addr %s419, 3
      %s421 = sadd.s32 1, %s420
      %s422 = smul.addr %s417, 12
      %s423 = sadd.s32 %s421, %s422
      %s424 = smul.addr %s423, 4
      %s425 = scalar_lea.vmem %s1, %s424
      %p426 = pneg %p81
      %p427 = pneg %p78
      %p428 = scmp.lt.s32.totalorder %s22, 1
      %s429 = scalar_select %p428, %s22, 1
      %p430 = scmp.lt.s32.totalorder %s23, 3
      %s431 = scalar_select %p430, %s23, 3
      %s432 = smul.addr %s431, 3
      %s433 = sadd.s32 2, %s432
      %s434 = smul.addr %s429, 12
      %s435 = sadd.s32 %s433, %s434
      %s436 = smul.addr %s435, 4
      %s437 = scalar_lea.vmem %s2, %s436
      %p438 = pneg %p109
      %p439 = pneg %p106
      %s440 = ssub.s32 %s23, 1
      %p441 = scmp.gt.s32.totalorder %s440, 0
      %s442 = scalar_select %p441, %s440, 0
      %p443 = scmp.lt.s32.totalorder %s22, 1
      %s444 = scalar_select %p443, %s22, 1
      %p445 = scmp.lt.s32.totalorder %s442, 3
      %s446 = scalar_select %p445, %s442, 3
      %s447 = smul.addr %s444, 4
      %s448 = sadd.s32 %s446, %s447
      %s449 = smul.addr %s448, 4
      %s450 = scalar_lea.vmem %s3, %s449
      %p451 = pneg %p143
      %p452 = pneg %p140
      %s453 = ssub.s32 %s23, 1
      %p454 = scmp.gt.s32.totalorder %s453, 0
      %s455 = scalar_select %p454, %s453, 0
      %p456 = scmp.lt.s32.totalorder %s22, 1
      %s457 = scalar_select %p456, %s22, 1
      %p458 = scmp.lt.s32.totalorder %s455, 3
      %s459 = scalar_select %p458, %s455, 3
      %s460 = smul.addr %s457, 4
      %s461 = sadd.s32 %s459, %s460
      %s462 = smul.addr %s461, 4
      %s463 = scalar_lea.vmem %s4, %s462
      %p464 = pneg %p177
      %p465 = pneg %p174
      %s466 = sadd.s32 %s23, 1
      %p467 = scmp.lt.s32.totalorder %s466, 3
      %s468 = scalar_select %p467, %s466, 3
      %p469 = scmp.lt.s32.totalorder %s22, 1
      %s470 = scalar_select %p469, %s22, 1
      %p471 = scmp.lt.s32.totalorder %s468, 3
      %s472 = scalar_select %p471, %s468, 3
      %s473 = smul.addr %s470, 4
      %s474 = sadd.s32 %s472, %s473
      %s475 = smul.addr %s474, 4
      %s476 = scalar_lea.vmem %s5, %s475
      %p477 = pneg %p211
      %p478 = pneg %p208
      %s479 = sadd.s32 %s23, 1
      %p480 = scmp.lt.s32.totalorder %s479, 3
      %s481 = scalar_select %p480, %s479, 3
      %p482 = scmp.lt.s32.totalorder %s22, 1
      %s483 = scalar_select %p482, %s22, 1
      %p484 = scmp.lt.s32.totalorder %s481, 3
      %s485 = scalar_select %p484, %s481, 3
      %s486 = smul.addr %s483, 4
      %s487 = sadd.s32 %s485, %s486
      %s488 = smul.addr %s487, 4
      %s489 = scalar_lea.vmem %s6, %s488
      %p490 = pneg %p245
      %p491 = pneg %p242
      %p492 = pneg %p273
      %p493 = pneg %p270
      %p494 = scmp.lt.s32.totalorder %s22, 1
      %s495 = scalar_select %p494, %s22, 1
      %p496 = scmp.lt.s32.totalorder %s23, 3
      %s497 = scalar_select %p496, %s23, 3
      %s498 = smul.addr %s495, 4
      %s499 = sadd.s32 %s497, %s498
      %s500 = smul.addr %s499, 4
      %s501 = scalar_lea.vmem %s7, %s500
      %p502 = scmp.lt.s32.totalorder %s22, 1
      %s503 = scalar_select %p502, %s22, 1
      %p504 = scmp.lt.s32.totalorder %s23, 3
      %s505 = scalar_select %p504, %s23, 3
      %s506 = smul.addr %s505, 3
      %s507 = smul.addr %s503, 12
      %s508 = sadd.s32 %s506, %s507
      %s509 = smul.addr %s508, 4
      %s510 = scalar_lea.vmem %s0, %s509
      %p511 = scmp.lt.s32.totalorder %s22, 1
      %s512 = scalar_select %p511, %s22, 1
      %p513 = scmp.lt.s32.totalorder %s23, 3
      %s514 = scalar_select %p513, %s23, 3
      %s515 = smul.addr %s514, 3
      %s516 = sadd.s32 1, %s515
      %s517 = smul.addr %s512, 12
      %s518 = sadd.s32 %s516, %s517
      %s519 = smul.addr %s518, 4
      %s520 = scalar_lea.vmem %s1, %s519
      %p521 = scmp.lt.s32.totalorder %s22, 1
      %s522 = scalar_select %p521, %s22, 1
      %p523 = scmp.lt.s32.totalorder %s23, 3
      %s524 = scalar_select %p523, %s23, 3
      %s525 = smul.addr %s524, 3
      %s526 = sadd.s32 2, %s525
      %s527 = smul.addr %s522, 12
      %s528 = sadd.s32 %s526, %s527
      %s529 = smul.addr %s528, 4
      %s530 = scalar_lea.vmem %s2, %s529
      %s531 = ssub.s32 %s23, 1
      %p532 = scmp.gt.s32.totalorder %s531, 0
      %s533 = scalar_select %p532, %s531, 0
      %p534 = scmp.lt.s32.totalorder %s22, 1
      %s535 = scalar_select %p534, %s22, 1
      %p536 = scmp.lt.s32.totalorder %s533, 3
      %s537 = scalar_select %p536, %s533, 3
      %s538 = smul.addr %s535, 4
      %s539 = sadd.s32 %s537, %s538
      %s540 = smul.addr %s539, 4
      %s541 = scalar_lea.vmem %s3, %s540
      %s542 = ssub.s32 %s23, 1
      %p543 = scmp.gt.s32.totalorder %s542, 0
      %s544 = scalar_select %p543, %s542, 0
      %s545 = ssub.s32 %s23, 1
      %p546 = scmp.gt.s32.totalorder %s545, 0
      %s547 = scalar_select %p546, %s545, 0
      %p548 = scmp.lt.s32.totalorder %s22, 1
      %s549 = scalar_select %p548, %s22, 1
      %p550 = scmp.lt.s32.totalorder %s547, 3
      %s551 = scalar_select %p550, %s547, 3
      %s552 = smul.addr %s549, 4
      %s553 = sadd.s32 %s551, %s552
      %s554 = smul.addr %s553, 4
      %s555 = scalar_lea.vmem %s4, %s554
      %s556 = ssub.s32 %s23, 1
      %p557 = scmp.gt.s32.totalorder %s556, 0
      %s558 = scalar_select %p557, %s556, 0
      %s559 = sadd.s32 %s23, 1
      %p560 = scmp.lt.s32.totalorder %s559, 3
      %s561 = scalar_select %p560, %s559, 3
      %p562 = scmp.lt.s32.totalorder %s22, 1
      %s563 = scalar_select %p562, %s22, 1
      %p564 = scmp.lt.s32.totalorder %s561, 3
      %s565 = scalar_select %p564, %s561, 3
      %s566 = smul.addr %s563, 4
      %s567 = sadd.s32 %s565, %s566
      %s568 = smul.addr %s567, 4
      %s569 = scalar_lea.vmem %s5, %s568
      %s570 = sadd.s32 %s23, 1
      %p571 = scmp.lt.s32.totalorder %s570, 3
      %s572 = scalar_select %p571, %s570, 3
      %s573 = sadd.s32 %s23, 1
      %p574 = scmp.lt.s32.totalorder %s573, 3
      %s575 = scalar_select %p574, %s573, 3
      %p576 = scmp.lt.s32.totalorder %s22, 1
      %s577 = scalar_select %p576, %s22, 1
      %p578 = scmp.lt.s32.totalorder %s575, 3
      %s579 = scalar_select %p578, %s575, 3
      %s580 = smul.addr %s577, 4
      %s581 = sadd.s32 %s579, %s580
      %s582 = smul.addr %s581, 4
      %s583 = scalar_lea.vmem %s6, %s582
      %s584 = sadd.s32 %s23, 1
      %p585 = scmp.lt.s32.totalorder %s584, 3
      %s586 = scalar_select %p585, %s584, 3
      %p587 = scmp.lt.s32.totalorder %s22, 1
      %s588 = scalar_select %p587, %s22, 1
      %p589 = scmp.lt.s32.totalorder %s23, 3
      %s590 = scalar_select %p589, %s23, 3
      %s591 = smul.addr %s588, 4
      %s592 = sadd.s32 %s590, %s591
      %s593 = smul.addr %s592, 4
      %s594 = scalar_lea.vmem %s7, %s593
      %p596 = scmp.gt.s32.totalorder %s23, 0
      %p597 = scmp.lt.s32.totalorder %s23, 3
      %v598 = vld [vmem:[%s510] sm:$0x7]
      %v599 = vld [vmem:[%s520] sm:$0x7]
      %v600 = vld [vmem:[%s530] sm:$0x7]
      %v601 = vld [vmem:[%s541] sm:$0x7]
      %s602 = scalar_select %p596, 1, 0
      %v603 = vstv %s602
      %vm604 = vcmp.eq.s32.totalorder %v603, 1
      %v605 = vsel %vm604, %v601, 0
      %v606 = vld [vmem:[%s555] sm:$0x7]
      %v607 = vsel %vm604, %v606, 0
      %vm608 = vcmask 261120
      %v610 = vsel %vm608, %v598, 0
      %v613 = vsel %vm608, %v605, 0
      %615 = vmatprep.subr.bf16.mxu0 0
      %616 = vmatpush1.bf16.xpose.msra.mxu0 %v613
      %617 = vmatprep.subr.bf16.mxu0 0
      %618 = vmatpush1.bf16.xpose.msra.mxu0 0
      %619 = vmatprep.subr.bf16.mxu0 0
      %620 = vmatpush1.bf16.xpose.msra.mxu0 0
      %621 = vmatprep.subr.bf16.mxu0 0
      %622 = vmatpush1.bf16.xpose.msra.mxu0 0
      %623 = vmatprep.subr.bf16.mxu0 0
      %624 = vmatpush1.bf16.xpose.msra.mxu0 0
      %625 = vmatprep.subr.bf16.mxu0 0
      %626 = vmatpush1.bf16.xpose.msra.mxu0 0
      %627 = vmatprep.subr.bf16.mxu0 0
      %628 = vmatpush1.bf16.xpose.msra.mxu0 0
      %629 = vmatprep.subr.bf16.mxu0 0
      %630 = vmatpush1.bf16.xpose.msra.mxu0 0
      %631 = vmatprep.subr.bf16.mxu0 0
      %632 = vmatpush1.bf16.xpose.msra.mxu0 0
      %633 = vmatprep.subr.bf16.mxu0 0
      %634 = vmatpush1.bf16.xpose.msra.mxu0 0
      %635 = vmatprep.subr.bf16.mxu0 0
      %636 = vmatpush1.bf16.xpose.msra.mxu0 0
      %637 = vmatprep.subr.bf16.mxu0 0
      %638 = vmatpush1.bf16.xpose.msra.mxu0 0
      %639 = vmatprep.subr.bf16.mxu0 0
      %640 = vmatpush1.bf16.xpose.msra.mxu0 0
      %641 = vmatprep.subr.bf16.mxu0 0
      %642 = vmatpush1.bf16.xpose.msra.mxu0 0
      %643 = vmatprep.subr.bf16.mxu0 0
      %644 = vmatpush1.bf16.xpose.msra.mxu0 0
      %645 = vmatprep.subr.bf16.mxu0 0
      %646 = vmatpush1.bf16.xpose.msra.mxu0 0
      %647 = vmatprep.mubr.bf16.mxu0 0
      %648 = vmatmul.mubr.bf16.gmra.mrb[0].mxu0 %v610
      %v649 = vpop.f32.mrb[0].mxu0
      %v650 = vadd.f32 0.0, %v649
      %v651 = vpop.f32.mrb[0].mxu0
      %v652 = vpop.f32.mrb[0].mxu0
      %v653 = vpop.f32.mrb[0].mxu0
      %654 = vdwg.mxu0
      %v655 = vmul.f32 %v650, 0.17677669
      %vm656 = vcmask 36864
      %v657 = vsel %vm656, %v655, -inf
      %658 = vmax.xlane.f32.xlu0 %v657
      %v659 = vpop.xlane.xlu0 %658
      %v660 = vsub.f32 %v655, %v659
      %v661 = vmul.f32 %v660, 1.442695
      %v662 = vpow.pop %v661
      %v663 = vsel %vm656, %v662, 0.0
      %664 = vadd.xlane.f32.xlu0 %v663
      %v665 = vpop.xlane.xlu0 %664
      %v666 = vrcp.pop %v665
      %v667 = vmul.f32 %v662, %v666
      %v668 = vpack.c.bf16 %v667, %v667
      %vm669 = vcmask 39936
      %v671 = vsel %vm669, %v668, 0
      %vm673 = vcmask 1041408
      %vm674 = vcmask 1042432
      %v675 = vsel %vm673, 4294967295, 65535
      %v676 = vsel %vm674, %v675, 0
      %v678 = vand.u32 %v607, %v676
      %680 = vmatprep.subr.bf16.mxu0 0
      %681 = vmatpush1.bf16.msra.mxu0 %v678
      %682 = vmatprep.subr.bf16.mxu0 0
      %683 = vmatpush1.bf16.msra.mxu0 0
      %684 = vmatprep.subr.bf16.mxu0 0
      %685 = vmatpush1.bf16.msra.mxu0 0
      %686 = vmatprep.subr.bf16.mxu0 0
      %687 = vmatpush1.bf16.msra.mxu0 0
      %688 = vmatprep.subr.bf16.mxu0 0
      %689 = vmatpush1.bf16.msra.mxu0 0
      %690 = vmatprep.subr.bf16.mxu0 0
      %691 = vmatpush1.bf16.msra.mxu0 0
      %692 = vmatprep.subr.bf16.mxu0 0
      %693 = vmatpush1.bf16.msra.mxu0 0
      %694 = vmatprep.subr.bf16.mxu0 0
      %695 = vmatpush1.bf16.msra.mxu0 0
      %696 = vmatprep.subr.bf16.mxu0 0
      %697 = vmatpush1.bf16.msra.mxu0 0
      %698 = vmatprep.subr.bf16.mxu0 0
      %699 = vmatpush1.bf16.msra.mxu0 0
      %700 = vmatprep.subr.bf16.mxu0 0
      %701 = vmatpush1.bf16.msra.mxu0 0
      %702 = vmatprep.subr.bf16.mxu0 0
      %703 = vmatpush1.bf16.msra.mxu0 0
      %704 = vmatprep.subr.bf16.mxu0 0
      %705 = vmatpush1.bf16.msra.mxu0 0
      %706 = vmatprep.subr.bf16.mxu0 0
      %707 = vmatpush1.bf16.msra.mxu0 0
      %708 = vmatprep.subr.bf16.mxu0 0
      %709 = vmatpush1.bf16.msra.mxu0 0
      %710 = vmatprep.subr.bf16.mxu0 0
      %711 = vmatpush1.bf16.msra.mxu0 0
      %712 = vmatprep.mubr.bf16.mxu0 0
      %713 = vmatmul.mubr.bf16.gmra.mrb[0].mxu0 %v671
      %v714 = vpop.f32.mrb[0].mxu0
      %v715 = vadd.f32 0.0, %v714
      %v716 = vpop.f32.mrb[0].mxu0
      %v717 = vpop.f32.mrb[0].mxu0
      %v718 = vpop.f32.mrb[0].mxu0
      %719 = vdwg.mxu0
      %v720 = vpack.c.bf16 %v715, %v715
      %vm721 = vcmask 256000
      %vm722 = vsmask.f32 2304
      %vm723 = vmand %vm721, %vm722
      %v724 = vld [vmem:[%s594] sm:$0x7]
      %v725 = vsel %vm723, %v720, %v724
      %726 = vst [vmem:[%s594] sm:$0x7] %v725
      %v727 = vld [vmem:[%s569] sm:$0x7]
      %s728 = scalar_select %p597, 1, 0
      %v729 = vstv %s728
      %vm730 = vcmp.eq.s32.totalorder %v729, 1
      %v731 = vsel %vm730, %v727, 0
      %v732 = vld [vmem:[%s583] sm:$0x7]
      %v733 = vsel %vm730, %v732, 0
      %v735 = vunpack.c.l.b16 %v598
      %v736 = vpack.c.b16 %v735, %v735
      %737 = vrot.lane.b32.xlu0 %v736, 96
      %v738 = vpop.permute.xlu0 %737
      %v740 = vsel %vm608, %v738, 0
      %v743 = vsel %vm608, %v731, 0
      %745 = vmatprep.subr.bf16.mxu0 0
      %746 = vmatpush1.bf16.xpose.msra.mxu0 %v743
      %747 = vmatprep.subr.bf16.mxu0 0
      %748 = vmatpush1.bf16.xpose.msra.mxu0 0
      %749 = vmatprep.subr.bf16.mxu0 0
      %750 = vmatpush1.bf16.xpose.msra.mxu0 0
      %751 = vmatprep.subr.bf16.mxu0 0
      %752 = vmatpush1.bf16.xpose.msra.mxu0 0
      %753 = vmatprep.subr.bf16.mxu0 0
      %754 = vmatpush1.bf16.xpose.msra.mxu0 0
      %755 = vmatprep.subr.bf16.mxu0 0
      %756 = vmatpush1.bf16.xpose.msra.mxu0 0
      %757 = vmatprep.subr.bf16.mxu0 0
      %758 = vmatpush1.bf16.xpose.msra.mxu0 0
      %759 = vmatprep.subr.bf16.mxu0 0
      %760 = vmatpush1.bf16.xpose.msra.mxu0 0
      %761 = vmatprep.subr.bf16.mxu0 0
      %762 = vmatpush1.bf16.xpose.msra.mxu0 0
      %763 = vmatprep.subr.bf16.mxu0 0
      %764 = vmatpush1.bf16.xpose.msra.mxu0 0
      %765 = vmatprep.subr.bf16.mxu0 0
      %766 = vmatpush1.bf16.xpose.msra.mxu0 0
      %767 = vmatprep.subr.bf16.mxu0 0
      %768 = vmatpush1.bf16.xpose.msra.mxu0 0
      %769 = vmatprep.subr.bf16.mxu0 0
      %770 = vmatpush1.bf16.xpose.msra.mxu0 0
      %771 = vmatprep.subr.bf16.mxu0 0
      %772 = vmatpush1.bf16.xpose.msra.mxu0 0
      %773 = vmatprep.subr.bf16.mxu0 0
      %774 = vmatpush1.bf16.xpose.msra.mxu0 0
      %775 = vmatprep.subr.bf16.mxu0 0
      %776 = vmatpush1.bf16.xpose.msra.mxu0 0
      %777 = vmatprep.mubr.bf16.mxu0 0
      %778 = vmatmul.mubr.bf16.gmra.mrb[0].mxu0 %v740
      %v779 = vpop.f32.mrb[0].mxu0
      %v780 = vadd.f32 0.0, %v779
      %v781 = vpop.f32.mrb[0].mxu0
      %v782 = vpop.f32.mrb[0].mxu0
      %v783 = vpop.f32.mrb[0].mxu0
      %784 = vdwg.mxu0
      %v785 = vmul.f32 %v780, 0.17677669
      %v786 = vsel %vm656, %v785, -inf
      %787 = vmax.xlane.f32.xlu0 %v786
      %v788 = vpop.xlane.xlu0 %787
      %v789 = vsub.f32 %v785, %v788
      %v790 = vmul.f32 %v789, 1.442695
      %v791 = vpow.pop %v790
      %v792 = vsel %vm656, %v791, 0.0
      %793 = vadd.xlane.f32.xlu0 %v792
      %v794 = vpop.xlane.xlu0 %793
      %v795 = vrcp.pop %v794
      %v796 = vmul.f32 %v791, %v795
      %v797 = vpack.c.bf16 %v796, %v796
      %v799 = vsel %vm669, %v797, 0
      %v802 = vand.u32 %v733, %v676
      %804 = vmatprep.subr.bf16.mxu0 0
      %805 = vmatpush1.bf16.msra.mxu0 %v802
      %806 = vmatprep.subr.bf16.mxu0 0
      %807 = vmatpush1.bf16.msra.mxu0 0
      %808 = vmatprep.subr.bf16.mxu0 0
      %809 = vmatpush1.bf16.msra.mxu0 0
      %810 = vmatprep.subr.bf16.mxu0 0
      %811 = vmatpush1.bf16.msra.mxu0 0
      %812 = vmatprep.subr.bf16.mxu0 0
      %813 = vmatpush1.bf16.msra.mxu0 0
      %814 = vmatprep.subr.bf16.mxu0 0
      %815 = vmatpush1.bf16.msra.mxu0 0
      %816 = vmatprep.subr.bf16.mxu0 0
      %817 = vmatpush1.bf16.msra.mxu0 0
      %818 = vmatprep.subr.bf16.mxu0 0
      %819 = vmatpush1.bf16.msra.mxu0 0
      %820 = vmatprep.subr.bf16.mxu0 0
      %821 = vmatpush1.bf16.msra.mxu0 0
      %822 = vmatprep.subr.bf16.mxu0 0
      %823 = vmatpush1.bf16.msra.mxu0 0
      %824 = vmatprep.subr.bf16.mxu0 0
      %825 = vmatpush1.bf16.msra.mxu0 0
      %826 = vmatprep.subr.bf16.mxu0 0
      %827 = vmatpush1.bf16.msra.mxu0 0
      %828 = vmatprep.subr.bf16.mxu0 0
      %829 = vmatpush1.bf16.msra.mxu0 0
      %830 = vmatprep.subr.bf16.mxu0 0
      %831 = vmatpush1.bf16.msra.mxu0 0
      %832 = vmatprep.subr.bf16.mxu0 0
      %833 = vmatpush1.bf16.msra.mxu0 0
      %834 = vmatprep.subr.bf16.mxu0 0
      %835 = vmatpush1.bf16.msra.mxu0 0
      %836 = vmatprep.mubr.bf16.mxu0 0
      %837 = vmatmul.mubr.bf16.gmra.mrb[0].mxu0 %v799
      %v838 = vpop.f32.mrb[0].mxu0
      %v839 = vadd.f32 0.0, %v838
      %v840 = vpop.f32.mrb[0].mxu0
      %v841 = vpop.f32.mrb[0].mxu0
      %v842 = vpop.f32.mrb[0].mxu0
      %843 = vdwg.mxu0
      %v844 = vpack.c.bf16 %v839, %v839
      %v846 = vunpack.c.l.b16 %v844
      %v847 = vpack.c.b16 %v846, %v846
      %848 = vrot.lane.b32.xlu0 %v847, 32
      %v849 = vpop.permute.xlu0 %848
      %vm851 = vcmask 518400
      %vm852 = vmand %vm851, %vm722
      %v853 = vld [vmem:[%s594] sm:$0x7]
      %v854 = vsel %vm852, %v849, %v853
      %855 = vst [vmem:[%s594] sm:$0x7] %v854
      %856 = vrot.lane.b32.xlu0 %v736, 64
      %v857 = vpop.permute.xlu0 %856
      %v859 = vunpack.c.l.b16 %v599
      %v860 = vpack.c.b16 %v859, %v859
      %861 = vrot.lane.b32.xlu0 %v860, 64
      %v862 = vpop.permute.xlu0 %861
      %v864 = vsel %vm608, %v857, 0
      %v867 = vsel %vm608, %v862, 0
      %869 = vmatprep.subr.bf16.mxu0 0
      %870 = vmatpush1.bf16.xpose.msra.mxu0 %v867
      %871 = vmatprep.subr.bf16.mxu0 0
      %872 = vmatpush1.bf16.xpose.msra.mxu0 0
      %873 = vmatprep.subr.bf16.mxu0 0
      %874 = vmatpush1.bf16.xpose.msra.mxu0 0
      %875 = vmatprep.subr.bf16.mxu0 0
      %876 = vmatpush1.bf16.xpose.msra.mxu0 0
      %877 = vmatprep.subr.bf16.mxu0 0
      %878 = vmatpush1.bf16.xpose.msra.mxu0 0
      %879 = vmatprep.subr.bf16.mxu0 0
      %880 = vmatpush1.bf16.xpose.msra.mxu0 0
      %881 = vmatprep.subr.bf16.mxu0 0
      %882 = vmatpush1.bf16.xpose.msra.mxu0 0
      %883 = vmatprep.subr.bf16.mxu0 0
      %884 = vmatpush1.bf16.xpose.msra.mxu0 0
      %885 = vmatprep.subr.bf16.mxu0 0
      %886 = vmatpush1.bf16.xpose.msra.mxu0 0
      %887 = vmatprep.subr.bf16.mxu0 0
      %888 = vmatpush1.bf16.xpose.msra.mxu0 0
      %889 = vmatprep.subr.bf16.mxu0 0
      %890 = vmatpush1.bf16.xpose.msra.mxu0 0
      %891 = vmatprep.subr.bf16.mxu0 0
      %892 = vmatpush1.bf16.xpose.msra.mxu0 0
      %893 = vmatprep.subr.bf16.mxu0 0
      %894 = vmatpush1.bf16.xpose.msra.mxu0 0
      %895 = vmatprep.subr.bf16.mxu0 0
      %896 = vmatpush1.bf16.xpose.msra.mxu0 0
      %897 = vmatprep.subr.bf16.mxu0 0
      %898 = vmatpush1.bf16.xpose.msra.mxu0 0
      %899 = vmatprep.subr.bf16.mxu0 0
      %900 = vmatpush1.bf16.xpose.msra.mxu0 0
      %901 = vmatprep.mubr.bf16.mxu0 0
      %902 = vmatmul.mubr.bf16.gmra.mrb[0].mxu0 %v864
      %v903 = vpop.f32.mrb[0].mxu0
      %v904 = vadd.f32 0.0, %v903
      %v905 = vpop.f32.mrb[0].mxu0
      %v906 = vpop.f32.mrb[0].mxu0
      %v907 = vpop.f32.mrb[0].mxu0
      %908 = vdwg.mxu0
      %v909 = vmul.f32 %v904, 0.17677669
      %v910 = vsel %vm656, %v909, -inf
      %911 = vmax.xlane.f32.xlu0 %v910
      %v912 = vpop.xlane.xlu0 %911
      %v913 = vsub.f32 %v909, %v912
      %v914 = vmul.f32 %v913, 1.442695
      %v915 = vpow.pop %v914
      %v916 = vsel %vm656, %v915, 0.0
      %917 = vadd.xlane.f32.xlu0 %v916
      %v918 = vpop.xlane.xlu0 %917
      %v919 = vrcp.pop %v918
      %v920 = vmul.f32 %v915, %v919
      %v921 = vpack.c.bf16 %v920, %v920
      %v923 = vunpack.c.l.b16 %v600
      %v924 = vpack.c.b16 %v923, %v923
      %925 = vrot.lane.b32.xlu0 %v924, 64
      %v926 = vpop.permute.xlu0 %925
      %v928 = vsel %vm669, %v921, 0
      %v931 = vand.u32 %v926, %v676
      %933 = vmatprep.subr.bf16.mxu0 0
      %934 = vmatpush1.bf16.msra.mxu0 %v931
      %935 = vmatprep.subr.bf16.mxu0 0
      %936 = vmatpush1.bf16.msra.mxu0 0
      %937 = vmatprep.subr.bf16.mxu0 0
      %938 = vmatpush1.bf16.msra.mxu0 0
      %939 = vmatprep.subr.bf16.mxu0 0
      %940 = vmatpush1.bf16.msra.mxu0 0
      %941 = vmatprep.subr.bf16.mxu0 0
      %942 = vmatpush1.bf16.msra.mxu0 0
      %943 = vmatprep.subr.bf16.mxu0 0
      %944 = vmatpush1.bf16.msra.mxu0 0
      %945 = vmatprep.subr.bf16.mxu0 0
      %946 = vmatpush1.bf16.msra.mxu0 0
      %947 = vmatprep.subr.bf16.mxu0 0
      %948 = vmatpush1.bf16.msra.mxu0 0
      %949 = vmatprep.subr.bf16.mxu0 0
      %950 = vmatpush1.bf16.msra.mxu0 0
      %951 = vmatprep.subr.bf16.mxu0 0
      %952 = vmatpush1.bf16.msra.mxu0 0
      %953 = vmatprep.subr.bf16.mxu0 0
      %954 = vmatpush1.bf16.msra.mxu0 0
      %955 = vmatprep.subr.bf16.mxu0 0
      %956 = vmatpush1.bf16.msra.mxu0 0
      %957 = vmatprep.subr.bf16.mxu0 0
      %958 = vmatpush1.bf16.msra.mxu0 0
      %959 = vmatprep.subr.bf16.mxu0 0
      %960 = vmatpush1.bf16.msra.mxu0 0
      %961 = vmatprep.subr.bf16.mxu0 0
      %962 = vmatpush1.bf16.msra.mxu0 0
      %963 = vmatprep.subr.bf16.mxu0 0
      %964 = vmatpush1.bf16.msra.mxu0 0
      %965 = vmatprep.mubr.bf16.mxu0 0
      %966 = vmatmul.mubr.bf16.gmra.mrb[0].mxu0 %v928
      %v967 = vpop.f32.mrb[0].mxu0
      %v968 = vadd.f32 0.0, %v967
      %v969 = vpop.f32.mrb[0].mxu0
      %v970 = vpop.f32.mrb[0].mxu0
      %v971 = vpop.f32.mrb[0].mxu0
      %972 = vdwg.mxu0
      %v973 = vpack.c.bf16 %v968, %v968
      %v975 = vunpack.c.l.b16 %v973
      %v976 = vpack.c.b16 %v975, %v975
      %977 = vrot.lane.b32.xlu0 %v976, 64
      %v978 = vpop.permute.xlu0 %977
      %vm980 = vcmask 780800
      %vm981 = vmand %vm980, %vm722
      %v982 = vld [vmem:[%s594] sm:$0x7]
      %v983 = vsel %vm981, %v978, %v982
      %984 = vst [vmem:[%s594] sm:$0x7] %v983
      %985 = vrot.lane.b32.xlu0 %v736, 32
      %v986 = vpop.permute.xlu0 %985
      %987 = vrot.lane.b32.xlu0 %v860, 32
      %v988 = vpop.permute.xlu0 %987
      %v990 = vsel %vm608, %v986, 0
      %v993 = vsel %vm608, %v988, 0
      %995 = vmatprep.subr.bf16.mxu0 0
      %996 = vmatpush1.bf16.xpose.msra.mxu0 %v993
      %997 = vmatprep.subr.bf16.mxu0 0
      %998 = vmatpush1.bf16.xpose.msra.mxu0 0
      %999 = vmatprep.subr.bf16.mxu0 0
      %1000 = vmatpush1.bf16.xpose.msra.mxu0 0
      %1001 = vmatprep.subr.bf16.mxu0 0
      %1002 = vmatpush1.bf16.xpose.msra.mxu0 0
      %1003 = vmatprep.subr.bf16.mxu0 0
      %1004 = vmatpush1.bf16.xpose.msra.mxu0 0
      %1005 = vmatprep.subr.bf16.mxu0 0
      %1006 = vmatpush1.bf16.xpose.msra.mxu0 0
      %1007 = vmatprep.subr.bf16.mxu0 0
      %1008 = vmatpush1.bf16.xpose.msra.mxu0 0
      %1009 = vmatprep.subr.bf16.mxu0 0
      %1010 = vmatpush1.bf16.xpose.msra.mxu0 0
      %1011 = vmatprep.subr.bf16.mxu0 0
      %1012 = vmatpush1.bf16.xpose.msra.mxu0 0
      %1013 = vmatprep.subr.bf16.mxu0 0
      %1014 = vmatpush1.bf16.xpose.msra.mxu0 0
      %1015 = vmatprep.subr.bf16.mxu0 0
      %1016 = vmatpush1.bf16.xpose.msra.mxu0 0
      %1017 = vmatprep.subr.bf16.mxu0 0
      %1018 = vmatpush1.bf16.xpose.msra.mxu0 0
      %1019 = vmatprep.subr.bf16.mxu0 0
      %1020 = vmatpush1.bf16.xpose.msra.mxu0 0
      %1021 = vmatprep.subr.bf16.mxu0 0
      %1022 = vmatpush1.bf16.xpose.msra.mxu0 0
      %1023 = vmatprep.subr.bf16.mxu0 0
      %1024 = vmatpush1.bf16.xpose.msra.mxu0 0
      %1025 = vmatprep.subr.bf16.mxu0 0
      %1026 = vmatpush1.bf16.xpose.msra.mxu0 0
      %1027 = vmatprep.mubr.bf16.mxu0 0
      %1028 = vmatmul.mubr.bf16.gmra.mrb[0].mxu0 %v990
      %v1029 = vpop.f32.mrb[0].mxu0
      %v1030 = vadd.f32 0.0, %v1029
      %v1031 = vpop.f32.mrb[0].mxu0
      %v1032 = vpop.f32.mrb[0].mxu0
      %v1033 = vpop.f32.mrb[0].mxu0
      %1034 = vdwg.mxu0
      %v1035 = vmul.f32 %v1030, 0.17677669
      %v1036 = vsel %vm656, %v1035, -inf
      %1037 = vmax.xlane.f32.xlu0 %v1036
      %v1038 = vpop.xlane.xlu0 %1037
      %v1039 = vsub.f32 %v1035, %v1038
      %v1040 = vmul.f32 %v1039, 1.442695
      %v1041 = vpow.pop %v1040
      %v1042 = vsel %vm656, %v1041, 0.0
      %1043 = vadd.xlane.f32.xlu0 %v1042
      %v1044 = vpop.xlane.xlu0 %1043
      %v1045 = vrcp.pop %v1044
      %v1046 = vmul.f32 %v1041, %v1045
      %v1047 = vpack.c.bf16 %v1046, %v1046
      %1048 = vrot.lane.b32.xlu0 %v924, 32
      %v1049 = vpop.permute.xlu0 %1048
      %v1051 = vsel %vm669, %v1047, 0
      %v1054 = vand.u32 %v1049, %v676
      %1056 = vmatprep.subr.bf16.mxu0 0
      %1057 = vmatpush1.bf16.msra.mxu0 %v1054
      %1058 = vmatprep.subr.bf16.mxu0 0
      %1059 = vmatpush1.bf16.msra.mxu0 0
      %1060 = vmatprep.subr.bf16.mxu0 0
      %1061 = vmatpush1.bf16.msra.mxu0 0
      %1062 = vmatprep.subr.bf16.mxu0 0
      %1063 = vmatpush1.bf16.msra.mxu0 0
      %1064 = vmatprep.subr.bf16.mxu0 0
      %1065 = vmatpush1.bf16.msra.mxu0 0
      %1066 = vmatprep.subr.bf16.mxu0 0
      %1067 = vmatpush1.bf16.msra.mxu0 0
      %1068 = vmatprep.subr.bf16.mxu0 0
      %1069 = vmatpush1.bf16.msra.mxu0 0
      %1070 = vmatprep.subr.bf16.mxu0 0
      %1071 = vmatpush1.bf16.msra.mxu0 0
      %1072 = vmatprep.subr.bf16.mxu0 0
      %1073 = vmatpush1.bf16.msra.mxu0 0
      %1074 = vmatprep.subr.bf16.mxu0 0
      %1075 = vmatpush1.bf16.msra.mxu0 0
      %1076 = vmatprep.subr.bf16.mxu0 0
      %1077 = vmatpush1.bf16.msra.mxu0 0
      %1078 = vmatprep.subr.bf16.mxu0 0
      %1079 = vmatpush1.bf16.msra.mxu0 0
      %1080 = vmatprep.subr.bf16.mxu0 0
      %1081 = vmatpush1.bf16.msra.mxu0 0
      %1082 = vmatprep.subr.bf16.mxu0 0
      %1083 = vmatpush1.bf16.msra.mxu0 0
      %1084 = vmatprep.subr.bf16.mxu0 0
      %1085 = vmatpush1.bf16.msra.mxu0 0
      %1086 = vmatprep.subr.bf16.mxu0 0
      %1087 = vmatpush1.bf16.msra.mxu0 0
      %1088 = vmatprep.mubr.bf16.mxu0 0
      %1089 = vmatmul.mubr.bf16.gmra.mrb[0].mxu0 %v1051
      %v1090 = vpop.f32.mrb[0].mxu0
      %v1091 = vadd.f32 0.0, %v1090
      %v1092 = vpop.f32.mrb[0].mxu0
      %v1093 = vpop.f32.mrb[0].mxu0
      %v1094 = vpop.f32.mrb[0].mxu0
      %1095 = vdwg.mxu0
      %v1096 = vpack.c.bf16 %v1091, %v1091
      %v1098 = vunpack.c.l.b16 %v1096
      %v1099 = vpack.c.b16 %v1098, %v1098
      %1100 = vrot.lane.b32.xlu0 %v1099, 96
      %v1101 = vpop.permute.xlu0 %1100
      %vm1103 = vcmask 1043200
      %vm1104 = vmand %vm1103, %vm722
      %v1105 = vld [vmem:[%s594] sm:$0x7]
      %v1106 = vsel %vm1104, %v1101, %v1105
      %1107 = vst [vmem:[%s594] sm:$0x7] %v1106
      %p1108 = scmp.lt.s32.totalorder %s22, 1
      %s1109 = scalar_select %p1108, %s22, 1
      %p1110 = scmp.lt.s32.totalorder %s23, 3
      %s1111 = scalar_select %p1110, %s23, 3
      %s1112 = smul.addr %s1109, 4
      %s1113 = sadd.s32 %s1111, %s1112
      %s1114 = smul.addr %s1113, 4
      %s1115 = scalar_lea.vmem %s7, %s1114
      // Predicated region
      $region49: #{vit_zero_clip_long_forward.21} parent=47 // pred_check
        %p1116 = pneg %p270
      $region50: #{vit_zero_clip_long_forward.21} parent=47 // pred_check_branch
        %1118 = sbr.rel (%p1116) target = $region52
      $region51: #{vit_zero_clip_long_forward.21} parent=47 // pred_region
        _
      $region52: #{vit_zero_clip_long_forward.21} parent=47 // pred_fallthru
        _
    $region48: #{vit_zero_clip_long_forward.21} parent=5 // pred_fallthru
      _
    %p1119 = scmp.le.s32.totalorder 2, %s13
    // Predicated region
    $region53: #{vit_zero_clip_long_forward.21} parent=5 // pred_check
      %p1120 = pneg %p1119
    $region54: #{vit_zero_clip_long_forward.21} parent=5 // pred_check_branch
      %1122 = sbr.rel (%p1120) target = $region56
    $region55: #{vit_zero_clip_long_forward.21} parent=5 // pred_region
      %s1123 = ssub.s32 %s13, 2
      // Predicated region
      $region57: #{vit_zero_clip_long_forward.21} parent=55 // pred_check
        %p1124 = pneg %p276
      $region58: #{vit_zero_clip_long_forward.21} parent=55 // pred_check_branch
        %1126 = sbr.rel (%p1124) target = $region60
      $region59: #{vit_zero_clip_long_forward.21} parent=55 // pred_region
        %p1127 = scmp.lt.s32.totalorder %s24, 1
        %s1128 = scalar_select %p1127, %s24, 1
        %p1129 = scmp.lt.s32.totalorder %s25, 3
        %s1130 = scalar_select %p1129, %s25, 3
        %s1131 = smul.addr %s1128, 4
        %s1132 = sadd.s32 %s1130, %s1131
        %s1133 = smul.addr %s1132, 4
        %s1134 = scalar_lea.vmem %s7, %s1133
      $region60: #{vit_zero_clip_long_forward.21} parent=55 // pred_fallthru
        _
    $region56: #{vit_zero_clip_long_forward.21} parent=5 // pred_fallthru
      _
  $region6: #{vit_zero_clip_long_forward.21} parent=0 // loop_footer
    %s17 = sadd.s32 1, %s13
  $region7: #{vit_zero_clip_long_forward.21} parent=0 // loop_footer_branch
    %12 = sbr.rel target = $region3
  $region8: #{vit_zero_clip_long_forward.21} parent=0 // loop_exit
    _

// kernel: vit_zero_clip_long_forward.23
$region0: #{vit_zero_clip_long_forward.23}
  #allocation0 [shape = 'u32[]', space=smem, size = 0x4, offset = 0x4, fixed_abs, tag = 'smem constant byte address 0x4 - core index']
  #allocation1 [shape = 'u32[144,128]{1,0:T(1,128)}', space=vmem, size = 0x12000, scoped, tag = 'internal scratch']
  %s0 = inlined_call_operand.vmem [shape: bf16[40,128], index: 0, kind: input, shape index: {}]
  %s1 = inlined_call_operand.vmem [shape: bf16[40,128], index: 1, kind: input, shape index: {}]
  %s2 = inlined_call_operand.vmem [shape: bf16[128,32], index: 2, kind: input, shape index: {}]
  %s3 = inlined_call_operand.vmem [shape: f32[1,32], index: 3, kind: input, shape index: {}]
  %s4 = inlined_call_operand.vmem [shape: bf16[32,128], index: 4, kind: input, shape index: {}]
  %s5 = inlined_call_operand.vmem [shape: f32[1,128], index: 5, kind: input, shape index: {}]
  %s6 = inlined_call_operand.vmem [shape: bf16[40,128], index: 6, kind: output, shape index: {}]
  %s7 = sld [smem:[#allocation0]]
  $region34: #{vit_zero_clip_long_forward.23} parent=0
    _
  %s9 = ssub.s32 1, %s7
  %s10 = scalar_select 0, %s9, %s7
  // Predicated region
  $region2: #{vit_zero_clip_long_forward.23} parent=0 // pred_check
    _
  $region3: #{vit_zero_clip_long_forward.23} parent=0 // pred_check_branch
    %12 = sbr.rel (0) target = $region5
  $region4: #{vit_zero_clip_long_forward.23} parent=0 // pred_region
    _
  $region5: #{vit_zero_clip_long_forward.23} parent=0 // pred_fallthru
    _
  // Predicated region
  $region6: #{vit_zero_clip_long_forward.23} parent=0 // pred_check
    _
  $region7: #{vit_zero_clip_long_forward.23} parent=0 // pred_check_branch
    %14 = sbr.rel (0) target = $region9
  $region8: #{vit_zero_clip_long_forward.23} parent=0 // pred_region
    _
  $region9: #{vit_zero_clip_long_forward.23} parent=0 // pred_fallthru
    _
  // Predicated region
  $region10: #{vit_zero_clip_long_forward.23} parent=0 // pred_check
    _
  $region11: #{vit_zero_clip_long_forward.23} parent=0 // pred_check_branch
    %16 = sbr.rel (0) target = $region13
  $region12: #{vit_zero_clip_long_forward.23} parent=0 // pred_region
    _
  $region13: #{vit_zero_clip_long_forward.23} parent=0 // pred_fallthru
    _
  // Predicated region
  $region14: #{vit_zero_clip_long_forward.23} parent=0 // pred_check
    _
  $region15: #{vit_zero_clip_long_forward.23} parent=0 // pred_check_branch
    %18 = sbr.rel (0) target = $region17
  $region16: #{vit_zero_clip_long_forward.23} parent=0 // pred_region
    _
  $region17: #{vit_zero_clip_long_forward.23} parent=0 // pred_fallthru
    _
  // Predicated region
  $region18: #{vit_zero_clip_long_forward.23} parent=0 // pred_check
    _
  $region19: #{vit_zero_clip_long_forward.23} parent=0 // pred_check_branch
    %20 = sbr.rel (0) target = $region21
  $region20: #{vit_zero_clip_long_forward.23} parent=0 // pred_region
    _
  $region21: #{vit_zero_clip_long_forward.23} parent=0 // pred_fallthru
    _
  // Predicated region
  $region22: #{vit_zero_clip_long_forward.23} parent=0 // pred_check
    _
  $region23: #{vit_zero_clip_long_forward.23} parent=0 // pred_check_branch
    %22 = sbr.rel (0) target = $region25
  $region24: #{vit_zero_clip_long_forward.23} parent=0 // pred_region
    _
  $region25: #{vit_zero_clip_long_forward.23} parent=0 // pred_fallthru
    _
  %v24 = vld [vmem:[%s0] sm:$0xf]
  %v25 = vld [vmem:[%s0 + $0x4] sm:$0xf]
  %v26 = vld [vmem:[%s0 + $0x8] sm:$0xf]
  %v27 = vld [vmem:[%s0 + $0xc] sm:$0xf]
  %v28 = vld [vmem:[%s0 + $0x10] sm:$0xf]
  %v29 = vunpack.c.l.bf16 %v24
  %v30 = vunpack.c.l.bf16 %v25
  %v31 = vunpack.c.l.bf16 %v26
  %v32 = vunpack.c.l.bf16 %v27
  %v33 = vunpack.c.l.bf16 %v28
  %v34 = vld [vmem:[%s2] sm:$0xf]
  %v35 = vld [vmem:[%s2 + $0x4] sm:$0xf]
  %v36 = vld [vmem:[%s2 + $0x8] sm:$0xf]
  %v37 = vld [vmem:[%s2 + $0xc] sm:$0xf]
  %v38 = vld [vmem:[%s2 + $0x10] sm:$0xf]
  %v39 = vld [vmem:[%s2 + $0x14] sm:$0xf]
  %v40 = vld [vmem:[%s2 + $0x18] sm:$0xf]
  %v41 = vld [vmem:[%s2 + $0x1c] sm:$0xf]
  %v42 = vld [vmem:[%s2 + $0x20] sm:$0xf]
  %v43 = vld [vmem:[%s2 + $0x24] sm:$0xf]
  %v44 = vld [vmem:[%s2 + $0x28] sm:$0xf]
  %v45 = vld [vmem:[%s2 + $0x2c] sm:$0xf]
  %v46 = vld [vmem:[%s2 + $0x30] sm:$0xf]
  %v47 = vld [vmem:[%s2 + $0x34] sm:$0xf]
  %v48 = vld [vmem:[%s2 + $0x38] sm:$0xf]
  %v49 = vld [vmem:[%s2 + $0x3c] sm:$0xf]
  %v50 = vld [vmem:[%s3] sm:$0x1]
  %v52 = vlaneseq
  %v53 = vshrl.u32 %v52, 7
  %v54 = vsub.s32 0, %v53
  %v55 = vrot.slane %v50, %v54
  %v62 = vunpack.c.l.b16 %v24
  %v63 = vunpack.c.l.b16 %v25
  %v64 = vunpack.c.l.b16 %v26
  %v65 = vunpack.c.l.b16 %v27
  %v66 = vunpack.c.l.b16 %v28
  %v67 = vpack.c.b16 %v63, %v62
  %v68 = vpack.c.b16 %v65, %v64
  %v69 = vpack.c.b16 %v66, %v66
  %v89 = vunpack.c.l.b16 %v34
  %v90 = vunpack.c.l.b16 %v35
  %v91 = vunpack.c.l.b16 %v36
  %v92 = vunpack.c.l.b16 %v37
  %v93 = vunpack.c.l.b16 %v38
  %v94 = vunpack.c.l.b16 %v39
  %v95 = vunpack.c.l.b16 %v40
  %v96 = vunpack.c.l.b16 %v41
  %v97 = vunpack.c.l.b16 %v42
  %v98 = vunpack.c.l.b16 %v43
  %v99 = vunpack.c.l.b16 %v44
  %v100 = vunpack.c.l.b16 %v45
  %v101 = vunpack.c.l.b16 %v46
  %v102 = vunpack.c.l.b16 %v47
  %v103 = vunpack.c.l.b16 %v48
  %v104 = vunpack.c.l.b16 %v49
  %v105 = vpack.c.b16 %v90, %v89
  %v106 = vpack.c.b16 %v92, %v91
  %v107 = vpack.c.b16 %v94, %v93
  %v108 = vpack.c.b16 %v96, %v95
  %v109 = vpack.c.b16 %v98, %v97
  %v110 = vpack.c.b16 %v100, %v99
  %v111 = vpack.c.b16 %v102, %v101
  %v112 = vpack.c.b16 %v104, %v103
  %121 = vmatprep.subr.bf16.mxu0 0
  %122 = vmatpush1.bf16.msra.mxu0 %v105
  %123 = vmatprep.subr.bf16.mxu0 0
  %124 = vmatpush1.bf16.msra.mxu0 %v106
  %125 = vmatprep.subr.bf16.mxu0 0
  %126 = vmatpush1.bf16.msra.mxu0 %v107
  %127 = vmatprep.subr.bf16.mxu0 0
  %128 = vmatpush1.bf16.msra.mxu0 %v108
  %129 = vmatprep.subr.bf16.mxu0 0
  %130 = vmatpush1.bf16.msra.mxu0 %v109
  %131 = vmatprep.subr.bf16.mxu0 0
  %132 = vmatpush1.bf16.msra.mxu0 %v110
  %133 = vmatprep.subr.bf16.mxu0 0
  %134 = vmatpush1.bf16.msra.mxu0 %v111
  %135 = vmatprep.subr.bf16.mxu0 0
  %136 = vmatpush1.bf16.msra.mxu0 %v112
  %137 = vmatprep.subr.bf16.mxu0 0
  %138 = vmatpush1.bf16.msra.mxu0 0
  %139 = vmatprep.subr.bf16.mxu0 0
  %140 = vmatpush1.bf16.msra.mxu0 0
  %141 = vmatprep.subr.bf16.mxu0 0
  %142 = vmatpush1.bf16.msra.mxu0 0
  %143 = vmatprep.subr.bf16.mxu0 0
  %144 = vmatpush1.bf16.msra.mxu0 0
  %145 = vmatprep.subr.bf16.mxu0 0
  %146 = vmatpush1.bf16.msra.mxu0 0
  %147 = vmatprep.subr.bf16.mxu0 0
  %148 = vmatpush1.bf16.msra.mxu0 0
  %149 = vmatprep.subr.bf16.mxu0 0
  %150 = vmatpush1.bf16.msra.mxu0 0
  %151 = vmatprep.subr.bf16.mxu0 0
  %152 = vmatpush1.bf16.msra.mxu0 0
  %153 = vmatprep.mubr.bf16.mxu0 0
  %154 = vmatmul.mubr.bf16.gmra.mrb[0].mxu0 %v67
  %v155 = vpop.f32.mrb[0].mxu0
  %v156 = vadd.f32 %v55, %v155
  %v157 = vpop.f32.mrb[0].mxu0
  %v158 = vpop.f32.mrb[0].mxu0
  %v159 = vadd.f32 %v55, %v158
  %v160 = vpop.f32.mrb[0].mxu0
  %161 = vmatprep.mubr.bf16.mxu0 0
  %162 = vmatmul.mubr.bf16.gmra.mrb[0].mxu0 %v68
  %v163 = vpop.f32.mrb[0].mxu0
  %v164 = vadd.f32 %v55, %v163
  %v165 = vpop.f32.mrb[0].mxu0
  %v166 = vpop.f32.mrb[0].mxu0
  %v167 = vadd.f32 %v55, %v166
  %v168 = vpop.f32.mrb[0].mxu0
  %169 = vmatprep.mubr.bf16.mxu0 0
  %170 = vmatmul.mubr.bf16.gmra.mrb[0].mxu0 %v69
  %v171 = vpop.f32.mrb[0].mxu0
  %v172 = vadd.f32 %v55, %v171
  %v173 = vpop.f32.mrb[0].mxu0
  %v174 = vpop.f32.mrb[0].mxu0
  %v175 = vpop.f32.mrb[0].mxu0
  %176 = vdwg.mxu0
  %v177 = vpack.c.bf16 %v159, %v156
  %v178 = vpack.c.bf16 %v167, %v164
  %v179 = vpack.c.bf16 %v172, %v172
  %v180 = vld [vmem:[%s4] sm:$0xf]
  %v181 = vld [vmem:[%s4 + $0x4] sm:$0xf]
  %v182 = vld [vmem:[%s4 + $0x8] sm:$0xf]
  %v183 = vld [vmem:[%s4 + $0xc] sm:$0xf]
  %v184 = vld [vmem:[%s5] sm:$0x1]
  %v186 = vlaneseq
  %v187 = vshrl.u32 %v186, 7
  %v188 = vsub.s32 0, %v187
  %v189 = vrot.slane %v184, %v188
  %v195 = vunpack.c.l.b16 %v180
  %v196 = vunpack.c.l.b16 %v181
  %v197 = vunpack.c.l.b16 %v182
  %v198 = vunpack.c.l.b16 %v183
  %v199 = vpack.c.b16 %v196, %v195
  %v200 = vpack.c.b16 %v198, %v197
  %vm203 = vcmask 261120
  %v205 = vsel %vm203, %v177, 0
  %v208 = vsel %vm203, %v178, 0
  %v211 = vsel %vm203, %v179, 0
  %213 = vmatprep.subr.bf16.mxu0 0
  %214 = vmatpush1.bf16.msra.mxu0 %v199
  %215 = vmatprep.subr.bf16.mxu0 0
  %216 = vmatpush1.bf16.msra.mxu0 %v200
  %217 = vmatprep.subr.bf16.mxu0 0
  %218 = vmatpush1.bf16.msra.mxu0 0
  %219 = vmatprep.subr.bf16.mxu0 0
  %220 = vmatpush1.bf16.msra.mxu0 0
  %221 = vmatprep.subr.bf16.mxu0 0
  %222 = vmatpush1.bf16.msra.mxu0 0
  %223 = vmatprep.subr.bf16.mxu0 0
  %224 = vmatpush1.bf16.msra.mxu0 0
  %225 = vmatprep.subr.bf16.mxu0 0
  %226 = vmatpush1.bf16.msra.mxu0 0
  %227 = vmatprep.subr.bf16.mxu0 0
  %228 = vmatpush1.bf16.msra.mxu0 0
  %229 = vmatprep.subr.bf16.mxu0 0
  %230 = vmatpush1.bf16.msra.mxu0 0
  %231 = vmatprep.subr.bf16.mxu0 0
  %232 = vmatpush1.bf16.msra.mxu0 0
  %233 = vmatprep.subr.bf16.mxu0 0
  %234 = vmatpush1.bf16.msra.mxu0 0
  %235 = vmatprep.subr.bf16.mxu0 0
  %236 = vmatpush1.bf16.msra.mxu0 0
  %237 = vmatprep.subr.bf16.mxu0 0
  %238 = vmatpush1.bf16.msra.mxu0 0
  %239 = vmatprep.subr.bf16.mxu0 0
  %240 = vmatpush1.bf16.msra.mxu0 0
  %241 = vmatprep.subr.bf16.mxu0 0
  %242 = vmatpush1.bf16.msra.mxu0 0
  %243 = vmatprep.subr.bf16.mxu0 0
  %244 = vmatpush1.bf16.msra.mxu0 0
  %245 = vmatprep.mubr.bf16.mxu0 0
  %246 = vmatmul.mubr.bf16.gmra.mrb[0].mxu0 %v205
  %v247 = vpop.f32.mrb[0].mxu0
  %v248 = vadd.f32 %v189, %v247
  %v249 = vpop.f32.mrb[0].mxu0
  %v250 = vpop.f32.mrb[0].mxu0
  %v251 = vadd.f32 %v189, %v250
  %v252 = vpop.f32.mrb[0].mxu0
  %253 = vmatprep.mubr.bf16.mxu0 0
  %254 = vmatmul.mubr.bf16.gmra.mrb[0].mxu0 %v208
  %v255 = vpop.f32.mrb[0].mxu0
  %v256 = vadd.f32 %v189, %v255
  %v257 = vpop.f32.mrb[0].mxu0
  %v258 = vpop.f32.mrb[0].mxu0
  %v259 = vadd.f32 %v189, %v258
  %v260 = vpop.f32.mrb[0].mxu0
  %261 = vmatprep.mubr.bf16.mxu0 0
  %262 = vmatmul.mubr.bf16.gmra.mrb[0].mxu0 %v211
  %v263 = vpop.f32.mrb[0].mxu0
  %v264 = vadd.f32 %v189, %v263
  %v265 = vpop.f32.mrb[0].mxu0
  %v266 = vpop.f32.mrb[0].mxu0
  %v267 = vpop.f32.mrb[0].mxu0
  %268 = vdwg.mxu0
  %v269 = vmul.f32 %v248, 0.5
  %v270 = vmul.f32 %v251, 0.5
  %v271 = vmul.f32 %v256, 0.5
  %v272 = vmul.f32 %v259, 0.5
  %v273 = vmul.f32 %v264, 0.5
  %v274 = vadd.f32 %v29, %v269
  %v275 = vadd.f32 %v30, %v270
  %v276 = vadd.f32 %v31, %v271
  %v277 = vadd.f32 %v32, %v272
  %v278 = vadd.f32 %v33, %v273
  %v279 = vld [vmem:[%s1] sm:$0xf]
  %v280 = vld [vmem:[%s1 + $0x4] sm:$0xf]
  %v281 = vld [vmem:[%s1 + $0x8] sm:$0xf]
  %v282 = vld [vmem:[%s1 + $0xc] sm:$0xf]
  %v283 = vld [vmem:[%s1 + $0x10] sm:$0xf]
  %v284 = vunpack.c.l.bf16 %v279
  %v285 = vunpack.c.l.bf16 %v280
  %v286 = vunpack.c.l.bf16 %v281
  %v287 = vunpack.c.l.bf16 %v282
  %v288 = vunpack.c.l.bf16 %v283
  %v289 = vadd.f32 %v274, %v284
  %v290 = vadd.f32 %v275, %v285
  %v291 = vadd.f32 %v276, %v286
  %v292 = vadd.f32 %v277, %v287
  %v293 = vadd.f32 %v278, %v288
  %v294 = vpack.c.bf16 %v290, %v289
  %v295 = vpack.c.bf16 %v292, %v291
  %v296 = vpack.c.bf16 %v293, %v293
  %v300 = vunpack.c.l.b16 %v294
  %v301 = vunpack.c.h.b16 %v294
  %v302 = vunpack.c.l.b16 %v295
  %v303 = vunpack.c.h.b16 %v295
  %v304 = vunpack.c.l.b16 %v296
  %v305 = vpack.c.b16 %v300, %v300
  %v306 = vpack.c.b16 %v301, %v301
  %v307 = vpack.c.b16 %v302, %v302
  %v308 = vpack.c.b16 %v303, %v303
  %v309 = vpack.c.b16 %v304, %v304
  %315 = vst [vmem:[%s6] sm:$0xf] %v305
  %316 = vst [vmem:[%s6 + $0x4] sm:$0xf] %v306
  %317 = vst [vmem:[%s6 + $0x8] sm:$0xf] %v307
  %318 = vst [vmem:[%s6 + $0xc] sm:$0xf] %v308
  %319 = vst [vmem:[%s6 + $0x10] sm:$0xf] %v309
  // Predicated region
  $region26: #{vit_zero_clip_long_forward.23} parent=0 // pred_check
    _
  $region27: #{vit_zero_clip_long_forward.23} parent=0 // pred_check_branch
    %321 = sbr.rel (0) target = $region29
  $region28: #{vit_zero_clip_long_forward.23} parent=0 // pred_region
    _
  $region29: #{vit_zero_clip_long_forward.23} parent=0 // pred_fallthru
    _
  // Predicated region
  $region30: #{vit_zero_clip_long_forward.23} parent=0 // pred_check
    _
  $region31: #{vit_zero_clip_long_forward.23} parent=0 // pred_check_branch
    %323 = sbr.rel (0) target = $region33
  $region32: #{vit_zero_clip_long_forward.23} parent=0 // pred_region
    _
  $region33: #{vit_zero_clip_long_forward.23} parent=0 // pred_fallthru
    _

// kernel: vit_zero_clip_long_forward.25
$region0: #{vit_zero_clip_long_forward.25}
  #allocation0 [shape = 'u32[]', space=smem, size = 0x4, offset = 0x4, fixed_abs, tag = 'smem constant byte address 0x4 - core index']
  #allocation1 [shape = 'u32[144,128]{1,0:T(1,128)}', space=vmem, size = 0x12000, scoped, tag = 'internal scratch']
  %s0 = inlined_call_operand.vmem [shape: bf16[40,128], index: 0, kind: input, shape index: {}]
  %s1 = inlined_call_operand.vmem [shape: bf16[40,128], index: 1, kind: input, shape index: {}]
  %s2 = inlined_call_operand.vmem [shape: bf16[128,512], index: 2, kind: input, shape index: {}]
  %s3 = inlined_call_operand.vmem [shape: f32[1,512], index: 3, kind: input, shape index: {}]
  %s4 = inlined_call_operand.vmem [shape: bf16[512,128], index: 4, kind: input, shape index: {}]
  %s5 = inlined_call_operand.vmem [shape: f32[1,128], index: 5, kind: input, shape index: {}]
  %s6 = inlined_call_operand.vmem [shape: bf16[40,128], index: 6, kind: output, shape index: {}]
  %s7 = sld [smem:[#allocation0]]
  $region34: #{vit_zero_clip_long_forward.25} parent=0
    _
  %s9 = ssub.s32 1, %s7
  %s10 = scalar_select 0, %s9, %s7
  // Predicated region
  $region2: #{vit_zero_clip_long_forward.25} parent=0 // pred_check
    _
  $region3: #{vit_zero_clip_long_forward.25} parent=0 // pred_check_branch
    %12 = sbr.rel (0) target = $region5
  $region4: #{vit_zero_clip_long_forward.25} parent=0 // pred_region
    _
  $region5: #{vit_zero_clip_long_forward.25} parent=0 // pred_fallthru
    _
  // Predicated region
  $region6: #{vit_zero_clip_long_forward.25} parent=0 // pred_check
    _
  $region7: #{vit_zero_clip_long_forward.25} parent=0 // pred_check_branch
    %14 = sbr.rel (0) target = $region9
  $region8: #{vit_zero_clip_long_forward.25} parent=0 // pred_region
    _
  $region9: #{vit_zero_clip_long_forward.25} parent=0 // pred_fallthru
    _
  // Predicated region
  $region10: #{vit_zero_clip_long_forward.25} parent=0 // pred_check
    _
  $region11: #{vit_zero_clip_long_forward.25} parent=0 // pred_check_branch
    %16 = sbr.rel (0) target = $region13
  $region12: #{vit_zero_clip_long_forward.25} parent=0 // pred_region
    _
  $region13: #{vit_zero_clip_long_forward.25} parent=0 // pred_fallthru
    _
  // Predicated region
  $region14: #{vit_zero_clip_long_forward.25} parent=0 // pred_check
    _
  $region15: #{vit_zero_clip_long_forward.25} parent=0 // pred_check_branch
    %18 = sbr.rel (0) target = $region17
  $region16: #{vit_zero_clip_long_forward.25} parent=0 // pred_region
    _
  $region17: #{vit_zero_clip_long_forward.25} parent=0 // pred_fallthru
    _
  // Predicated region
  $region18: #{vit_zero_clip_long_forward.25} parent=0 // pred_check
    _
  $region19: #{vit_zero_clip_long_forward.25} parent=0 // pred_check_branch
    %20 = sbr.rel (0) target = $region21
  $region20: #{vit_zero_clip_long_forward.25} parent=0 // pred_region
    _
  $region21: #{vit_zero_clip_long_forward.25} parent=0 // pred_fallthru
    _
  // Predicated region
  $region22: #{vit_zero_clip_long_forward.25} parent=0 // pred_check
    _
  $region23: #{vit_zero_clip_long_forward.25} parent=0 // pred_check_branch
    %22 = sbr.rel (0) target = $region25
  $region24: #{vit_zero_clip_long_forward.25} parent=0 // pred_region
    _
  $region25: #{vit_zero_clip_long_forward.25} parent=0 // pred_fallthru
    _
  %v24 = vld [vmem:[%s0] sm:$0xf]
  %v25 = vld [vmem:[%s0 + $0x4] sm:$0xf]
  %v26 = vld [vmem:[%s0 + $0x8] sm:$0xf]
  %v27 = vld [vmem:[%s0 + $0xc] sm:$0xf]
  %v28 = vld [vmem:[%s0 + $0x10] sm:$0xf]
  %v29 = vld [vmem:[%s2] sm:$0xff]
  %v30 = vld [vmem:[%s2 + $0x8] sm:$0xff]
  %v31 = vld [vmem:[%s2 + $0x10] sm:$0xff]
  %v32 = vld [vmem:[%s2 + $0x18] sm:$0xff]
  %v33 = vld [vmem:[%s2 + $0x20] sm:$0xff]
  %v34 = vld [vmem:[%s2 + $0x28] sm:$0xff]
  %v35 = vld [vmem:[%s2 + $0x30] sm:$0xff]
  %v36 = vld [vmem:[%s2 + $0x38] sm:$0xff]
  %v37 = vld [vmem:[%s2 + $0x40] sm:$0xff]
  %v38 = vld [vmem:[%s2 + $0x48] sm:$0xff]
  %v39 = vld [vmem:[%s2 + $0x50] sm:$0xff]
  %v40 = vld [vmem:[%s2 + $0x58] sm:$0xff]
  %v41 = vld [vmem:[%s2 + $0x60] sm:$0xff]
  %v42 = vld [vmem:[%s2 + $0x68] sm:$0xff]
  %v43 = vld [vmem:[%s2 + $0x70] sm:$0xff]
  %v44 = vld [vmem:[%s2 + $0x78] sm:$0xff]
  %v45 = vld [vmem:[%s2 + $0x80] sm:$0xff]
  %v46 = vld [vmem:[%s2 + $0x88] sm:$0xff]
  %v47 = vld [vmem:[%s2 + $0x90] sm:$0xff]
  %v48 = vld [vmem:[%s2 + $0x98] sm:$0xff]
  %v49 = vld [vmem:[%s2 + $0xa0] sm:$0xff]
  %v50 = vld [vmem:[%s2 + $0xa8] sm:$0xff]
  %v51 = vld [vmem:[%s2 + $0xb0] sm:$0xff]
  %v52 = vld [vmem:[%s2 + $0xb8] sm:$0xff]
  %v53 = vld [vmem:[%s2 + $0xc0] sm:$0xff]
  %v54 = vld [vmem:[%s2 + $0xc8] sm:$0xff]
  %v55 = vld [vmem:[%s2 + $0xd0] sm:$0xff]
  %v56 = vld [vmem:[%s2 + $0xd8] sm:$0xff]
  %v57 = vld [vmem:[%s2 + $0xe0] sm:$0xff]
  %v58 = vld [vmem:[%s2 + $0xe8] sm:$0xff]
  %v59 = vld [vmem:[%s2 + $0xf0] sm:$0xff]
  %v60 = vld [vmem:[%s2 + $0xf8] sm:$0xff]
  %v61 = vld [vmem:[%s3] sm:$0xf]
  %v63 = vlaneseq
  %v64 = vshrl.u32 %v63, 7
  %v65 = vsub.s32 0, %v64
  %v66 = vrot.slane %v61, %v65
  %v67 = vlaneseq
  %v68 = vshrl.u32 %v67, 7
  %v69 = vsub.s32 1, %v68
  %v70 = vrot.slane %v61, %v69
  %v71 = vlaneseq
  %v72 = vshrl.u32 %v71, 7
  %v73 = vsub.s32 2, %v72
  %v74 = vrot.slane %v61, %v73
  %v75 = vlaneseq
  %v76 = vshrl.u32 %v75, 7
  %v77 = vsub.s32 3, %v76
  %v78 = vrot.slane %v61, %v77
  %v88 = vunpack.c.l.b16 %v24
  %v89 = vunpack.c.l.b16 %v25
  %v90 = vunpack.c.l.b16 %v26
  %v91 = vunpack.c.l.b16 %v27
  %v92 = vunpack.c.l.b16 %v28
  %v93 = vpack.c.b16 %v89, %v88
  %v94 = vpack.c.b16 %v91, %v90
  %v95 = vpack.c.b16 %v92, %v92
  %v131 = vunpack.c.l.b16 %v29
  %v132 = vunpack.c.h.b16 %v29
  %v133 = vunpack.c.l.b16 %v30
  %v134 = vunpack.c.h.b16 %v30
  %v135 = vunpack.c.l.b16 %v31
  %v136 = vunpack.c.h.b16 %v31
  %v137 = vunpack.c.l.b16 %v32
  %v138 = vunpack.c.h.b16 %v32
  %v139 = vunpack.c.l.b16 %v33
  %v140 = vunpack.c.h.b16 %v33
  %v141 = vunpack.c.l.b16 %v34
  %v142 = vunpack.c.h.b16 %v34
  %v143 = vunpack.c.l.b16 %v35
  %v144 = vunpack.c.h.b16 %v35
  %v145 = vunpack.c.l.b16 %v36
  %v146 = vunpack.c.h.b16 %v36
  %v147 = vunpack.c.l.b16 %v37
  %v148 = vunpack.c.h.b16 %v37
  %v149 = vunpack.c.l.b16 %v38
  %v150 = vunpack.c.h.b16 %v38
  %v151 = vunpack.c.l.b16 %v39
  %v152 = vunpack.c.h.b16 %v39
  %v153 = vunpack.c.l.b16 %v40
  %v154 = vunpack.c.h.b16 %v40
  %v155 = vunpack.c.l.b16 %v41
  %v156 = vunpack.c.h.b16 %v41
  %v157 = vunpack.c.l.b16 %v42
  %v158 = vunpack.c.h.b16 %v42
  %v159 = vunpack.c.l.b16 %v43
  %v160 = vunpack.c.h.b16 %v43
  %v161 = vunpack.c.l.b16 %v44
  %v162 = vunpack.c.h.b16 %v44
  %v163 = vunpack.c.l.b16 %v45
  %v164 = vunpack.c.h.b16 %v45
  %v165 = vunpack.c.l.b16 %v46
  %v166 = vunpack.c.h.b16 %v46
  %v167 = vunpack.c.l.b16 %v47
  %v168 = vunpack.c.h.b16 %v47
  %v169 = vunpack.c.l.b16 %v48
  %v170 = vunpack.c.h.b16 %v48
  %v171 = vunpack.c.l.b16 %v49
  %v172 = vunpack.c.h.b16 %v49
  %v173 = vunpack.c.l.b16 %v50
  %v174 = vunpack.c.h.b16 %v50
  %v175 = vunpack.c.l.b16 %v51
  %v176 = vunpack.c.h.b16 %v51
  %v177 = vunpack.c.l.b16 %v52
  %v178 = vunpack.c.h.b16 %v52
  %v179 = vunpack.c.l.b16 %v53
  %v180 = vunpack.c.h.b16 %v53
  %v181 = vunpack.c.l.b16 %v54
  %v182 = vunpack.c.h.b16 %v54
  %v183 = vunpack.c.l.b16 %v55
  %v184 = vunpack.c.h.b16 %v55
  %v185 = vunpack.c.l.b16 %v56
  %v186 = vunpack.c.h.b16 %v56
  %v187 = vunpack.c.l.b16 %v57
  %v188 = vunpack.c.h.b16 %v57
  %v189 = vunpack.c.l.b16 %v58
  %v190 = vunpack.c.h.b16 %v58
  %v191 = vunpack.c.l.b16 %v59
  %v192 = vunpack.c.h.b16 %v59
  %v193 = vunpack.c.l.b16 %v60
  %v194 = vunpack.c.h.b16 %v60
  %v195 = vpack.c.b16 %v135, %v131
  %v196 = vpack.c.b16 %v136, %v132
  %v197 = vpack.c.b16 %v137, %v133
  %v198 = vpack.c.b16 %v138, %v134
  %v199 = vpack.c.b16 %v143, %v139
  %v200 = vpack.c.b16 %v144, %v140
  %v201 = vpack.c.b16 %v145, %v141
  %v202 = vpack.c.b16 %v146, %v142
  %v203 = vpack.c.b16 %v151, %v147
  %v204 = vpack.c.b16 %v152, %v148
  %v205 = vpack.c.b16 %v153, %v149
  %v206 = vpack.c.b16 %v154, %v150
  %v207 = vpack.c.b16 %v159, %v155
  %v208 = vpack.c.b16 %v160, %v156
  %v209 = vpack.c.b16 %v161, %v157
  %v210 = vpack.c.b16 %v162, %v158
  %v211 = vpack.c.b16 %v167, %v163
  %v212 = vpack.c.b16 %v168, %v164
  %v213 = vpack.c.b16 %v169, %v165
  %v214 = vpack.c.b16 %v170, %v166
  %v215 = vpack.c.b16 %v175, %v171
  %v216 = vpack.c.b16 %v176, %v172
  %v217 = vpack.c.b16 %v177, %v173
  %v218 = vpack.c.b16 %v178, %v174
  %v219 = vpack.c.b16 %v183, %v179
  %v220 = vpack.c.b16 %v184, %v180
  %v221 = vpack.c.b16 %v185, %v181
  %v222 = vpack.c.b16 %v186, %v182
  %v223 = vpack.c.b16 %v191, %v187
  %v224 = vpack.c.b16 %v192, %v188
  %v225 = vpack.c.b16 %v193, %v189
  %v226 = vpack.c.b16 %v194, %v190
  %259 = vmatprep.subr.bf16.mxu0 %v196
  %260 = vmatpush1.bf16.msra.mxu0 %v195
  %261 = vmatprep.subr.bf16.mxu0 %v200
  %262 = vmatpush1.bf16.msra.mxu0 %v199
  %263 = vmatprep.subr.bf16.mxu0 %v204
  %264 = vmatpush1.bf16.msra.mxu0 %v203
  %265 = vmatprep.subr.bf16.mxu0 %v208
  %266 = vmatpush1.bf16.msra.mxu0 %v207
  %267 = vmatprep.subr.bf16.mxu0 %v212
  %268 = vmatpush1.bf16.msra.mxu0 %v211
  %269 = vmatprep.subr.bf16.mxu0 %v216
  %270 = vmatpush1.bf16.msra.mxu0 %v215
  %271 = vmatprep.subr.bf16.mxu0 %v220
  %272 = vmatpush1.bf16.msra.mxu0 %v219
  %273 = vmatprep.subr.bf16.mxu0 %v224
  %274 = vmatpush1.bf16.msra.mxu0 %v223
  %275 = vmatprep.subr.bf16.mxu0 0
  %276 = vmatpush1.bf16.msra.mxu0 0
  %277 = vmatprep.subr.bf16.mxu0 0
  %278 = vmatpush1.bf16.msra.mxu0 0
  %279 = vmatprep.subr.bf16.mxu0 0
  %280 = vmatpush1.bf16.msra.mxu0 0
  %281 = vmatprep.subr.bf16.mxu0 0
  %282 = vmatpush1.bf16.msra.mxu0 0
  %283 = vmatprep.subr.bf16.mxu0 0
  %284 = vmatpush1.bf16.msra.mxu0 0
  %285 = vmatprep.subr.bf16.mxu0 0
  %286 = vmatpush1.bf16.msra.mxu0 0
  %287 = vmatprep.subr.bf16.mxu0 0
  %288 = vmatpush1.bf16.msra.mxu0 0
  %289 = vmatprep.subr.bf16.mxu0 0
  %290 = vmatpush1.bf16.msra.mxu0 0
  %291 = vmatprep.mubr.bf16.mxu0 0
  %292 = vmatmul.mubr.bf16.gmra.mrb[0].mxu0 %v93
  %v293 = vpop.f32.mrb[0].mxu0
  %v294 = vadd.f32 %v66, %v293
  %v295 = vpop.f32.mrb[0].mxu0
  %v296 = vadd.f32 %v70, %v295
  %v297 = vpop.f32.mrb[0].mxu0
  %v298 = vadd.f32 %v66, %v297
  %v299 = vpop.f32.mrb[0].mxu0
  %v300 = vadd.f32 %v70, %v299
  %301 = vmatprep.mubr.bf16.mxu0 0
  %302 = vmatmul.mubr.bf16.gmra.mrb[0].mxu0 %v94
  %v303 = vpop.f32.mrb[0].mxu0
  %v304 = vadd.f32 %v66, %v303
  %v305 = vpop.f32.mrb[0].mxu0
  %v306 = vadd.f32 %v70, %v305
  %v307 = vpop.f32.mrb[0].mxu0
  %v308 = vadd.f32 %v66, %v307
  %v309 = vpop.f32.mrb[0].mxu0
  %v310 = vadd.f32 %v70, %v309
  %311 = vmatprep.mubr.bf16.mxu0 0
  %312 = vmatmul.mubr.bf16.gmra.mrb[0].mxu0 %v95
  %v313 = vpop.f32.mrb[0].mxu0
  %v314 = vadd.f32 %v66, %v313
  %v315 = vpop.f32.mrb[0].mxu0
  %v316 = vadd.f32 %v70, %v315
  %v317 = vpop.f32.mrb[0].mxu0
  %v318 = vpop.f32.mrb[0].mxu0
  %319 = vdwg.mxu0
  %320 = vmatprep.subr.bf16.mxu0 %v198
  %321 = vmatpush1.bf16.msra.mxu0 %v197
  %322 = vmatprep.subr.bf16.mxu0 %v202
  %323 = vmatpush1.bf16.msra.mxu0 %v201
  %324 = vmatprep.subr.bf16.mxu0 %v206
  %325 = vmatpush1.bf16.msra.mxu0 %v205
  %326 = vmatprep.subr.bf16.mxu0 %v210
  %327 = vmatpush1.bf16.msra.mxu0 %v209
  %328 = vmatprep.subr.bf16.mxu0 %v214
  %329 = vmatpush1.bf16.msra.mxu0 %v213
  %330 = vmatprep.subr.bf16.mxu0 %v218
  %331 = vmatpush1.bf16.msra.mxu0 %v217
  %332 = vmatprep.subr.bf16.mxu0 %v222
  %333 = vmatpush1.bf16.msra.mxu0 %v221
  %334 = vmatprep.subr.bf16.mxu0 %v226
  %335 = vmatpush1.bf16.msra.mxu0 %v225
  %336 = vmatprep.subr.bf16.mxu0 0
  %337 = vmatpush1.bf16.msra.mxu0 0
  %338 = vmatprep.subr.bf16.mxu0 0
  %339 = vmatpush1.bf16.msra.mxu0 0
  %340 = vmatprep.subr.bf16.mxu0 0
  %341 = vmatpush1.bf16.msra.mxu0 0
  %342 = vmatprep.subr.bf16.mxu0 0
  %343 = vmatpush1.bf16.msra.mxu0 0
  %344 = vmatprep.subr.bf16.mxu0 0
  %345 = vmatpush1.bf16.msra.mxu0 0
  %346 = vmatprep.subr.bf16.mxu0 0
  %347 = vmatpush1.bf16.msra.mxu0 0
  %348 = vmatprep.subr.bf16.mxu0 0
  %349 = vmatpush1.bf16.msra.mxu0 0
  %350 = vmatprep.subr.bf16.mxu0 0
  %351 = vmatpush1.bf16.msra.mxu0 0
  %352 = vmatprep.mubr.bf16.mxu0 0
  %353 = vmatmul.mubr.bf16.gmra.mrb[0].mxu0 %v93
  %v354 = vpop.f32.mrb[0].mxu0
  %v355 = vadd.f32 %v74, %v354
  %v356 = vpop.f32.mrb[0].mxu0
  %v357 = vadd.f32 %v78, %v356
  %v358 = vpop.f32.mrb[0].mxu0
  %v359 = vadd.f32 %v74, %v358
  %v360 = vpop.f32.mrb[0].mxu0
  %v361 = vadd.f32 %v78, %v360
  %362 = vmatprep.mubr.bf16.mxu0 0
  %363 = vmatmul.mubr.bf16.gmra.mrb[0].mxu0 %v94
  %v364 = vpop.f32.mrb[0].mxu0
  %v365 = vadd.f32 %v74, %v364
  %v366 = vpop.f32.mrb[0].mxu0
  %v367 = vadd.f32 %v78, %v366
  %v368 = vpop.f32.mrb[0].mxu0
  %v369 = vadd.f32 %v74, %v368
  %v370 = vpop.f32.mrb[0].mxu0
  %v371 = vadd.f32 %v78, %v370
  %372 = vmatprep.mubr.bf16.mxu0 0
  %373 = vmatmul.mubr.bf16.gmra.mrb[0].mxu0 %v95
  %v374 = vpop.f32.mrb[0].mxu0
  %v375 = vadd.f32 %v74, %v374
  %v376 = vpop.f32.mrb[0].mxu0
  %v377 = vadd.f32 %v78, %v376
  %v378 = vpop.f32.mrb[0].mxu0
  %v379 = vpop.f32.mrb[0].mxu0
  %380 = vdwg.mxu0
  %v381 = vmul.f32 %v294, 1.702
  %v382 = vmul.f32 %v296, 1.702
  %v383 = vmul.f32 %v355, 1.702
  %v384 = vmul.f32 %v357, 1.702
  %v385 = vmul.f32 %v298, 1.702
  %v386 = vmul.f32 %v300, 1.702
  %v387 = vmul.f32 %v359, 1.702
  %v388 = vmul.f32 %v361, 1.702
  %v389 = vmul.f32 %v304, 1.702
  %v390 = vmul.f32 %v306, 1.702
  %v391 = vmul.f32 %v365, 1.702
  %v392 = vmul.f32 %v367, 1.702
  %v393 = vmul.f32 %v308, 1.702
  %v394 = vmul.f32 %v310, 1.702
  %v395 = vmul.f32 %v369, 1.702
  %v396 = vmul.f32 %v371, 1.702
  %v397 = vmul.f32 %v314, 1.702
  %v398 = vmul.f32 %v316, 1.702
  %v399 = vmul.f32 %v375, 1.702
  %v400 = vmul.f32 %v377, 1.702
  %v401 = vxor.u32 %v381, 2147483648
  %v402 = vxor.u32 %v382, 2147483648
  %v403 = vxor.u32 %v383, 2147483648
  %v404 = vxor.u32 %v384, 2147483648
  %v405 = vxor.u32 %v385, 2147483648
  %v406 = vxor.u32 %v386, 2147483648
  %v407 = vxor.u32 %v387, 2147483648
  %v408 = vxor.u32 %v388, 2147483648
  %v409 = vxor.u32 %v389, 2147483648
  %v410 = vxor.u32 %v390, 2147483648
  %v411 = vxor.u32 %v391, 2147483648
  %v412 = vxor.u32 %v392, 2147483648
  %v413 = vxor.u32 %v393, 2147483648
  %v414 = vxor.u32 %v394, 2147483648
  %v415 = vxor.u32 %v395, 2147483648
  %v416 = vxor.u32 %v396, 2147483648
  %v417 = vxor.u32 %v397, 2147483648
  %v418 = vxor.u32 %v398, 2147483648
  %v419 = vxor.u32 %v399, 2147483648
  %v420 = vxor.u32 %v400, 2147483648
  %v421 = vmul.f32 %v401, 1.442695
  %v422 = vpow.pop %v421
  %v423 = vmul.f32 %v402, 1.442695
  %v424 = vpow.pop %v423
  %v425 = vmul.f32 %v403, 1.442695
  %v426 = vpow.pop %v425
  %v427 = vmul.f32 %v404, 1.442695
  %v428 = vpow.pop %v427
  %v429 = vmul.f32 %v405, 1.442695
  %v430 = vpow.pop %v429
  %v431 = vmul.f32 %v406, 1.442695
  %v432 = vpow.pop %v431
  %v433 = vmul.f32 %v407, 1.442695
  %v434 = vpow.pop %v433
  %v435 = vmul.f32 %v408, 1.442695
  %v436 = vpow.pop %v435
  %v437 = vmul.f32 %v409, 1.442695
  %v438 = vpow.pop %v437
  %v439 = vmul.f32 %v410, 1.442695
  %v440 = vpow.pop %v439
  %v441 = vmul.f32 %v411, 1.442695
  %v442 = vpow.pop %v441
  %v443 = vmul.f32 %v412, 1.442695
  %v444 = vpow.pop %v443
  %v445 = vmul.f32 %v413, 1.442695
  %v446 = vpow.pop %v445
  %v447 = vmul.f32 %v414, 1.442695
  %v448 = vpow.pop %v447
  %v449 = vmul.f32 %v415, 1.442695
  %v450 = vpow.pop %v449
  %v451 = vmul.f32 %v416, 1.442695
  %v452 = vpow.pop %v451
  %v453 = vmul.f32 %v417, 1.442695
  %v454 = vpow.pop %v453
  %v455 = vmul.f32 %v418, 1.442695
  %v456 = vpow.pop %v455
  %v457 = vmul.f32 %v419, 1.442695
  %v458 = vpow.pop %v457
  %v459 = vmul.f32 %v420, 1.442695
  %v460 = vpow.pop %v459
  %v461 = vadd.f32 %v422, 1.0
  %v462 = vadd.f32 %v424, 1.0
  %v463 = vadd.f32 %v426, 1.0
  %v464 = vadd.f32 %v428, 1.0
  %v465 = vadd.f32 %v430, 1.0
  %v466 = vadd.f32 %v432, 1.0
  %v467 = vadd.f32 %v434, 1.0
  %v468 = vadd.f32 %v436, 1.0
  %v469 = vadd.f32 %v438, 1.0
  %v470 = vadd.f32 %v440, 1.0
  %v471 = vadd.f32 %v442, 1.0
  %v472 = vadd.f32 %v444, 1.0
  %v473 = vadd.f32 %v446, 1.0
  %v474 = vadd.f32 %v448, 1.0
  %v475 = vadd.f32 %v450, 1.0
  %v476 = vadd.f32 %v452, 1.0
  %v477 = vadd.f32 %v454, 1.0
  %v478 = vadd.f32 %v456, 1.0
  %v479 = vadd.f32 %v458, 1.0
  %v480 = vadd.f32 %v460, 1.0
  %v481 = vrcp.pop %v461
  %v482 = vmul.f32 1.0, %v481
  %v483 = vrcp.pop %v462
  %v484 = vmul.f32 1.0, %v483
  %v485 = vrcp.pop %v463
  %v486 = vmul.f32 1.0, %v485
  %v487 = vrcp.pop %v464
  %v488 = vmul.f32 1.0, %v487
  %v489 = vrcp.pop %v465
  %v490 = vmul.f32 1.0, %v489
  %v491 = vrcp.pop %v466
  %v492 = vmul.f32 1.0, %v491
  %v493 = vrcp.pop %v467
  %v494 = vmul.f32 1.0, %v493
  %v495 = vrcp.pop %v468
  %v496 = vmul.f32 1.0, %v495
  %v497 = vrcp.pop %v469
  %v498 = vmul.f32 1.0, %v497
  %v499 = vrcp.pop %v470
  %v500 = vmul.f32 1.0, %v499
  %v501 = vrcp.pop %v471
  %v502 = vmul.f32 1.0, %v501
  %v503 = vrcp.pop %v472
  %v504 = vmul.f32 1.0, %v503
  %v505 = vrcp.pop %v473
  %v506 = vmul.f32 1.0, %v505
  %v507 = vrcp.pop %v474
  %v508 = vmul.f32 1.0, %v507
  %v509 = vrcp.pop %v475
  %v510 = vmul.f32 1.0, %v509
  %v511 = vrcp.pop %v476
  %v512 = vmul.f32 1.0, %v511
  %v513 = vrcp.pop %v477
  %v514 = vmul.f32 1.0, %v513
  %v515 = vrcp.pop %v478
  %v516 = vmul.f32 1.0, %v515
  %v517 = vrcp.pop %v479
  %v518 = vmul.f32 1.0, %v517
  %v519 = vrcp.pop %v480
  %v520 = vmul.f32 1.0, %v519
  %v521 = vmul.f32 %v294, %v482
  %v522 = vmul.f32 %v296, %v484
  %v523 = vmul.f32 %v355, %v486
  %v524 = vmul.f32 %v357, %v488
  %v525 = vmul.f32 %v298, %v490
  %v526 = vmul.f32 %v300, %v492
  %v527 = vmul.f32 %v359, %v494
  %v528 = vmul.f32 %v361, %v496
  %v529 = vmul.f32 %v304, %v498
  %v530 = vmul.f32 %v306, %v500
  %v531 = vmul.f32 %v365, %v502
  %v532 = vmul.f32 %v367, %v504
  %v533 = vmul.f32 %v308, %v506
  %v534 = vmul.f32 %v310, %v508
  %v535 = vmul.f32 %v369, %v510
  %v536 = vmul.f32 %v371, %v512
  %v537 = vmul.f32 %v314, %v514
  %v538 = vmul.f32 %v316, %v516
  %v539 = vmul.f32 %v375, %v518
  %v540 = vmul.f32 %v377, %v520
  %v541 = vpack.c.bf16 %v525, %v521
  %v542 = vpack.c.bf16 %v526, %v522
  %v543 = vpack.c.bf16 %v527, %v523
  %v544 = vpack.c.bf16 %v528, %v524
  %v545 = vpack.c.bf16 %v533, %v529
  %v546 = vpack.c.bf16 %v534, %v530
  %v547 = vpack.c.bf16 %v535, %v531
  %v548 = vpack.c.bf16 %v536, %v532
  %v549 = vpack.c.bf16 %v537, %v537
  %v550 = vpack.c.bf16 %v538, %v538
  %v551 = vpack.c.bf16 %v539, %v539
  %v552 = vpack.c.bf16 %v540, %v540
  %v553 = vld [vmem:[%s4] sm:$0xf]
  %v554 = vld [vmem:[%s4 + $0x4] sm:$0xf]
  %v555 = vld [vmem:[%s4 + $0x8] sm:$0xf]
  %v556 = vld [vmem:[%s4 + $0xc] sm:$0xf]
  %v557 = vld [vmem:[%s4 + $0x10] sm:$0xf]
  %v558 = vld [vmem:[%s4 + $0x14] sm:$0xf]
  %v559 = vld [vmem:[%s4 + $0x18] sm:$0xf]
  %v560 = vld [vmem:[%s4 + $0x1c] sm:$0xf]
  %v561 = vld [vmem:[%s4 + $0x20] sm:$0xf]
  %v562 = vld [vmem:[%s4 + $0x24] sm:$0xf]
  %v563 = vld [vmem:[%s4 + $0x28] sm:$0xf]
  %v564 = vld [vmem:[%s4 + $0x2c] sm:$0xf]
  %v565 = vld [vmem:[%s4 + $0x30] sm:$0xf]
  %v566 = vld [vmem:[%s4 + $0x34] sm:$0xf]
  %v567 = vld [vmem:[%s4 + $0x38] sm:$0xf]
  %v568 = vld [vmem:[%s4 + $0x3c] sm:$0xf]
  %v569 = vld [vmem:[%s4 + $0x40] sm:$0xf]
  %v570 = vld [vmem:[%s4 + $0x44] sm:$0xf]
  %v571 = vld [vmem:[%s4 + $0x48] sm:$0xf]
  %v572 = vld [vmem:[%s4 + $0x4c] sm:$0xf]
  %v573 = vld [vmem:[%s4 + $0x50] sm:$0xf]
  %v574 = vld [vmem:[%s4 + $0x54] sm:$0xf]
  %v575 = vld [vmem:[%s4 + $0x58] sm:$0xf]
  %v576 = vld [vmem:[%s4 + $0x5c] sm:$0xf]
  %v577 = vld [vmem:[%s4 + $0x60] sm:$0xf]
  %v578 = vld [vmem:[%s4 + $0x64] sm:$0xf]
  %v579 = vld [vmem:[%s4 + $0x68] sm:$0xf]
  %v580 = vld [vmem:[%s4 + $0x6c] sm:$0xf]
  %v581 = vld [vmem:[%s4 + $0x70] sm:$0xf]
  %v582 = vld [vmem:[%s4 + $0x74] sm:$0xf]
  %v583 = vld [vmem:[%s4 + $0x78] sm:$0xf]
  %v584 = vld [vmem:[%s4 + $0x7c] sm:$0xf]
  %v585 = vld [vmem:[%s4 + $0x80] sm:$0xf]
  %v586 = vld [vmem:[%s4 + $0x84] sm:$0xf]
  %v587 = vld [vmem:[%s4 + $0x88] sm:$0xf]
  %v588 = vld [vmem:[%s4 + $0x8c] sm:$0xf]
  %v589 = vld [vmem:[%s4 + $0x90] sm:$0xf]
  %v590 = vld [vmem:[%s4 + $0x94] sm:$0xf]
  %v591 = vld [vmem:[%s4 + $0x98] sm:$0xf]
  %v592 = vld [vmem:[%s4 + $0x9c] sm:$0xf]
  %v593 = vld [vmem:[%s4 + $0xa0] sm:$0xf]
  %v594 = vld [vmem:[%s4 + $0xa4] sm:$0xf]
  %v595 = vld [vmem:[%s4 + $0xa8] sm:$0xf]
  %v596 = vld [vmem:[%s4 + $0xac] sm:$0xf]
  %v597 = vld [vmem:[%s4 + $0xb0] sm:$0xf]
  %v598 = vld [vmem:[%s4 + $0xb4] sm:$0xf]
  %v599 = vld [vmem:[%s4 + $0xb8] sm:$0xf]
  %v600 = vld [vmem:[%s4 + $0xbc] sm:$0xf]
  %v601 = vld [vmem:[%s4 + $0xc0] sm:$0xf]
  %v602 = vld [vmem:[%s4 + $0xc4] sm:$0xf]
  %v603 = vld [vmem:[%s4 + $0xc8] sm:$0xf]
  %v604 = vld [vmem:[%s4 + $0xcc] sm:$0xf]
  %v605 = vld [vmem:[%s4 + $0xd0] sm:$0xf]
  %v606 = vld [vmem:[%s4 + $0xd4] sm:$0xf]
  %v607 = vld [vmem:[%s4 + $0xd8] sm:$0xf]
  %v608 = vld [vmem:[%s4 + $0xdc] sm:$0xf]
  %v609 = vld [vmem:[%s4 + $0xe0] sm:$0xf]
  %v610 = vld [vmem:[%s4 + $0xe4] sm:$0xf]
  %v611 = vld [vmem:[%s4 + $0xe8] sm:$0xf]
  %v612 = vld [vmem:[%s4 + $0xec] sm:$0xf]
  %v613 = vld [vmem:[%s4 + $0xf0] sm:$0xf]
  %v614 = vld [vmem:[%s4 + $0xf4] sm:$0xf]
  %v615 = vld [vmem:[%s4 + $0xf8] sm:$0xf]
  %v616 = vld [vmem:[%s4 + $0xfc] sm:$0xf]
  %v617 = vld [vmem:[%s5] sm:$0x1]
  %v619 = vlaneseq
  %v620 = vshrl.u32 %v619, 7
  %v621 = vsub.s32 0, %v620
  %v622 = vrot.slane %v617, %v621
  %v688 = vunpack.c.l.b16 %v553
  %v689 = vunpack.c.l.b16 %v554
  %v690 = vunpack.c.l.b16 %v555
  %v691 = vunpack.c.l.b16 %v556
  %v692 = vunpack.c.l.b16 %v557
  %v693 = vunpack.c.l.b16 %v558
  %v694 = vunpack.c.l.b16 %v559
  %v695 = vunpack.c.l.b16 %v560
  %v696 = vunpack.c.l.b16 %v561
  %v697 = vunpack.c.l.b16 %v562
  %v698 = vunpack.c.l.b16 %v563
  %v699 = vunpack.c.l.b16 %v564
  %v700 = vunpack.c.l.b16 %v565
  %v701 = vunpack.c.l.b16 %v566
  %v702 = vunpack.c.l.b16 %v567
  %v703 = vunpack.c.l.b16 %v568
  %v704 = vunpack.c.l.b16 %v569
  %v705 = vunpack.c.l.b16 %v570
  %v706 = vunpack.c.l.b16 %v571
  %v707 = vunpack.c.l.b16 %v572
  %v708 = vunpack.c.l.b16 %v573
  %v709 = vunpack.c.l.b16 %v574
  %v710 = vunpack.c.l.b16 %v575
  %v711 = vunpack.c.l.b16 %v576
  %v712 = vunpack.c.l.b16 %v577
  %v713 = vunpack.c.l.b16 %v578
  %v714 = vunpack.c.l.b16 %v579
  %v715 = vunpack.c.l.b16 %v580
  %v716 = vunpack.c.l.b16 %v581
  %v717 = vunpack.c.l.b16 %v582
  %v718 = vunpack.c.l.b16 %v583
  %v719 = vunpack.c.l.b16 %v584
  %v720 = vunpack.c.l.b16 %v585
  %v721 = vunpack.c.l.b16 %v586
  %v722 = vunpack.c.l.b16 %v587
  %v723 = vunpack.c.l.b16 %v588
  %v724 = vunpack.c.l.b16 %v589
  %v725 = vunpack.c.l.b16 %v590
  %v726 = vunpack.c.l.b16 %v591
  %v727 = vunpack.c.l.b16 %v592
  %v728 = vunpack.c.l.b16 %v593
  %v729 = vunpack.c.l.b16 %v594
  %v730 = vunpack.c.l.b16 %v595
  %v731 = vunpack.c.l.b16 %v596
  %v732 = vunpack.c.l.b16 %v597
  %v733 = vunpack.c.l.b16 %v598
  %v734 = vunpack.c.l.b16 %v599
  %v735 = vunpack.c.l.b16 %v600
  %v736 = vunpack.c.l.b16 %v601
  %v737 = vunpack.c.l.b16 %v602
  %v738 = vunpack.c.l.b16 %v603
  %v739 = vunpack.c.l.b16 %v604
  %v740 = vunpack.c.l.b16 %v605
  %v741 = vunpack.c.l.b16 %v606
  %v742 = vunpack.c.l.b16 %v607
  %v743 = vunpack.c.l.b16 %v608
  %v744 = vunpack.c.l.b16 %v609
  %v745 = vunpack.c.l.b16 %v610
  %v746 = vunpack.c.l.b16 %v611
  %v747 = vunpack.c.l.b16 %v612
  %v748 = vunpack.c.l.b16 %v613
  %v749 = vunpack.c.l.b16 %v614
  %v750 = vunpack.c.l.b16 %v615
  %v751 = vunpack.c.l.b16 %v616
  %v752 = vpack.c.b16 %v689, %v688
  %v753 = vpack.c.b16 %v691, %v690
  %v754 = vpack.c.b16 %v693, %v692
  %v755 = vpack.c.b16 %v695, %v694
  %v756 = vpack.c.b16 %v697, %v696
  %v757 = vpack.c.b16 %v699, %v698
  %v758 = vpack.c.b16 %v701, %v700
  %v759 = vpack.c.b16 %v703, %v702
  %v760 = vpack.c.b16 %v705, %v704
  %v761 = vpack.c.b16 %v707, %v706
  %v762 = vpack.c.b16 %v709, %v708
  %v763 = vpack.c.b16 %v711, %v710
  %v764 = vpack.c.b16 %v713, %v712
  %v765 = vpack.c.b16 %v715, %v714
  %v766 = vpack.c.b16 %v717, %v716
  %v767 = vpack.c.b16 %v719, %v718
  %v768 = vpack.c.b16 %v721, %v720
  %v769 = vpack.c.b16 %v723, %v722
  %v770 = vpack.c.b16 %v725, %v724
  %v771 = vpack.c.b16 %v727, %v726
  %v772 = vpack.c.b16 %v729, %v728
  %v773 = vpack.c.b16 %v731, %v730
  %v774 = vpack.c.b16 %v733, %v732
  %v775 = vpack.c.b16 %v735, %v734
  %v776 = vpack.c.b16 %v737, %v736
  %v777 = vpack.c.b16 %v739, %v738
  %v778 = vpack.c.b16 %v741, %v740
  %v779 = vpack.c.b16 %v743, %v742
  %v780 = vpack.c.b16 %v745, %v744
  %v781 = vpack.c.b16 %v747, %v746
  %v782 = vpack.c.b16 %v749, %v748
  %v783 = vpack.c.b16 %v751, %v750
  %816 = vmatprep.subr.bf16.mxu0 0
  %817 = vmatpush1.bf16.msra.mxu0 %v752
  %818 = vmatprep.subr.bf16.mxu0 0
  %819 = vmatpush1.bf16.msra.mxu0 %v753
  %820 = vmatprep.subr.bf16.mxu0 0
  %821 = vmatpush1.bf16.msra.mxu0 %v754
  %822 = vmatprep.subr.bf16.mxu0 0
  %823 = vmatpush1.bf16.msra.mxu0 %v755
  %824 = vmatprep.subr.bf16.mxu0 0
  %825 = vmatpush1.bf16.msra.mxu0 %v756
  %826 = vmatprep.subr.bf16.mxu0 0
  %827 = vmatpush1.bf16.msra.mxu0 %v757
  %828 = vmatprep.subr.bf16.mxu0 0
  %829 = vmatpush1.bf16.msra.mxu0 %v758
  %830 = vmatprep.subr.bf16.mxu0 0
  %831 = vmatpush1.bf16.msra.mxu0 %v759
  %832 = vmatprep.subr.bf16.mxu0 0
  %833 = vmatpush1.bf16.msra.mxu0 %v760
  %834 = vmatprep.subr.bf16.mxu0 0
  %835 = vmatpush1.bf16.msra.mxu0 %v761
  %836 = vmatprep.subr.bf16.mxu0 0
  %837 = vmatpush1.bf16.msra.mxu0 %v762
  %838 = vmatprep.subr.bf16.mxu0 0
  %839 = vmatpush1.bf16.msra.mxu0 %v763
  %840 = vmatprep.subr.bf16.mxu0 0
  %841 = vmatpush1.bf16.msra.mxu0 %v764
  %842 = vmatprep.subr.bf16.mxu0 0
  %843 = vmatpush1.bf16.msra.mxu0 %v765
  %844 = vmatprep.subr.bf16.mxu0 0
  %845 = vmatpush1.bf16.msra.mxu0 %v766
  %846 = vmatprep.subr.bf16.mxu0 0
  %847 = vmatpush1.bf16.msra.mxu0 %v767
  %848 = vmatprep.mubr.bf16.mxu0 %v542
  %849 = vmatmul.mubr.bf16.gmra.mrb[0].mxu0 %v541
  %v850 = vpop.f32.mrb[0].mxu0
  %v851 = vadd.f32 %v622, %v850
  %v852 = vpop.f32.mrb[0].mxu0
  %v853 = vpop.f32.mrb[0].mxu0
  %v854 = vadd.f32 %v622, %v853
  %v855 = vpop.f32.mrb[0].mxu0
  %856 = vmatprep.mubr.bf16.mxu0 %v546
  %857 = vmatmul.mubr.bf16.gmra.mrb[0].mxu0 %v545
  %v858 = vpop.f32.mrb[0].mxu0
  %v859 = vadd.f32 %v622, %v858
  %v860 = vpop.f32.mrb[0].mxu0
  %v861 = vpop.f32.mrb[0].mxu0
  %v862 = vadd.f32 %v622, %v861
  %v863 = vpop.f32.mrb[0].mxu0
  %864 = vmatprep.mubr.bf16.mxu0 %v550
  %865 = vmatmul.mubr.bf16.gmra.mrb[0].mxu0 %v549
  %v866 = vpop.f32.mrb[0].mxu0
  %v867 = vadd.f32 %v622, %v866
  %v868 = vpop.f32.mrb[0].mxu0
  %v869 = vpop.f32.mrb[0].mxu0
  %v870 = vpop.f32.mrb[0].mxu0
  %871 = vdwg.mxu0
  %872 = vmatprep.subr.bf16.mxu0 0
  %873 = vmatpush1.bf16.msra.mxu0 %v768
  %874 = vmatprep.subr.bf16.mxu0 0
  %875 = vmatpush1.bf16.msra.mxu0 %v769
  %876 = vmatprep.subr.bf16.mxu0 0
  %877 = vmatpush1.bf16.msra.mxu0 %v770
  %878 = vmatprep.subr.bf16.mxu0 0
  %879 = vmatpush1.bf16.msra.mxu0 %v771
  %880 = vmatprep.subr.bf16.mxu0 0
  %881 = vmatpush1.bf16.msra.mxu0 %v772
  %882 = vmatprep.subr.bf16.mxu0 0
  %883 = vmatpush1.bf16.msra.mxu0 %v773
  %884 = vmatprep.subr.bf16.mxu0 0
  %885 = vmatpush1.bf16.msra.mxu0 %v774
  %886 = vmatprep.subr.bf16.mxu0 0
  %887 = vmatpush1.bf16.msra.mxu0 %v775
  %888 = vmatprep.subr.bf16.mxu0 0
  %889 = vmatpush1.bf16.msra.mxu0 %v776
  %890 = vmatprep.subr.bf16.mxu0 0
  %891 = vmatpush1.bf16.msra.mxu0 %v777
  %892 = vmatprep.subr.bf16.mxu0 0
  %893 = vmatpush1.bf16.msra.mxu0 %v778
  %894 = vmatprep.subr.bf16.mxu0 0
  %895 = vmatpush1.bf16.msra.mxu0 %v779
  %896 = vmatprep.subr.bf16.mxu0 0
  %897 = vmatpush1.bf16.msra.mxu0 %v780
  %898 = vmatprep.subr.bf16.mxu0 0
  %899 = vmatpush1.bf16.msra.mxu0 %v781
  %900 = vmatprep.subr.bf16.mxu0 0
  %901 = vmatpush1.bf16.msra.mxu0 %v782
  %902 = vmatprep.subr.bf16.mxu0 0
  %903 = vmatpush1.bf16.msra.mxu0 %v783
  %904 = vmatprep.mubr.bf16.mxu0 %v544
  %905 = vmatmul.mubr.bf16.gmra.mrb[0].mxu0 %v543
  %v906 = vpop.f32.mrb[0].mxu0
  %v907 = vadd.f32 %v851, %v906
  %v908 = vpop.f32.mrb[0].mxu0
  %v909 = vpop.f32.mrb[0].mxu0
  %v910 = vadd.f32 %v854, %v909
  %v911 = vpop.f32.mrb[0].mxu0
  %912 = vmatprep.mubr.bf16.mxu0 %v548
  %913 = vmatmul.mubr.bf16.gmra.mrb[0].mxu0 %v547
  %v914 = vpop.f32.mrb[0].mxu0
  %v915 = vadd.f32 %v859, %v914
  %v916 = vpop.f32.mrb[0].mxu0
  %v917 = vpop.f32.mrb[0].mxu0
  %v918 = vadd.f32 %v862, %v917
  %v919 = vpop.f32.mrb[0].mxu0
  %920 = vmatprep.mubr.bf16.mxu0 %v552
  %921 = vmatmul.mubr.bf16.gmra.mrb[0].mxu0 %v551
  %v922 = vpop.f32.mrb[0].mxu0
  %v923 = vadd.f32 %v867, %v922
  %v924 = vpop.f32.mrb[0].mxu0
  %v925 = vpop.f32.mrb[0].mxu0
  %v926 = vpop.f32.mrb[0].mxu0
  %927 = vdwg.mxu0
  %v928 = vld [vmem:[%s1] sm:$0xf]
  %v929 = vld [vmem:[%s1 + $0x4] sm:$0xf]
  %v930 = vld [vmem:[%s1 + $0x8] sm:$0xf]
  %v931 = vld [vmem:[%s1 + $0xc] sm:$0xf]
  %v932 = vld [vmem:[%s1 + $0x10] sm:$0xf]
  %v933 = vunpack.c.l.bf16 %v928
  %v934 = vunpack.c.l.bf16 %v929
  %v935 = vunpack.c.l.bf16 %v930
  %v936 = vunpack.c.l.bf16 %v931
  %v937 = vunpack.c.l.bf16 %v932
  %v938 = vadd.f32 %v907, %v933
  %v939 = vadd.f32 %v910, %v934
  %v940 = vadd.f32 %v915, %v935
  %v941 = vadd.f32 %v918, %v936
  %v942 = vadd.f32 %v923, %v937
  %v943 = vpack.c.bf16 %v939, %v938
  %v944 = vpack.c.bf16 %v941, %v940
  %v945 = vpack.c.bf16 %v942, %v942
  %v949 = vunpack.c.l.b16 %v943
  %v950 = vunpack.c.h.b16 %v943
  %v951 = vunpack.c.l.b16 %v944
  %v952 = vunpack.c.h.b16 %v944
  %v953 = vunpack.c.l.b16 %v945
  %v954 = vpack.c.b16 %v949, %v949
  %v955 = vpack.c.b16 %v950, %v950
  %v956 = vpack.c.b16 %v951, %v951
  %v957 = vpack.c.b16 %v952, %v952
  %v958 = vpack.c.b16 %v953, %v953
  %964 = vst [vmem:[%s6] sm:$0xf] %v954
  %965 = vst [vmem:[%s6 + $0x4] sm:$0xf] %v955
  %966 = vst [vmem:[%s6 + $0x8] sm:$0xf] %v956
  %967 = vst [vmem:[%s6 + $0xc] sm:$0xf] %v957
  %968 = vst [vmem:[%s6 + $0x10] sm:$0xf] %v958
  // Predicated region
  $region26: #{vit_zero_clip_long_forward.25} parent=0 // pred_check
    _
  $region27: #{vit_zero_clip_long_forward.25} parent=0 // pred_check_branch
    %970 = sbr.rel (0) target = $region29
  $region28: #{vit_zero_clip_long_forward.25} parent=0 // pred_region
    _
  $region29: #{vit_zero_clip_long_forward.25} parent=0 // pred_fallthru
    _
  // Predicated region
  $region30: #{vit_zero_clip_long_forward.25} parent=0 // pred_check
    _
  $region31: #{vit_zero_clip_long_forward.25} parent=0 // pred_check_branch
    %972 = sbr.rel (0) target = $region33
  $region32: #{vit_zero_clip_long_forward.25} parent=0 // pred_region
    _
  $region33: #{vit_zero_clip_long_forward.25} parent=0 // pred_fallthru
    _

// kernel: vit_zero_clip_long_forward.33
$region0: #{vit_zero_clip_long_forward.33}
  #allocation0 [shape = 'u32[]', space=smem, size = 0x4, offset = 0x4, fixed_abs, tag = 'smem constant byte address 0x4 - core index']
  #allocation1 [shape = 'u32[144,128]{1,0:T(1,128)}', space=vmem, size = 0x12000, scoped, tag = 'internal scratch']
  %s0 = inlined_call_operand.vmem [shape: bf16[8,128], index: 0, kind: input, shape index: {}]
  %s1 = inlined_call_operand.vmem [shape: f32[1,128], index: 1, kind: input, shape index: {}]
  %s2 = inlined_call_operand.vmem [shape: f32[1,128], index: 2, kind: input, shape index: {}]
  %s3 = inlined_call_operand.hbm [shape: f32[8,128], index: 3, kind: output, shape index: {}]
  %s4 = sld [smem:[#allocation0]]
  $region22: #{vit_zero_clip_long_forward.33} parent=0
    _
  %s6 = ssub.s32 1, %s4
  %s7 = scalar_select 0, %s6, %s4
  $region1: #{vit_zero_clip_long_forward.33} parent=0
    #allocation2 [shape = 'u8[4096]{0}', space=vmem, size = 0x1000, scoped, tag = 'output window, operand 0, single buffered']
    #allocation3 [shape = 's32[1]{0}', space=sflag, size = 0x4, scoped, tag = 'scoped memory for vit_zero_clip_long_forward.33']
    %8 = vsyncpa [#allocation3], 0
    // Predicated region
    $region2: #{vit_zero_clip_long_forward.33} parent=1 // pred_check
      _
    $region3: #{vit_zero_clip_long_forward.33} parent=1 // pred_check_branch
      %10 = sbr.rel (0) target = $region5
    $region4: #{vit_zero_clip_long_forward.33} parent=1 // pred_region
      _
    $region5: #{vit_zero_clip_long_forward.33} parent=1 // pred_fallthru
      _
    // Predicated region
    $region6: #{vit_zero_clip_long_forward.33} parent=1 // pred_check
      _
    $region7: #{vit_zero_clip_long_forward.33} parent=1 // pred_check_branch
      %12 = sbr.rel (0) target = $region9
    $region8: #{vit_zero_clip_long_forward.33} parent=1 // pred_region
      _
    $region9: #{vit_zero_clip_long_forward.33} parent=1 // pred_fallthru
      _
    // Predicated region
    $region10: #{vit_zero_clip_long_forward.33} parent=1 // pred_check
      _
    $region11: #{vit_zero_clip_long_forward.33} parent=1 // pred_check_branch
      %14 = sbr.rel (0) target = $region13
    $region12: #{vit_zero_clip_long_forward.33} parent=1 // pred_region
      _
    $region13: #{vit_zero_clip_long_forward.33} parent=1 // pred_fallthru
      _
    %v15 = vld [vmem:[%s0] sm:$0xf]
    %v16 = vunpack.c.l.bf16 %v15
    %17 = vadd.xlane.f32.xlu0 %v16
    %v18 = vpop.xlane.xlu0 %17
    %v19 = vrcp.pop 128.0
    %v20 = vmul.f32 %v18, %v19
    %v21 = vsub.f32 %v16, %v20
    %v22 = vmul.f32 %v21, %v21
    %23 = vadd.xlane.f32.xlu0 %v22
    %v24 = vpop.xlane.xlu0 %23
    %v25 = vmul.f32 %v24, %v19
    %v26 = vadd.f32 %v25, 1e-05
    %v27 = vrsqrt.pop %v26
    %v28 = vmul.f32 %v21, %v27
    %v29 = vld [vmem:[%s1] sm:$0x1]
    %v31 = vlaneseq
    %v32 = vshrl.u32 %v31, 7
    %v33 = vsub.s32 0, %v32
    %v34 = vrot.slane %v29, %v33
    %v36 = vmul.f32 %v28, %v34
    %v37 = vld [vmem:[%s2] sm:$0x1]
    %v39 = vlaneseq
    %v40 = vshrl.u32 %v39, 7
    %v41 = vsub.s32 0, %v40
    %v42 = vrot.slane %v37, %v41
    %v44 = vadd.f32 %v36, %v42
    %45 = vst [vmem:[#allocation2] sm:$0xff] %v44
    // Predicated region
    $region14: #{vit_zero_clip_long_forward.33} parent=1 // pred_check
      _
    $region15: #{vit_zero_clip_long_forward.33} parent=1 // pred_check_branch
      %47 = sbr.rel (0) target = $region17
    $region16: #{vit_zero_clip_long_forward.33} parent=1 // pred_region
      %s49 = ssub.s32 128, 128
      %50 = vsyncadd [#allocation3], %s49
      %s52 = sshll.u32 [#allocation2], 4
      %s53 = int_to_ptr.vmem [resolvable:$true] %s52
      %55 = dma.vmem_to_hbm [thread:$0]  %s53, 128, %s3, [#allocation3]
    $region17: #{vit_zero_clip_long_forward.33} parent=1 // pred_fallthru
      _
    // Predicated region
    $region18: #{vit_zero_clip_long_forward.33} parent=1 // pred_check
      _
    $region19: #{vit_zero_clip_long_forward.33} parent=1 // pred_check_branch
      %57 = sbr.rel (0) target = $region21
    $region20: #{vit_zero_clip_long_forward.33} parent=1 // pred_region
      %58 = dma.done [#allocation3], 128
    $region21: #{vit_zero_clip_long_forward.33} parent=1 // pred_fallthru
      _
    %59 = vsyncpa [#allocation3], 1

</llo_original>
